<compile_context>
chip_gen: v5e
topology: v5e:2x2
jax: 0.10.0
libtpu: 0.0.40
codegen_flags: <defaults>
</compile_context>

<pallas_src>
import functools
import math

import jax
import jax.numpy as jnp
from jax.experimental import pallas as pl
from jax.experimental.pallas import tpu as pltpu


def _gauss_1d(kernlen, std):
    """1D Gaussian weights, matching the torch reference's _gaussian_fn."""
    n = jnp.arange(kernlen, dtype=jnp.float32)
    n = n - jnp.mean(n)
    n = n / float(std)
    return jnp.exp(-0.5 * n * n)


def _choose_group_size(n, max_group=8):
    """Largest divisor of n that is <= max_group, keeping >= 2 grid steps if possible."""
    divisors = [g for g in range(1, min(n, max_group) + 1) if n % g == 0]
    two_step = [g for g in divisors if n // g >= 2]
    return max(two_step) if two_step else max(divisors)


def _hog_kernel(x_ref, pw_ref, ph_ref, out_ref, *, nbins, H, W, G, wp):
    # x_ref  : (G, H, W)          G raw images of the flattened (B*C) axis
    # pw_ref : (W, wp)            column-pool matrix (Gaussian-scaled if enabled)
    # ph_ref : (hp, H)            row-pool matrix    (Gaussian-scaled if enabled)
    # out_ref: (nbins*hp, G*wp)   L2-normalized histograms, images along lanes
    pw = pw_ref[...]
    ph = ph_ref[...]

    row = jax.lax.broadcasted_iota(jnp.int32, (H, W), 0)
    col = jax.lax.broadcasted_iota(jnp.int32, (H, W), 1)
    row0, rowL = row == 0, row == H - 1
    col0, colL = col == 0, col == W - 1
    row_edge = jnp.logical_or(row0, rowL)
    col_edge = jnp.logical_or(col0, colL)

    # cot(k*pi/nbins):  theta' >= k*pi/nbins  <=>  gy/gx <= cot(k*pi/nbins).
    cots = [math.cos(k * math.pi / nbins) / math.sin(k * math.pi / nbins)
            for k in range(1, nbins)]

    for g in range(G):  # unrolled; G is small and static
        x = x_ref[g]

        # --- 3x3 Sobel with reflect(1) padding, done in-kernel (XLU rolls).
        # dcol[i,j] = xr[i,j-1] - xr[i,j+1]; reflect => exactly 0 at j=0,W-1.
        # drow[i,j] = xr[i-1,j] - xr[i+1,j]; reflect => exactly 0 at i=0,H-1.
        dcol = pltpu.roll(x, 1, axis=1) - pltpu.roll(x, W - 1, axis=1)
        dcol = jnp.where(col_edge, 0.0, dcol)
        drow = pltpu.roll(x, 1, axis=0) - pltpu.roll(x, H - 1, axis=0)
        drow = jnp.where(row_edge, 0.0, drow)

        # gx[i,:] = dcol[i-1] + 2*dcol[i] + dcol[i+1] (rows reflected):
        # roll-based interior plus additive single-row corrections at i=0, H-1.
        gx = pltpu.roll(dcol, 1, axis=0) + 2.0 * dcol + pltpu.roll(dcol, H - 1, axis=0)
        gx = gx + jnp.where(
            row0, dcol[1:2, :] - dcol[H - 1:H, :],
            jnp.where(rowL, dcol[H - 2:H - 1, :] - dcol[0:1, :], 0.0))
        # gy[:,j] = drow[:,j-1] + 2*drow[:,j] + drow[:,j+1] (cols reflected).
        gy = pltpu.roll(drow, 1, axis=1) + 2.0 * drow + pltpu.roll(drow, W - 1, axis=1)
        gy = gy + jnp.where(
            col0, drow[:, 1:2] - drow[:, W - 1:W],
            jnp.where(colL, drow[:, W - 2:W - 1] - drow[:, 0:1], 0.0))

        norm = jnp.sqrt(gx * gx + gy * gy)

        # --- Orientation binning without atan2 / divide.
        # bin k <=> theta' := (atan2(gx, gy) mod pi) in [k*pi/nbins, (k+1)*pi/nbins)
        # q = gy/gx = cot(theta') regardless of the sign of gx, and cot is
        # decreasing on (0, pi), so theta' >= a <=> q <= cot(a).
        # gx == 0 -> theta' = 0 -> bin 0 (matches torch's floor-then-mod).
        q = gy * pl.reciprocal(gx, approx=True)
        gx_zero = gx == 0.0
        gx_nonzero = jnp.logical_not(gx_zero)
        ge = [q <= c for c in cots]  # ge[k-1]: theta' >= k*pi/nbins

        p_list = []
        sq = None
        for k in range(nbins):
            if k == 0:
                m = jnp.logical_or(jnp.logical_not(ge[0]), gx_zero)
            elif k == nbins - 1:
                m = jnp.logical_and(ge[nbins - 2], gx_nonzero)
            else:
                m = jnp.logical_and(
                    jnp.logical_and(ge[k - 1], jnp.logical_not(ge[k])), gx_nonzero)
            mv = jnp.where(m, norm, 0.0)
            # Two small dense matmuls; no VMEM round trip, no sparse constant.
            t = jnp.dot(mv, pw, preferred_element_type=jnp.float32)   # (H, wp)
            p = jnp.dot(ph, t, preferred_element_type=jnp.float32)    # (hp, wp)
            p_list.append(p)
            sq = p * p if sq is None else sq + p * p

        # F.normalize(p=2, dim=bins, eps=1e-12): 1/max(sqrt(sq), eps) == min(rsqrt, 1e12)
        inv = jnp.minimum(jax.lax.rsqrt(sq), 1e12)
        col_g = jnp.concatenate([p * inv for p in p_list], axis=0)    # (nbins*hp, wp)
        out_ref[:, g * wp:(g + 1) * wp] = col_g


def hog_layer_c(x, nbins=9, pool=7, gaussian_window=0, max_group=8):
    """Pallas TPU implementation of HOGLayerC.forward.  x: (B, 3, H, W) f32 NCHW."""
    x = x.astype(jnp.float32)
    B, C, H, W = x.shape
    assert nbins >= 2
    assert H >= 3 and W >= 3
    assert H % pool == 0 and W % pool == 0, (H, W, pool)
    hp, wp = H // pool, W // pool

    N = B * C
    G = _choose_group_size(N, max_group)
    steps = N // G
    xf = x.reshape(N, H, W)

    # 0/1 non-overlapping pool x pool block-sum matrices.  The (separable)
    # Gaussian window is folded straight into them, so the kernel never sees it.
    pw = (jnp.arange(W)[:, None] // pool
          == jnp.arange(wp)[None, :]).astype(jnp.float32)                 # (W, wp)
    ph = (jnp.arange(hp)[:, None]
          == jnp.arange(H)[None, :] // pool).astype(jnp.float32)          # (hp, H)
    if gaussian_window:
        assert H % gaussian_window == 0, f"h {H} gw {gaussian_window}"
        assert W % gaussian_window == 0, f"w {W} gw {gaussian_window}"
        w1 = _gauss_1d(gaussian_window, gaussian_window // 2)
        gsum = jnp.sum(w1) ** 2                      # == sum(outer(w1, w1))
        pw = pw * jnp.tile(w1, W // gaussian_window)[:, None]
        ph = ph * (jnp.tile(w1, H // gaussian_window) / gsum)[None, :]

    kernel = functools.partial(_hog_kernel, nbins=nbins, H=H, W=W, G=G, wp=wp)

    out = pl.pallas_call(
        kernel,
        out_shape=jax.ShapeDtypeStruct((steps, nbins * hp, G * wp), jnp.float32),
        grid=(steps,),
        in_specs=[
            pl.BlockSpec((G, H, W), lambda s: (s, 0, 0)),
            pl.BlockSpec((W, wp), lambda s: (0, 0)),
            pl.BlockSpec((hp, H), lambda s: (0, 0)),
        ],
        out_specs=pl.BlockSpec((None, nbins * hp, G * wp), lambda s: (s, 0, 0)),
        compiler_params=pltpu.CompilerParams(
            dimension_semantics=("parallel",),
            vmem_limit_bytes=32 * 1024 * 1024),
    )(xf, pw, ph)

    # (steps, nbins*hp, G*wp) -> (B, C, nbins, hp, wp)
    out = out.reshape(steps, nbins, hp, G, wp)
    out = jnp.transpose(out, (0, 3, 1, 2, 4))
    return out.reshape(B, C, nbins, hp, wp)


if __name__ == "__main__":
    key = jax.random.PRNGKey(0)
    # 3 channels (groups=3); H, W divisible by pool=7 (and by gaussian_window=7).
    x = jax.random.normal(key, (2, 3, 56, 56), dtype=jnp.float32)

    out = hog_layer_c(x, nbins=9, pool=7, gaussian_window=0)
    jax.block_until_ready(out)
    assert out.shape == (2, 3, 9, 8, 8), out.shape
    assert bool(jnp.all(jnp.isfinite(out)))

    # Gaussian-window path (H=56, gw=7 -> 8x8 tiling of the kernel, folded into pooling).
    out_g = hog_layer_c(x, nbins=9, pool=7, gaussian_window=7)
    jax.block_until_ready(out_g)
    assert out_g.shape == (2, 3, 9, 8, 8), out_g.shape
    assert bool(jnp.all(jnp.isfinite(out_g)))

    print("KERNEL_OK")
</pallas_src>

<mosaic_0001>
module attributes {stable_mosaic.version = 11 : i64} {
  func.func @_hog_kernel(%arg0: i32, %arg1: memref<3x56x56xf32, #tpu.memory_space<vmem>>, %arg2: memref<56x8xf32, #tpu.memory_space<vmem>>, %arg3: memref<8x56xf32, #tpu.memory_space<vmem>>, %arg4: memref<1x72x24xf32, #tpu.memory_space<vmem>>) attributes {dimension_semantics = [#tpu.dimension_semantics<parallel>], iteration_bounds = array<i64: 2>, scalar_prefetch = 0 : i64, scratch_operands = 0 : i64, tpu.core_type = #tpu.core_type<tc>, window_params = [{transform_indices = @transform_0, window_bounds = array<i64: 3, 56, 56>}, {pipeline_mode = #tpu.pipeline_mode<synchronous>, transform_indices = @transform_1, window_bounds = array<i64: 56, 8>}, {pipeline_mode = #tpu.pipeline_mode<synchronous>, transform_indices = @transform_2, window_bounds = array<i64: 8, 56>}, {transform_indices = @transform_3, window_bounds = array<i64: 1, 72, 24>}]} {
    %c0 = arith.constant 0 : index
    %c0_0 = arith.constant 0 : index
    %0 = vector.load %arg2[%c0, %c0_0] : memref<56x8xf32, #tpu.memory_space<vmem>>, vector<56x8xf32>
    %c0_1 = arith.constant 0 : index
    %c0_2 = arith.constant 0 : index
    %1 = vector.load %arg3[%c0_1, %c0_2] : memref<8x56xf32, #tpu.memory_space<vmem>>, vector<8x56xf32>
    %2 = tpu.iota {dimensions = array<i32: 0>} : vector<56x56xi32>
    %3 = tpu.iota {dimensions = array<i32: 1>} : vector<56x56xi32>
    %c0_i32 = arith.constant 0 : i32
    %4 = vector.broadcast %c0_i32 : i32 to vector<56x56xi32>
    %5 = arith.cmpi eq, %2, %4 : vector<56x56xi32>
    %c55_i32 = arith.constant 55 : i32
    %6 = vector.broadcast %c55_i32 : i32 to vector<56x56xi32>
    %7 = arith.cmpi eq, %2, %6 : vector<56x56xi32>
    %c0_i32_3 = arith.constant 0 : i32
    %8 = vector.broadcast %c0_i32_3 : i32 to vector<56x56xi32>
    %9 = arith.cmpi eq, %3, %8 : vector<56x56xi32>
    %c55_i32_4 = arith.constant 55 : i32
    %10 = vector.broadcast %c55_i32_4 : i32 to vector<56x56xi32>
    %11 = arith.cmpi eq, %3, %10 : vector<56x56xi32>
    %12 = arith.ori %5, %7 : vector<56x56xi1>
    %13 = arith.ori %9, %11 : vector<56x56xi1>
    %c0_5 = arith.constant 0 : index
    %c0_6 = arith.constant 0 : index
    %c0_7 = arith.constant 0 : index
    %14 = vector.load %arg1[%c0_5, %c0_6, %c0_7] : memref<3x56x56xf32, #tpu.memory_space<vmem>>, vector<1x56x56xf32>
    %15 = vector.shape_cast %14 : vector<1x56x56xf32> to vector<56x56xf32>
    %c1_i32 = arith.constant 1 : i32
    %16 = tpu.dynamic_rotate %15 by %c1_i32 dim 1 : vector<56x56xf32>, i32 -> vector<56x56xf32>
    %c55_i32_8 = arith.constant 55 : i32
    %17 = tpu.dynamic_rotate %15 by %c55_i32_8 dim 1 : vector<56x56xf32>, i32 -> vector<56x56xf32>
    %18 = arith.subf %16, %17 : vector<56x56xf32>
    %cst = arith.constant 0.000000e+00 : f32
    %19 = vector.broadcast %cst : f32 to vector<56x56xf32>
    %20 = arith.select %13, %19, %18 : vector<56x56xi1>, vector<56x56xf32>
    %c1_i32_9 = arith.constant 1 : i32
    %21 = tpu.dynamic_rotate %15 by %c1_i32_9 dim 0 : vector<56x56xf32>, i32 -> vector<56x56xf32>
    %c55_i32_10 = arith.constant 55 : i32
    %22 = tpu.dynamic_rotate %15 by %c55_i32_10 dim 0 : vector<56x56xf32>, i32 -> vector<56x56xf32>
    %23 = arith.subf %21, %22 : vector<56x56xf32>
    %cst_11 = arith.constant 0.000000e+00 : f32
    %24 = vector.broadcast %cst_11 : f32 to vector<56x56xf32>
    %25 = arith.select %12, %24, %23 : vector<56x56xi1>, vector<56x56xf32>
    %c1_i32_12 = arith.constant 1 : i32
    %26 = tpu.dynamic_rotate %20 by %c1_i32_12 dim 0 : vector<56x56xf32>, i32 -> vector<56x56xf32>
    %cst_13 = arith.constant 2.000000e+00 : f32
    %27 = vector.broadcast %cst_13 : f32 to vector<56x56xf32>
    %28 = arith.mulf %27, %20 : vector<56x56xf32>
    %29 = arith.addf %26, %28 : vector<56x56xf32>
    %c55_i32_14 = arith.constant 55 : i32
    %30 = tpu.dynamic_rotate %20 by %c55_i32_14 dim 0 : vector<56x56xf32>, i32 -> vector<56x56xf32>
    %31 = arith.addf %29, %30 : vector<56x56xf32>
    %32 = vector.extract_strided_slice %20 {offsets = [1, 0], sizes = [1, 56], strides = [1, 1]} : vector<56x56xf32> to vector<1x56xf32>
    %33 = vector.extract_strided_slice %20 {offsets = [55, 0], sizes = [1, 56], strides = [1, 1]} : vector<56x56xf32> to vector<1x56xf32>
    %34 = arith.subf %32, %33 : vector<1x56xf32>
    %35 = vector.extract_strided_slice %20 {offsets = [54, 0], sizes = [1, 56], strides = [1, 1]} : vector<56x56xf32> to vector<1x56xf32>
    %36 = vector.extract_strided_slice %20 {offsets = [0, 0], sizes = [1, 56], strides = [1, 1]} : vector<56x56xf32> to vector<1x56xf32>
    %37 = arith.subf %35, %36 : vector<1x56xf32>
    %cst_15 = arith.constant 0.000000e+00 : f32
    %38 = vector.shape_cast %37 : vector<1x56xf32> to vector<1x56xf32>
    %39 = vector.broadcast %38 : vector<1x56xf32> to vector<56x56xf32>
    %40 = vector.broadcast %cst_15 : f32 to vector<56x56xf32>
    %41 = arith.select %7, %39, %40 : vector<56x56xi1>, vector<56x56xf32>
    %42 = vector.shape_cast %34 : vector<1x56xf32> to vector<1x56xf32>
    %43 = vector.broadcast %42 : vector<1x56xf32> to vector<56x56xf32>
    %44 = arith.select %5, %43, %41 : vector<56x56xi1>, vector<56x56xf32>
    %45 = arith.addf %31, %44 : vector<56x56xf32>
    %c1_i32_16 = arith.constant 1 : i32
    %46 = tpu.dynamic_rotate %25 by %c1_i32_16 dim 1 : vector<56x56xf32>, i32 -> vector<56x56xf32>
    %cst_17 = arith.constant 2.000000e+00 : f32
    %47 = vector.broadcast %cst_17 : f32 to vector<56x56xf32>
    %48 = arith.mulf %47, %25 : vector<56x56xf32>
    %49 = arith.addf %46, %48 : vector<56x56xf32>
    %c55_i32_18 = arith.constant 55 : i32
    %50 = tpu.dynamic_rotate %25 by %c55_i32_18 dim 1 : vector<56x56xf32>, i32 -> vector<56x56xf32>
    %51 = arith.addf %49, %50 : vector<56x56xf32>
    %52 = vector.extract_strided_slice %25 {offsets = [0, 1], sizes = [56, 1], strides = [1, 1]} : vector<56x56xf32> to vector<56x1xf32>
    %53 = vector.extract_strided_slice %25 {offsets = [0, 55], sizes = [56, 1], strides = [1, 1]} : vector<56x56xf32> to vector<56x1xf32>
    %54 = arith.subf %52, %53 : vector<56x1xf32>
    %55 = vector.extract_strided_slice %25 {offsets = [0, 54], sizes = [56, 1], strides = [1, 1]} : vector<56x56xf32> to vector<56x1xf32>
    %56 = vector.extract_strided_slice %25 {offsets = [0, 0], sizes = [56, 1], strides = [1, 1]} : vector<56x56xf32> to vector<56x1xf32>
    %57 = arith.subf %55, %56 : vector<56x1xf32>
    %cst_19 = arith.constant 0.000000e+00 : f32
    %58 = vector.shape_cast %57 : vector<56x1xf32> to vector<56x1xf32>
    %59 = vector.broadcast %58 : vector<56x1xf32> to vector<56x56xf32>
    %60 = vector.broadcast %cst_19 : f32 to vector<56x56xf32>
    %61 = arith.select %11, %59, %60 : vector<56x56xi1>, vector<56x56xf32>
    %62 = vector.shape_cast %54 : vector<56x1xf32> to vector<56x1xf32>
    %63 = vector.broadcast %62 : vector<56x1xf32> to vector<56x56xf32>
    %64 = arith.select %9, %63, %61 : vector<56x56xi1>, vector<56x56xf32>
    %65 = arith.addf %51, %64 : vector<56x56xf32>
    %66 = arith.mulf %45, %45 : vector<56x56xf32>
    %67 = arith.mulf %65, %65 : vector<56x56xf32>
    %68 = arith.addf %66, %67 : vector<56x56xf32>
    %69 = math.sqrt %68 : vector<56x56xf32>
    %70 = tpu.reciprocal %45 {approx = true} : vector<56x56xf32> -> vector<56x56xf32>
    %71 = arith.mulf %65, %70 : vector<56x56xf32>
    %cst_20 = arith.constant 0.000000e+00 : f32
    %72 = vector.broadcast %cst_20 : f32 to vector<56x56xf32>
    %73 = arith.cmpf oeq, %45, %72 : vector<56x56xf32>
    %cst_21 = arith.constant dense<true> : vector<56x56xi1>
    %74 = arith.xori %73, %cst_21 : vector<56x56xi1>
    %cst_22 = arith.constant 2.74747753 : f32
    %75 = vector.broadcast %cst_22 : f32 to vector<56x56xf32>
    %76 = arith.cmpf ole, %71, %75 : vector<56x56xf32>
    %cst_23 = arith.constant 1.19175363 : f32
    %77 = vector.broadcast %cst_23 : f32 to vector<56x56xf32>
    %78 = arith.cmpf ole, %71, %77 : vector<56x56xf32>
    %cst_24 = arith.constant 0.577350259 : f32
    %79 = vector.broadcast %cst_24 : f32 to vector<56x56xf32>
    %80 = arith.cmpf ole, %71, %79 : vector<56x56xf32>
    %cst_25 = arith.constant 0.176326975 : f32
    %81 = vector.broadcast %cst_25 : f32 to vector<56x56xf32>
    %82 = arith.cmpf ole, %71, %81 : vector<56x56xf32>
    %cst_26 = arith.constant -0.176326975 : f32
    %83 = vector.broadcast %cst_26 : f32 to vector<56x56xf32>
    %84 = arith.cmpf ole, %71, %83 : vector<56x56xf32>
    %cst_27 = arith.constant -0.577350259 : f32
    %85 = vector.broadcast %cst_27 : f32 to vector<56x56xf32>
    %86 = arith.cmpf ole, %71, %85 : vector<56x56xf32>
    %cst_28 = arith.constant -1.19175363 : f32
    %87 = vector.broadcast %cst_28 : f32 to vector<56x56xf32>
    %88 = arith.cmpf ole, %71, %87 : vector<56x56xf32>
    %cst_29 = arith.constant -2.74747753 : f32
    %89 = vector.broadcast %cst_29 : f32 to vector<56x56xf32>
    %90 = arith.cmpf ole, %71, %89 : vector<56x56xf32>
    %cst_30 = arith.constant dense<true> : vector<56x56xi1>
    %91 = arith.xori %76, %cst_30 : vector<56x56xi1>
    %92 = arith.ori %91, %73 : vector<56x56xi1>
    %cst_31 = arith.constant 0.000000e+00 : f32
    %93 = vector.broadcast %cst_31 : f32 to vector<56x56xf32>
    %94 = arith.select %92, %69, %93 : vector<56x56xi1>, vector<56x56xf32>
    %cst_32 = arith.constant dense<0.000000e+00> : vector<56x8xf32>
    %95 = tpu.matmul %94, %0, %cst_32 {dimension_numbers = #tpu.dot_dimension_numbers<[1], [0], [0], [1], [0, 0, 1, 1], [], []>} : vector<56x56xf32>, vector<56x8xf32>, vector<56x8xf32> -> vector<56x8xf32>
    %cst_33 = arith.constant dense<0.000000e+00> : vector<8x8xf32>
    %96 = tpu.matmul %1, %95, %cst_33 {dimension_numbers = #tpu.dot_dimension_numbers<[1], [0], [0], [1], [0, 0, 1, 1], [], []>} : vector<8x56xf32>, vector<56x8xf32>, vector<8x8xf32> -> vector<8x8xf32>
    %97 = arith.mulf %96, %96 : vector<8x8xf32>
    %cst_34 = arith.constant dense<true> : vector<56x56xi1>
    %98 = arith.xori %78, %cst_34 : vector<56x56xi1>
    %99 = arith.andi %76, %98 : vector<56x56xi1>
    %100 = arith.andi %99, %74 : vector<56x56xi1>
    %cst_35 = arith.constant 0.000000e+00 : f32
    %101 = vector.broadcast %cst_35 : f32 to vector<56x56xf32>
    %102 = arith.select %100, %69, %101 : vector<56x56xi1>, vector<56x56xf32>
    %cst_36 = arith.constant dense<0.000000e+00> : vector<56x8xf32>
    %103 = tpu.matmul %102, %0, %cst_36 {dimension_numbers = #tpu.dot_dimension_numbers<[1], [0], [0], [1], [0, 0, 1, 1], [], []>} : vector<56x56xf32>, vector<56x8xf32>, vector<56x8xf32> -> vector<56x8xf32>
    %cst_37 = arith.constant dense<0.000000e+00> : vector<8x8xf32>
    %104 = tpu.matmul %1, %103, %cst_37 {dimension_numbers = #tpu.dot_dimension_numbers<[1], [0], [0], [1], [0, 0, 1, 1], [], []>} : vector<8x56xf32>, vector<56x8xf32>, vector<8x8xf32> -> vector<8x8xf32>
    %105 = arith.mulf %104, %104 : vector<8x8xf32>
    %106 = arith.addf %97, %105 : vector<8x8xf32>
    %cst_38 = arith.constant dense<true> : vector<56x56xi1>
    %107 = arith.xori %80, %cst_38 : vector<56x56xi1>
    %108 = arith.andi %78, %107 : vector<56x56xi1>
    %109 = arith.andi %108, %74 : vector<56x56xi1>
    %cst_39 = arith.constant 0.000000e+00 : f32
    %110 = vector.broadcast %cst_39 : f32 to vector<56x56xf32>
    %111 = arith.select %109, %69, %110 : vector<56x56xi1>, vector<56x56xf32>
    %cst_40 = arith.constant dense<0.000000e+00> : vector<56x8xf32>
    %112 = tpu.matmul %111, %0, %cst_40 {dimension_numbers = #tpu.dot_dimension_numbers<[1], [0], [0], [1], [0, 0, 1, 1], [], []>} : vector<56x56xf32>, vector<56x8xf32>, vector<56x8xf32> -> vector<56x8xf32>
    %cst_41 = arith.constant dense<0.000000e+00> : vector<8x8xf32>
    %113 = tpu.matmul %1, %112, %cst_41 {dimension_numbers = #tpu.dot_dimension_numbers<[1], [0], [0], [1], [0, 0, 1, 1], [], []>} : vector<8x56xf32>, vector<56x8xf32>, vector<8x8xf32> -> vector<8x8xf32>
    %114 = arith.mulf %113, %113 : vector<8x8xf32>
    %115 = arith.addf %106, %114 : vector<8x8xf32>
    %cst_42 = arith.constant dense<true> : vector<56x56xi1>
    %116 = arith.xori %82, %cst_42 : vector<56x56xi1>
    %117 = arith.andi %80, %116 : vector<56x56xi1>
    %118 = arith.andi %117, %74 : vector<56x56xi1>
    %cst_43 = arith.constant 0.000000e+00 : f32
    %119 = vector.broadcast %cst_43 : f32 to vector<56x56xf32>
    %120 = arith.select %118, %69, %119 : vector<56x56xi1>, vector<56x56xf32>
    %cst_44 = arith.constant dense<0.000000e+00> : vector<56x8xf32>
    %121 = tpu.matmul %120, %0, %cst_44 {dimension_numbers = #tpu.dot_dimension_numbers<[1], [0], [0], [1], [0, 0, 1, 1], [], []>} : vector<56x56xf32>, vector<56x8xf32>, vector<56x8xf32> -> vector<56x8xf32>
    %cst_45 = arith.constant dense<0.000000e+00> : vector<8x8xf32>
    %122 = tpu.matmul %1, %121, %cst_45 {dimension_numbers = #tpu.dot_dimension_numbers<[1], [0], [0], [1], [0, 0, 1, 1], [], []>} : vector<8x56xf32>, vector<56x8xf32>, vector<8x8xf32> -> vector<8x8xf32>
    %123 = arith.mulf %122, %122 : vector<8x8xf32>
    %124 = arith.addf %115, %123 : vector<8x8xf32>
    %cst_46 = arith.constant dense<true> : vector<56x56xi1>
    %125 = arith.xori %84, %cst_46 : vector<56x56xi1>
    %126 = arith.andi %82, %125 : vector<56x56xi1>
    %127 = arith.andi %126, %74 : vector<56x56xi1>
    %cst_47 = arith.constant 0.000000e+00 : f32
    %128 = vector.broadcast %cst_47 : f32 to vector<56x56xf32>
    %129 = arith.select %127, %69, %128 : vector<56x56xi1>, vector<56x56xf32>
    %cst_48 = arith.constant dense<0.000000e+00> : vector<56x8xf32>
    %130 = tpu.matmul %129, %0, %cst_48 {dimension_numbers = #tpu.dot_dimension_numbers<[1], [0], [0], [1], [0, 0, 1, 1], [], []>} : vector<56x56xf32>, vector<56x8xf32>, vector<56x8xf32> -> vector<56x8xf32>
    %cst_49 = arith.constant dense<0.000000e+00> : vector<8x8xf32>
    %131 = tpu.matmul %1, %130, %cst_49 {dimension_numbers = #tpu.dot_dimension_numbers<[1], [0], [0], [1], [0, 0, 1, 1], [], []>} : vector<8x56xf32>, vector<56x8xf32>, vector<8x8xf32> -> vector<8x8xf32>
    %132 = arith.mulf %131, %131 : vector<8x8xf32>
    %133 = arith.addf %124, %132 : vector<8x8xf32>
    %cst_50 = arith.constant dense<true> : vector<56x56xi1>
    %134 = arith.xori %86, %cst_50 : vector<56x56xi1>
    %135 = arith.andi %84, %134 : vector<56x56xi1>
    %136 = arith.andi %135, %74 : vector<56x56xi1>
    %cst_51 = arith.constant 0.000000e+00 : f32
    %137 = vector.broadcast %cst_51 : f32 to vector<56x56xf32>
    %138 = arith.select %136, %69, %137 : vector<56x56xi1>, vector<56x56xf32>
    %cst_52 = arith.constant dense<0.000000e+00> : vector<56x8xf32>
    %139 = tpu.matmul %138, %0, %cst_52 {dimension_numbers = #tpu.dot_dimension_numbers<[1], [0], [0], [1], [0, 0, 1, 1], [], []>} : vector<56x56xf32>, vector<56x8xf32>, vector<56x8xf32> -> vector<56x8xf32>
    %cst_53 = arith.constant dense<0.000000e+00> : vector<8x8xf32>
    %140 = tpu.matmul %1, %139, %cst_53 {dimension_numbers = #tpu.dot_dimension_numbers<[1], [0], [0], [1], [0, 0, 1, 1], [], []>} : vector<8x56xf32>, vector<56x8xf32>, vector<8x8xf32> -> vector<8x8xf32>
    %141 = arith.mulf %140, %140 : vector<8x8xf32>
    %142 = arith.addf %133, %141 : vector<8x8xf32>
    %cst_54 = arith.constant dense<true> : vector<56x56xi1>
    %143 = arith.xori %88, %cst_54 : vector<56x56xi1>
    %144 = arith.andi %86, %143 : vector<56x56xi1>
    %145 = arith.andi %144, %74 : vector<56x56xi1>
    %cst_55 = arith.constant 0.000000e+00 : f32
    %146 = vector.broadcast %cst_55 : f32 to vector<56x56xf32>
    %147 = arith.select %145, %69, %146 : vector<56x56xi1>, vector<56x56xf32>
    %cst_56 = arith.constant dense<0.000000e+00> : vector<56x8xf32>
    %148 = tpu.matmul %147, %0, %cst_56 {dimension_numbers = #tpu.dot_dimension_numbers<[1], [0], [0], [1], [0, 0, 1, 1], [], []>} : vector<56x56xf32>, vector<56x8xf32>, vector<56x8xf32> -> vector<56x8xf32>
    %cst_57 = arith.constant dense<0.000000e+00> : vector<8x8xf32>
    %149 = tpu.matmul %1, %148, %cst_57 {dimension_numbers = #tpu.dot_dimension_numbers<[1], [0], [0], [1], [0, 0, 1, 1], [], []>} : vector<8x56xf32>, vector<56x8xf32>, vector<8x8xf32> -> vector<8x8xf32>
    %150 = arith.mulf %149, %149 : vector<8x8xf32>
    %151 = arith.addf %142, %150 : vector<8x8xf32>
    %cst_58 = arith.constant dense<true> : vector<56x56xi1>
    %152 = arith.xori %90, %cst_58 : vector<56x56xi1>
    %153 = arith.andi %88, %152 : vector<56x56xi1>
    %154 = arith.andi %153, %74 : vector<56x56xi1>
    %cst_59 = arith.constant 0.000000e+00 : f32
    %155 = vector.broadcast %cst_59 : f32 to vector<56x56xf32>
    %156 = arith.select %154, %69, %155 : vector<56x56xi1>, vector<56x56xf32>
    %cst_60 = arith.constant dense<0.000000e+00> : vector<56x8xf32>
    %157 = tpu.matmul %156, %0, %cst_60 {dimension_numbers = #tpu.dot_dimension_numbers<[1], [0], [0], [1], [0, 0, 1, 1], [], []>} : vector<56x56xf32>, vector<56x8xf32>, vector<56x8xf32> -> vector<56x8xf32>
    %cst_61 = arith.constant dense<0.000000e+00> : vector<8x8xf32>
    %158 = tpu.matmul %1, %157, %cst_61 {dimension_numbers = #tpu.dot_dimension_numbers<[1], [0], [0], [1], [0, 0, 1, 1], [], []>} : vector<8x56xf32>, vector<56x8xf32>, vector<8x8xf32> -> vector<8x8xf32>
    %159 = arith.mulf %158, %158 : vector<8x8xf32>
    %160 = arith.addf %151, %159 : vector<8x8xf32>
    %161 = arith.andi %90, %74 : vector<56x56xi1>
    %cst_62 = arith.constant 0.000000e+00 : f32
    %162 = vector.broadcast %cst_62 : f32 to vector<56x56xf32>
    %163 = arith.select %161, %69, %162 : vector<56x56xi1>, vector<56x56xf32>
    %cst_63 = arith.constant dense<0.000000e+00> : vector<56x8xf32>
    %164 = tpu.matmul %163, %0, %cst_63 {dimension_numbers = #tpu.dot_dimension_numbers<[1], [0], [0], [1], [0, 0, 1, 1], [], []>} : vector<56x56xf32>, vector<56x8xf32>, vector<56x8xf32> -> vector<56x8xf32>
    %cst_64 = arith.constant dense<0.000000e+00> : vector<8x8xf32>
    %165 = tpu.matmul %1, %164, %cst_64 {dimension_numbers = #tpu.dot_dimension_numbers<[1], [0], [0], [1], [0, 0, 1, 1], [], []>} : vector<8x56xf32>, vector<56x8xf32>, vector<8x8xf32> -> vector<8x8xf32>
    %166 = arith.mulf %165, %165 : vector<8x8xf32>
    %167 = arith.addf %160, %166 : vector<8x8xf32>
    %168 = math.rsqrt %167 : vector<8x8xf32>
    %cst_65 = arith.constant 9.99999995E+11 : f32
    %169 = vector.broadcast %cst_65 : f32 to vector<8x8xf32>
    %170 = arith.minimumf %168, %169 : vector<8x8xf32>
    %171 = arith.mulf %96, %170 : vector<8x8xf32>
    %172 = arith.mulf %104, %170 : vector<8x8xf32>
    %173 = arith.mulf %113, %170 : vector<8x8xf32>
    %174 = arith.mulf %122, %170 : vector<8x8xf32>
    %175 = arith.mulf %131, %170 : vector<8x8xf32>
    %176 = arith.mulf %140, %170 : vector<8x8xf32>
    %177 = arith.mulf %149, %170 : vector<8x8xf32>
    %178 = arith.mulf %158, %170 : vector<8x8xf32>
    %179 = arith.mulf %165, %170 : vector<8x8xf32>
    %180 = tpu.concatenate %171, %172, %173, %174, %175, %176, %177, %178, %179 in 0 : vector<8x8xf32>, vector<8x8xf32>, vector<8x8xf32>, vector<8x8xf32>, vector<8x8xf32>, vector<8x8xf32>, vector<8x8xf32>, vector<8x8xf32>, vector<8x8xf32> -> vector<72x8xf32>
    %c0_66 = arith.constant 0 : index
    %c0_67 = arith.constant 0 : index
    %c0_68 = arith.constant 0 : index
    %181 = vector.load %arg4[%c0_66, %c0_67, %c0_68] : memref<1x72x24xf32, #tpu.memory_space<vmem>>, vector<1x72x8xf32>
    %182 = vector.shape_cast %181 : vector<1x72x8xf32> to vector<72x8xf32>
    %183 = vector.shape_cast %180 : vector<72x8xf32> to vector<1x72x8xf32>
    tpu.vector_store %arg4[%c0_66, %c0_67, %c0_68], %183 {strides = array<i32>} : memref<1x72x24xf32, #tpu.memory_space<vmem>>, vector<1x72x8xf32>,
    %c1 = arith.constant 1 : index
    %c0_69 = arith.constant 0 : index
    %c0_70 = arith.constant 0 : index
    %184 = vector.load %arg1[%c1, %c0_69, %c0_70] : memref<3x56x56xf32, #tpu.memory_space<vmem>>, vector<1x56x56xf32>
    %185 = vector.shape_cast %184 : vector<1x56x56xf32> to vector<56x56xf32>
    %c1_i32_71 = arith.constant 1 : i32
    %186 = tpu.dynamic_rotate %185 by %c1_i32_71 dim 1 : vector<56x56xf32>, i32 -> vector<56x56xf32>
    %c55_i32_72 = arith.constant 55 : i32
    %187 = tpu.dynamic_rotate %185 by %c55_i32_72 dim 1 : vector<56x56xf32>, i32 -> vector<56x56xf32>
    %188 = arith.subf %186, %187 : vector<56x56xf32>
    %cst_73 = arith.constant 0.000000e+00 : f32
    %189 = vector.broadcast %cst_73 : f32 to vector<56x56xf32>
    %190 = arith.select %13, %189, %188 : vector<56x56xi1>, vector<56x56xf32>
    %c1_i32_74 = arith.constant 1 : i32
    %191 = tpu.dynamic_rotate %185 by %c1_i32_74 dim 0 : vector<56x56xf32>, i32 -> vector<56x56xf32>
    %c55_i32_75 = arith.constant 55 : i32
    %192 = tpu.dynamic_rotate %185 by %c55_i32_75 dim 0 : vector<56x56xf32>, i32 -> vector<56x56xf32>
    %193 = arith.subf %191, %192 : vector<56x56xf32>
    %cst_76 = arith.constant 0.000000e+00 : f32
    %194 = vector.broadcast %cst_76 : f32 to vector<56x56xf32>
    %195 = arith.select %12, %194, %193 : vector<56x56xi1>, vector<56x56xf32>
    %c1_i32_77 = arith.constant 1 : i32
    %196 = tpu.dynamic_rotate %190 by %c1_i32_77 dim 0 : vector<56x56xf32>, i32 -> vector<56x56xf32>
    %cst_78 = arith.constant 2.000000e+00 : f32
    %197 = vector.broadcast %cst_78 : f32 to vector<56x56xf32>
    %198 = arith.mulf %197, %190 : vector<56x56xf32>
    %199 = arith.addf %196, %198 : vector<56x56xf32>
    %c55_i32_79 = arith.constant 55 : i32
    %200 = tpu.dynamic_rotate %190 by %c55_i32_79 dim 0 : vector<56x56xf32>, i32 -> vector<56x56xf32>
    %201 = arith.addf %199, %200 : vector<56x56xf32>
    %202 = vector.extract_strided_slice %190 {offsets = [1, 0], sizes = [1, 56], strides = [1, 1]} : vector<56x56xf32> to vector<1x56xf32>
    %203 = vector.extract_strided_slice %190 {offsets = [55, 0], sizes = [1, 56], strides = [1, 1]} : vector<56x56xf32> to vector<1x56xf32>
    %204 = arith.subf %202, %203 : vector<1x56xf32>
    %205 = vector.extract_strided_slice %190 {offsets = [54, 0], sizes = [1, 56], strides = [1, 1]} : vector<56x56xf32> to vector<1x56xf32>
    %206 = vector.extract_strided_slice %190 {offsets = [0, 0], sizes = [1, 56], strides = [1, 1]} : vector<56x56xf32> to vector<1x56xf32>
    %207 = arith.subf %205, %206 : vector<1x56xf32>
    %cst_80 = arith.constant 0.000000e+00 : f32
    %208 = vector.shape_cast %207 : vector<1x56xf32> to vector<1x56xf32>
    %209 = vector.broadcast %208 : vector<1x56xf32> to vector<56x56xf32>
    %210 = vector.broadcast %cst_80 : f32 to vector<56x56xf32>
    %211 = arith.select %7, %209, %210 : vector<56x56xi1>, vector<56x56xf32>
    %212 = vector.shape_cast %204 : vector<1x56xf32> to vector<1x56xf32>
    %213 = vector.broadcast %212 : vector<1x56xf32> to vector<56x56xf32>
    %214 = arith.select %5, %213, %211 : vector<56x56xi1>, vector<56x56xf32>
    %215 = arith.addf %201, %214 : vector<56x56xf32>
    %c1_i32_81 = arith.constant 1 : i32
    %216 = tpu.dynamic_rotate %195 by %c1_i32_81 dim 1 : vector<56x56xf32>, i32 -> vector<56x56xf32>
    %cst_82 = arith.constant 2.000000e+00 : f32
    %217 = vector.broadcast %cst_82 : f32 to vector<56x56xf32>
    %218 = arith.mulf %217, %195 : vector<56x56xf32>
    %219 = arith.addf %216, %218 : vector<56x56xf32>
    %c55_i32_83 = arith.constant 55 : i32
    %220 = tpu.dynamic_rotate %195 by %c55_i32_83 dim 1 : vector<56x56xf32>, i32 -> vector<56x56xf32>
    %221 = arith.addf %219, %220 : vector<56x56xf32>
    %222 = vector.extract_strided_slice %195 {offsets = [0, 1], sizes = [56, 1], strides = [1, 1]} : vector<56x56xf32> to vector<56x1xf32>
    %223 = vector.extract_strided_slice %195 {offsets = [0, 55], sizes = [56, 1], strides = [1, 1]} : vector<56x56xf32> to vector<56x1xf32>
    %224 = arith.subf %222, %223 : vector<56x1xf32>
    %225 = vector.extract_strided_slice %195 {offsets = [0, 54], sizes = [56, 1], strides = [1, 1]} : vector<56x56xf32> to vector<56x1xf32>
    %226 = vector.extract_strided_slice %195 {offsets = [0, 0], sizes = [56, 1], strides = [1, 1]} : vector<56x56xf32> to vector<56x1xf32>
    %227 = arith.subf %225, %226 : vector<56x1xf32>
    %cst_84 = arith.constant 0.000000e+00 : f32
    %228 = vector.shape_cast %227 : vector<56x1xf32> to vector<56x1xf32>
    %229 = vector.broadcast %228 : vector<56x1xf32> to vector<56x56xf32>
    %230 = vector.broadcast %cst_84 : f32 to vector<56x56xf32>
    %231 = arith.select %11, %229, %230 : vector<56x56xi1>, vector<56x56xf32>
    %232 = vector.shape_cast %224 : vector<56x1xf32> to vector<56x1xf32>
    %233 = vector.broadcast %232 : vector<56x1xf32> to vector<56x56xf32>
    %234 = arith.select %9, %233, %231 : vector<56x56xi1>, vector<56x56xf32>
    %235 = arith.addf %221, %234 : vector<56x56xf32>
    %236 = arith.mulf %215, %215 : vector<56x56xf32>
    %237 = arith.mulf %235, %235 : vector<56x56xf32>
    %238 = arith.addf %236, %237 : vector<56x56xf32>
    %239 = math.sqrt %238 : vector<56x56xf32>
    %240 = tpu.reciprocal %215 {approx = true} : vector<56x56xf32> -> vector<56x56xf32>
    %241 = arith.mulf %235, %240 : vector<56x56xf32>
    %cst_85 = arith.constant 0.000000e+00 : f32
    %242 = vector.broadcast %cst_85 : f32 to vector<56x56xf32>
    %243 = arith.cmpf oeq, %215, %242 : vector<56x56xf32>
    %cst_86 = arith.constant dense<true> : vector<56x56xi1>
    %244 = arith.xori %243, %cst_86 : vector<56x56xi1>
    %cst_87 = arith.constant 2.74747753 : f32
    %245 = vector.broadcast %cst_87 : f32 to vector<56x56xf32>
    %246 = arith.cmpf ole, %241, %245 : vector<56x56xf32>
    %cst_88 = arith.constant 1.19175363 : f32
    %247 = vector.broadcast %cst_88 : f32 to vector<56x56xf32>
    %248 = arith.cmpf ole, %241, %247 : vector<56x56xf32>
    %cst_89 = arith.constant 0.577350259 : f32
    %249 = vector.broadcast %cst_89 : f32 to vector<56x56xf32>
    %250 = arith.cmpf ole, %241, %249 : vector<56x56xf32>
    %cst_90 = arith.constant 0.176326975 : f32
    %251 = vector.broadcast %cst_90 : f32 to vector<56x56xf32>
    %252 = arith.cmpf ole, %241, %251 : vector<56x56xf32>
    %cst_91 = arith.constant -0.176326975 : f32
    %253 = vector.broadcast %cst_91 : f32 to vector<56x56xf32>
    %254 = arith.cmpf ole, %241, %253 : vector<56x56xf32>
    %cst_92 = arith.constant -0.577350259 : f32
    %255 = vector.broadcast %cst_92 : f32 to vector<56x56xf32>
    %256 = arith.cmpf ole, %241, %255 : vector<56x56xf32>
    %cst_93 = arith.constant -1.19175363 : f32
    %257 = vector.broadcast %cst_93 : f32 to vector<56x56xf32>
    %258 = arith.cmpf ole, %241, %257 : vector<56x56xf32>
    %cst_94 = arith.constant -2.74747753 : f32
    %259 = vector.broadcast %cst_94 : f32 to vector<56x56xf32>
    %260 = arith.cmpf ole, %241, %259 : vector<56x56xf32>
    %cst_95 = arith.constant dense<true> : vector<56x56xi1>
    %261 = arith.xori %246, %cst_95 : vector<56x56xi1>
    %262 = arith.ori %261, %243 : vector<56x56xi1>
    %cst_96 = arith.constant 0.000000e+00 : f32
    %263 = vector.broadcast %cst_96 : f32 to vector<56x56xf32>
    %264 = arith.select %262, %239, %263 : vector<56x56xi1>, vector<56x56xf32>
    %cst_97 = arith.constant dense<0.000000e+00> : vector<56x8xf32>
    %265 = tpu.matmul %264, %0, %cst_97 {dimension_numbers = #tpu.dot_dimension_numbers<[1], [0], [0], [1], [0, 0, 1, 1], [], []>} : vector<56x56xf32>, vector<56x8xf32>, vector<56x8xf32> -> vector<56x8xf32>
    %cst_98 = arith.constant dense<0.000000e+00> : vector<8x8xf32>
    %266 = tpu.matmul %1, %265, %cst_98 {dimension_numbers = #tpu.dot_dimension_numbers<[1], [0], [0], [1], [0, 0, 1, 1], [], []>} : vector<8x56xf32>, vector<56x8xf32>, vector<8x8xf32> -> vector<8x8xf32>
    %267 = arith.mulf %266, %266 : vector<8x8xf32>
    %cst_99 = arith.constant dense<true> : vector<56x56xi1>
    %268 = arith.xori %248, %cst_99 : vector<56x56xi1>
    %269 = arith.andi %246, %268 : vector<56x56xi1>
    %270 = arith.andi %269, %244 : vector<56x56xi1>
    %cst_100 = arith.constant 0.000000e+00 : f32
    %271 = vector.broadcast %cst_100 : f32 to vector<56x56xf32>
    %272 = arith.select %270, %239, %271 : vector<56x56xi1>, vector<56x56xf32>
    %cst_101 = arith.constant dense<0.000000e+00> : vector<56x8xf32>
    %273 = tpu.matmul %272, %0, %cst_101 {dimension_numbers = #tpu.dot_dimension_numbers<[1], [0], [0], [1], [0, 0, 1, 1], [], []>} : vector<56x56xf32>, vector<56x8xf32>, vector<56x8xf32> -> vector<56x8xf32>
    %cst_102 = arith.constant dense<0.000000e+00> : vector<8x8xf32>
    %274 = tpu.matmul %1, %273, %cst_102 {dimension_numbers = #tpu.dot_dimension_numbers<[1], [0], [0], [1], [0, 0, 1, 1], [], []>} : vector<8x56xf32>, vector<56x8xf32>, vector<8x8xf32> -> vector<8x8xf32>
    %275 = arith.mulf %274, %274 : vector<8x8xf32>
    %276 = arith.addf %267, %275 : vector<8x8xf32>
    %cst_103 = arith.constant dense<true> : vector<56x56xi1>
    %277 = arith.xori %250, %cst_103 : vector<56x56xi1>
    %278 = arith.andi %248, %277 : vector<56x56xi1>
    %279 = arith.andi %278, %244 : vector<56x56xi1>
    %cst_104 = arith.constant 0.000000e+00 : f32
    %280 = vector.broadcast %cst_104 : f32 to vector<56x56xf32>
    %281 = arith.select %279, %239, %280 : vector<56x56xi1>, vector<56x56xf32>
    %cst_105 = arith.constant dense<0.000000e+00> : vector<56x8xf32>
    %282 = tpu.matmul %281, %0, %cst_105 {dimension_numbers = #tpu.dot_dimension_numbers<[1], [0], [0], [1], [0, 0, 1, 1], [], []>} : vector<56x56xf32>, vector<56x8xf32>, vector<56x8xf32> -> vector<56x8xf32>
    %cst_106 = arith.constant dense<0.000000e+00> : vector<8x8xf32>
    %283 = tpu.matmul %1, %282, %cst_106 {dimension_numbers = #tpu.dot_dimension_numbers<[1], [0], [0], [1], [0, 0, 1, 1], [], []>} : vector<8x56xf32>, vector<56x8xf32>, vector<8x8xf32> -> vector<8x8xf32>
    %284 = arith.mulf %283, %283 : vector<8x8xf32>
    %285 = arith.addf %276, %284 : vector<8x8xf32>
    %cst_107 = arith.constant dense<true> : vector<56x56xi1>
    %286 = arith.xori %252, %cst_107 : vector<56x56xi1>
    %287 = arith.andi %250, %286 : vector<56x56xi1>
    %288 = arith.andi %287, %244 : vector<56x56xi1>
    %cst_108 = arith.constant 0.000000e+00 : f32
    %289 = vector.broadcast %cst_108 : f32 to vector<56x56xf32>
    %290 = arith.select %288, %239, %289 : vector<56x56xi1>, vector<56x56xf32>
    %cst_109 = arith.constant dense<0.000000e+00> : vector<56x8xf32>
    %291 = tpu.matmul %290, %0, %cst_109 {dimension_numbers = #tpu.dot_dimension_numbers<[1], [0], [0], [1], [0, 0, 1, 1], [], []>} : vector<56x56xf32>, vector<56x8xf32>, vector<56x8xf32> -> vector<56x8xf32>
    %cst_110 = arith.constant dense<0.000000e+00> : vector<8x8xf32>
    %292 = tpu.matmul %1, %291, %cst_110 {dimension_numbers = #tpu.dot_dimension_numbers<[1], [0], [0], [1], [0, 0, 1, 1], [], []>} : vector<8x56xf32>, vector<56x8xf32>, vector<8x8xf32> -> vector<8x8xf32>
    %293 = arith.mulf %292, %292 : vector<8x8xf32>
    %294 = arith.addf %285, %293 : vector<8x8xf32>
    %cst_111 = arith.constant dense<true> : vector<56x56xi1>
    %295 = arith.xori %254, %cst_111 : vector<56x56xi1>
    %296 = arith.andi %252, %295 : vector<56x56xi1>
    %297 = arith.andi %296, %244 : vector<56x56xi1>
    %cst_112 = arith.constant 0.000000e+00 : f32
    %298 = vector.broadcast %cst_112 : f32 to vector<56x56xf32>
    %299 = arith.select %297, %239, %298 : vector<56x56xi1>, vector<56x56xf32>
    %cst_113 = arith.constant dense<0.000000e+00> : vector<56x8xf32>
    %300 = tpu.matmul %299, %0, %cst_113 {dimension_numbers = #tpu.dot_dimension_numbers<[1], [0], [0], [1], [0, 0, 1, 1], [], []>} : vector<56x56xf32>, vector<56x8xf32>, vector<56x8xf32> -> vector<56x8xf32>
    %cst_114 = arith.constant dense<0.000000e+00> : vector<8x8xf32>
    %301 = tpu.matmul %1, %300, %cst_114 {dimension_numbers = #tpu.dot_dimension_numbers<[1], [0], [0], [1], [0, 0, 1, 1], [], []>} : vector<8x56xf32>, vector<56x8xf32>, vector<8x8xf32> -> vector<8x8xf32>
    %302 = arith.mulf %301, %301 : vector<8x8xf32>
    %303 = arith.addf %294, %302 : vector<8x8xf32>
    %cst_115 = arith.constant dense<true> : vector<56x56xi1>
    %304 = arith.xori %256, %cst_115 : vector<56x56xi1>
    %305 = arith.andi %254, %304 : vector<56x56xi1>
    %306 = arith.andi %305, %244 : vector<56x56xi1>
    %cst_116 = arith.constant 0.000000e+00 : f32
    %307 = vector.broadcast %cst_116 : f32 to vector<56x56xf32>
    %308 = arith.select %306, %239, %307 : vector<56x56xi1>, vector<56x56xf32>
    %cst_117 = arith.constant dense<0.000000e+00> : vector<56x8xf32>
    %309 = tpu.matmul %308, %0, %cst_117 {dimension_numbers = #tpu.dot_dimension_numbers<[1], [0], [0], [1], [0, 0, 1, 1], [], []>} : vector<56x56xf32>, vector<56x8xf32>, vector<56x8xf32> -> vector<56x8xf32>
    %cst_118 = arith.constant dense<0.000000e+00> : vector<8x8xf32>
    %310 = tpu.matmul %1, %309, %cst_118 {dimension_numbers = #tpu.dot_dimension_numbers<[1], [0], [0], [1], [0, 0, 1, 1], [], []>} : vector<8x56xf32>, vector<56x8xf32>, vector<8x8xf32> -> vector<8x8xf32>
    %311 = arith.mulf %310, %310 : vector<8x8xf32>
    %312 = arith.addf %303, %311 : vector<8x8xf32>
    %cst_119 = arith.constant dense<true> : vector<56x56xi1>
    %313 = arith.xori %258, %cst_119 : vector<56x56xi1>
    %314 = arith.andi %256, %313 : vector<56x56xi1>
    %315 = arith.andi %314, %244 : vector<56x56xi1>
    %cst_120 = arith.constant 0.000000e+00 : f32
    %316 = vector.broadcast %cst_120 : f32 to vector<56x56xf32>
    %317 = arith.select %315, %239, %316 : vector<56x56xi1>, vector<56x56xf32>
    %cst_121 = arith.constant dense<0.000000e+00> : vector<56x8xf32>
    %318 = tpu.matmul %317, %0, %cst_121 {dimension_numbers = #tpu.dot_dimension_numbers<[1], [0], [0], [1], [0, 0, 1, 1], [], []>} : vector<56x56xf32>, vector<56x8xf32>, vector<56x8xf32> -> vector<56x8xf32>
    %cst_122 = arith.constant dense<0.000000e+00> : vector<8x8xf32>
    %319 = tpu.matmul %1, %318, %cst_122 {dimension_numbers = #tpu.dot_dimension_numbers<[1], [0], [0], [1], [0, 0, 1, 1], [], []>} : vector<8x56xf32>, vector<56x8xf32>, vector<8x8xf32> -> vector<8x8xf32>
    %320 = arith.mulf %319, %319 : vector<8x8xf32>
    %321 = arith.addf %312, %320 : vector<8x8xf32>
    %cst_123 = arith.constant dense<true> : vector<56x56xi1>
    %322 = arith.xori %260, %cst_123 : vector<56x56xi1>
    %323 = arith.andi %258, %322 : vector<56x56xi1>
    %324 = arith.andi %323, %244 : vector<56x56xi1>
    %cst_124 = arith.constant 0.000000e+00 : f32
    %325 = vector.broadcast %cst_124 : f32 to vector<56x56xf32>
    %326 = arith.select %324, %239, %325 : vector<56x56xi1>, vector<56x56xf32>
    %cst_125 = arith.constant dense<0.000000e+00> : vector<56x8xf32>
    %327 = tpu.matmul %326, %0, %cst_125 {dimension_numbers = #tpu.dot_dimension_numbers<[1], [0], [0], [1], [0, 0, 1, 1], [], []>} : vector<56x56xf32>, vector<56x8xf32>, vector<56x8xf32> -> vector<56x8xf32>
    %cst_126 = arith.constant dense<0.000000e+00> : vector<8x8xf32>
    %328 = tpu.matmul %1, %327, %cst_126 {dimension_numbers = #tpu.dot_dimension_numbers<[1], [0], [0], [1], [0, 0, 1, 1], [], []>} : vector<8x56xf32>, vector<56x8xf32>, vector<8x8xf32> -> vector<8x8xf32>
    %329 = arith.mulf %328, %328 : vector<8x8xf32>
    %330 = arith.addf %321, %329 : vector<8x8xf32>
    %331 = arith.andi %260, %244 : vector<56x56xi1>
    %cst_127 = arith.constant 0.000000e+00 : f32
    %332 = vector.broadcast %cst_127 : f32 to vector<56x56xf32>
    %333 = arith.select %331, %239, %332 : vector<56x56xi1>, vector<56x56xf32>
    %cst_128 = arith.constant dense<0.000000e+00> : vector<56x8xf32>
    %334 = tpu.matmul %333, %0, %cst_128 {dimension_numbers = #tpu.dot_dimension_numbers<[1], [0], [0], [1], [0, 0, 1, 1], [], []>} : vector<56x56xf32>, vector<56x8xf32>, vector<56x8xf32> -> vector<56x8xf32>
    %cst_129 = arith.constant dense<0.000000e+00> : vector<8x8xf32>
    %335 = tpu.matmul %1, %334, %cst_129 {dimension_numbers = #tpu.dot_dimension_numbers<[1], [0], [0], [1], [0, 0, 1, 1], [], []>} : vector<8x56xf32>, vector<56x8xf32>, vector<8x8xf32> -> vector<8x8xf32>
    %336 = arith.mulf %335, %335 : vector<8x8xf32>
    %337 = arith.addf %330, %336 : vector<8x8xf32>
    %338 = math.rsqrt %337 : vector<8x8xf32>
    %cst_130 = arith.constant 9.99999995E+11 : f32
    %339 = vector.broadcast %cst_130 : f32 to vector<8x8xf32>
    %340 = arith.minimumf %338, %339 : vector<8x8xf32>
    %341 = arith.mulf %266, %340 : vector<8x8xf32>
    %342 = arith.mulf %274, %340 : vector<8x8xf32>
    %343 = arith.mulf %283, %340 : vector<8x8xf32>
    %344 = arith.mulf %292, %340 : vector<8x8xf32>
    %345 = arith.mulf %301, %340 : vector<8x8xf32>
    %346 = arith.mulf %310, %340 : vector<8x8xf32>
    %347 = arith.mulf %319, %340 : vector<8x8xf32>
    %348 = arith.mulf %328, %340 : vector<8x8xf32>
    %349 = arith.mulf %335, %340 : vector<8x8xf32>
    %350 = tpu.concatenate %341, %342, %343, %344, %345, %346, %347, %348, %349 in 0 : vector<8x8xf32>, vector<8x8xf32>, vector<8x8xf32>, vector<8x8xf32>, vector<8x8xf32>, vector<8x8xf32>, vector<8x8xf32>, vector<8x8xf32>, vector<8x8xf32> -> vector<72x8xf32>
    %c0_131 = arith.constant 0 : index
    %c0_132 = arith.constant 0 : index
    %c8 = arith.constant 8 : index
    %351 = vector.load %arg4[%c0_131, %c0_132, %c8] : memref<1x72x24xf32, #tpu.memory_space<vmem>>, vector<1x72x8xf32>
    %352 = vector.shape_cast %351 : vector<1x72x8xf32> to vector<72x8xf32>
    %353 = vector.shape_cast %350 : vector<72x8xf32> to vector<1x72x8xf32>
    tpu.vector_store %arg4[%c0_131, %c0_132, %c8], %353 {strides = array<i32>} : memref<1x72x24xf32, #tpu.memory_space<vmem>>, vector<1x72x8xf32>,
    %c2 = arith.constant 2 : index
    %c0_133 = arith.constant 0 : index
    %c0_134 = arith.constant 0 : index
    %354 = vector.load %arg1[%c2, %c0_133, %c0_134] : memref<3x56x56xf32, #tpu.memory_space<vmem>>, vector<1x56x56xf32>
    %355 = vector.shape_cast %354 : vector<1x56x56xf32> to vector<56x56xf32>
    %c1_i32_135 = arith.constant 1 : i32
    %356 = tpu.dynamic_rotate %355 by %c1_i32_135 dim 1 : vector<56x56xf32>, i32 -> vector<56x56xf32>
    %c55_i32_136 = arith.constant 55 : i32
    %357 = tpu.dynamic_rotate %355 by %c55_i32_136 dim 1 : vector<56x56xf32>, i32 -> vector<56x56xf32>
    %358 = arith.subf %356, %357 : vector<56x56xf32>
    %cst_137 = arith.constant 0.000000e+00 : f32
    %359 = vector.broadcast %cst_137 : f32 to vector<56x56xf32>
    %360 = arith.select %13, %359, %358 : vector<56x56xi1>, vector<56x56xf32>
    %c1_i32_138 = arith.constant 1 : i32
    %361 = tpu.dynamic_rotate %355 by %c1_i32_138 dim 0 : vector<56x56xf32>, i32 -> vector<56x56xf32>
    %c55_i32_139 = arith.constant 55 : i32
    %362 = tpu.dynamic_rotate %355 by %c55_i32_139 dim 0 : vector<56x56xf32>, i32 -> vector<56x56xf32>
    %363 = arith.subf %361, %362 : vector<56x56xf32>
    %cst_140 = arith.constant 0.000000e+00 : f32
    %364 = vector.broadcast %cst_140 : f32 to vector<56x56xf32>
    %365 = arith.select %12, %364, %363 : vector<56x56xi1>, vector<56x56xf32>
    %c1_i32_141 = arith.constant 1 : i32
    %366 = tpu.dynamic_rotate %360 by %c1_i32_141 dim 0 : vector<56x56xf32>, i32 -> vector<56x56xf32>
    %cst_142 = arith.constant 2.000000e+00 : f32
    %367 = vector.broadcast %cst_142 : f32 to vector<56x56xf32>
    %368 = arith.mulf %367, %360 : vector<56x56xf32>
    %369 = arith.addf %366, %368 : vector<56x56xf32>
    %c55_i32_143 = arith.constant 55 : i32
    %370 = tpu.dynamic_rotate %360 by %c55_i32_143 dim 0 : vector<56x56xf32>, i32 -> vector<56x56xf32>
    %371 = arith.addf %369, %370 : vector<56x56xf32>
    %372 = vector.extract_strided_slice %360 {offsets = [1, 0], sizes = [1, 56], strides = [1, 1]} : vector<56x56xf32> to vector<1x56xf32>
    %373 = vector.extract_strided_slice %360 {offsets = [55, 0], sizes = [1, 56], strides = [1, 1]} : vector<56x56xf32> to vector<1x56xf32>
    %374 = arith.subf %372, %373 : vector<1x56xf32>
    %375 = vector.extract_strided_slice %360 {offsets = [54, 0], sizes = [1, 56], strides = [1, 1]} : vector<56x56xf32> to vector<1x56xf32>
    %376 = vector.extract_strided_slice %360 {offsets = [0, 0], sizes = [1, 56], strides = [1, 1]} : vector<56x56xf32> to vector<1x56xf32>
    %377 = arith.subf %375, %376 : vector<1x56xf32>
    %cst_144 = arith.constant 0.000000e+00 : f32
    %378 = vector.shape_cast %377 : vector<1x56xf32> to vector<1x56xf32>
    %379 = vector.broadcast %378 : vector<1x56xf32> to vector<56x56xf32>
    %380 = vector.broadcast %cst_144 : f32 to vector<56x56xf32>
    %381 = arith.select %7, %379, %380 : vector<56x56xi1>, vector<56x56xf32>
    %382 = vector.shape_cast %374 : vector<1x56xf32> to vector<1x56xf32>
    %383 = vector.broadcast %382 : vector<1x56xf32> to vector<56x56xf32>
    %384 = arith.select %5, %383, %381 : vector<56x56xi1>, vector<56x56xf32>
    %385 = arith.addf %371, %384 : vector<56x56xf32>
    %c1_i32_145 = arith.constant 1 : i32
    %386 = tpu.dynamic_rotate %365 by %c1_i32_145 dim 1 : vector<56x56xf32>, i32 -> vector<56x56xf32>
    %cst_146 = arith.constant 2.000000e+00 : f32
    %387 = vector.broadcast %cst_146 : f32 to vector<56x56xf32>
    %388 = arith.mulf %387, %365 : vector<56x56xf32>
    %389 = arith.addf %386, %388 : vector<56x56xf32>
    %c55_i32_147 = arith.constant 55 : i32
    %390 = tpu.dynamic_rotate %365 by %c55_i32_147 dim 1 : vector<56x56xf32>, i32 -> vector<56x56xf32>
    %391 = arith.addf %389, %390 : vector<56x56xf32>
    %392 = vector.extract_strided_slice %365 {offsets = [0, 1], sizes = [56, 1], strides = [1, 1]} : vector<56x56xf32> to vector<56x1xf32>
    %393 = vector.extract_strided_slice %365 {offsets = [0, 55], sizes = [56, 1], strides = [1, 1]} : vector<56x56xf32> to vector<56x1xf32>
    %394 = arith.subf %392, %393 : vector<56x1xf32>
    %395 = vector.extract_strided_slice %365 {offsets = [0, 54], sizes = [56, 1], strides = [1, 1]} : vector<56x56xf32> to vector<56x1xf32>
    %396 = vector.extract_strided_slice %365 {offsets = [0, 0], sizes = [56, 1], strides = [1, 1]} : vector<56x56xf32> to vector<56x1xf32>
    %397 = arith.subf %395, %396 : vector<56x1xf32>
    %cst_148 = arith.constant 0.000000e+00 : f32
    %398 = vector.shape_cast %397 : vector<56x1xf32> to vector<56x1xf32>
    %399 = vector.broadcast %398 : vector<56x1xf32> to vector<56x56xf32>
    %400 = vector.broadcast %cst_148 : f32 to vector<56x56xf32>
    %401 = arith.select %11, %399, %400 : vector<56x56xi1>, vector<56x56xf32>
    %402 = vector.shape_cast %394 : vector<56x1xf32> to vector<56x1xf32>
    %403 = vector.broadcast %402 : vector<56x1xf32> to vector<56x56xf32>
    %404 = arith.select %9, %403, %401 : vector<56x56xi1>, vector<56x56xf32>
    %405 = arith.addf %391, %404 : vector<56x56xf32>
    %406 = arith.mulf %385, %385 : vector<56x56xf32>
    %407 = arith.mulf %405, %405 : vector<56x56xf32>
    %408 = arith.addf %406, %407 : vector<56x56xf32>
    %409 = math.sqrt %408 : vector<56x56xf32>
    %410 = tpu.reciprocal %385 {approx = true} : vector<56x56xf32> -> vector<56x56xf32>
    %411 = arith.mulf %405, %410 : vector<56x56xf32>
    %cst_149 = arith.constant 0.000000e+00 : f32
    %412 = vector.broadcast %cst_149 : f32 to vector<56x56xf32>
    %413 = arith.cmpf oeq, %385, %412 : vector<56x56xf32>
    %cst_150 = arith.constant dense<true> : vector<56x56xi1>
    %414 = arith.xori %413, %cst_150 : vector<56x56xi1>
    %cst_151 = arith.constant 2.74747753 : f32
    %415 = vector.broadcast %cst_151 : f32 to vector<56x56xf32>
    %416 = arith.cmpf ole, %411, %415 : vector<56x56xf32>
    %cst_152 = arith.constant 1.19175363 : f32
    %417 = vector.broadcast %cst_152 : f32 to vector<56x56xf32>
    %418 = arith.cmpf ole, %411, %417 : vector<56x56xf32>
    %cst_153 = arith.constant 0.577350259 : f32
    %419 = vector.broadcast %cst_153 : f32 to vector<56x56xf32>
    %420 = arith.cmpf ole, %411, %419 : vector<56x56xf32>
    %cst_154 = arith.constant 0.176326975 : f32
    %421 = vector.broadcast %cst_154 : f32 to vector<56x56xf32>
    %422 = arith.cmpf ole, %411, %421 : vector<56x56xf32>
    %cst_155 = arith.constant -0.176326975 : f32
    %423 = vector.broadcast %cst_155 : f32 to vector<56x56xf32>
    %424 = arith.cmpf ole, %411, %423 : vector<56x56xf32>
    %cst_156 = arith.constant -0.577350259 : f32
    %425 = vector.broadcast %cst_156 : f32 to vector<56x56xf32>
    %426 = arith.cmpf ole, %411, %425 : vector<56x56xf32>
    %cst_157 = arith.constant -1.19175363 : f32
    %427 = vector.broadcast %cst_157 : f32 to vector<56x56xf32>
    %428 = arith.cmpf ole, %411, %427 : vector<56x56xf32>
    %cst_158 = arith.constant -2.74747753 : f32
    %429 = vector.broadcast %cst_158 : f32 to vector<56x56xf32>
    %430 = arith.cmpf ole, %411, %429 : vector<56x56xf32>
    %cst_159 = arith.constant dense<true> : vector<56x56xi1>
    %431 = arith.xori %416, %cst_159 : vector<56x56xi1>
    %432 = arith.ori %431, %413 : vector<56x56xi1>
    %cst_160 = arith.constant 0.000000e+00 : f32
    %433 = vector.broadcast %cst_160 : f32 to vector<56x56xf32>
    %434 = arith.select %432, %409, %433 : vector<56x56xi1>, vector<56x56xf32>
    %cst_161 = arith.constant dense<0.000000e+00> : vector<56x8xf32>
    %435 = tpu.matmul %434, %0, %cst_161 {dimension_numbers = #tpu.dot_dimension_numbers<[1], [0], [0], [1], [0, 0, 1, 1], [], []>} : vector<56x56xf32>, vector<56x8xf32>, vector<56x8xf32> -> vector<56x8xf32>
    %cst_162 = arith.constant dense<0.000000e+00> : vector<8x8xf32>
    %436 = tpu.matmul %1, %435, %cst_162 {dimension_numbers = #tpu.dot_dimension_numbers<[1], [0], [0], [1], [0, 0, 1, 1], [], []>} : vector<8x56xf32>, vector<56x8xf32>, vector<8x8xf32> -> vector<8x8xf32>
    %437 = arith.mulf %436, %436 : vector<8x8xf32>
    %cst_163 = arith.constant dense<true> : vector<56x56xi1>
    %438 = arith.xori %418, %cst_163 : vector<56x56xi1>
    %439 = arith.andi %416, %438 : vector<56x56xi1>
    %440 = arith.andi %439, %414 : vector<56x56xi1>
    %cst_164 = arith.constant 0.000000e+00 : f32
    %441 = vector.broadcast %cst_164 : f32 to vector<56x56xf32>
    %442 = arith.select %440, %409, %441 : vector<56x56xi1>, vector<56x56xf32>
    %cst_165 = arith.constant dense<0.000000e+00> : vector<56x8xf32>
    %443 = tpu.matmul %442, %0, %cst_165 {dimension_numbers = #tpu.dot_dimension_numbers<[1], [0], [0], [1], [0, 0, 1, 1], [], []>} : vector<56x56xf32>, vector<56x8xf32>, vector<56x8xf32> -> vector<56x8xf32>
    %cst_166 = arith.constant dense<0.000000e+00> : vector<8x8xf32>
    %444 = tpu.matmul %1, %443, %cst_166 {dimension_numbers = #tpu.dot_dimension_numbers<[1], [0], [0], [1], [0, 0, 1, 1], [], []>} : vector<8x56xf32>, vector<56x8xf32>, vector<8x8xf32> -> vector<8x8xf32>
    %445 = arith.mulf %444, %444 : vector<8x8xf32>
    %446 = arith.addf %437, %445 : vector<8x8xf32>
    %cst_167 = arith.constant dense<true> : vector<56x56xi1>
    %447 = arith.xori %420, %cst_167 : vector<56x56xi1>
    %448 = arith.andi %418, %447 : vector<56x56xi1>
    %449 = arith.andi %448, %414 : vector<56x56xi1>
    %cst_168 = arith.constant 0.000000e+00 : f32
    %450 = vector.broadcast %cst_168 : f32 to vector<56x56xf32>
    %451 = arith.select %449, %409, %450 : vector<56x56xi1>, vector<56x56xf32>
    %cst_169 = arith.constant dense<0.000000e+00> : vector<56x8xf32>
    %452 = tpu.matmul %451, %0, %cst_169 {dimension_numbers = #tpu.dot_dimension_numbers<[1], [0], [0], [1], [0, 0, 1, 1], [], []>} : vector<56x56xf32>, vector<56x8xf32>, vector<56x8xf32> -> vector<56x8xf32>
    %cst_170 = arith.constant dense<0.000000e+00> : vector<8x8xf32>
    %453 = tpu.matmul %1, %452, %cst_170 {dimension_numbers = #tpu.dot_dimension_numbers<[1], [0], [0], [1], [0, 0, 1, 1], [], []>} : vector<8x56xf32>, vector<56x8xf32>, vector<8x8xf32> -> vector<8x8xf32>
    %454 = arith.mulf %453, %453 : vector<8x8xf32>
    %455 = arith.addf %446, %454 : vector<8x8xf32>
    %cst_171 = arith.constant dense<true> : vector<56x56xi1>
    %456 = arith.xori %422, %cst_171 : vector<56x56xi1>
    %457 = arith.andi %420, %456 : vector<56x56xi1>
    %458 = arith.andi %457, %414 : vector<56x56xi1>
    %cst_172 = arith.constant 0.000000e+00 : f32
    %459 = vector.broadcast %cst_172 : f32 to vector<56x56xf32>
    %460 = arith.select %458, %409, %459 : vector<56x56xi1>, vector<56x56xf32>
    %cst_173 = arith.constant dense<0.000000e+00> : vector<56x8xf32>
    %461 = tpu.matmul %460, %0, %cst_173 {dimension_numbers = #tpu.dot_dimension_numbers<[1], [0], [0], [1], [0, 0, 1, 1], [], []>} : vector<56x56xf32>, vector<56x8xf32>, vector<56x8xf32> -> vector<56x8xf32>
    %cst_174 = arith.constant dense<0.000000e+00> : vector<8x8xf32>
    %462 = tpu.matmul %1, %461, %cst_174 {dimension_numbers = #tpu.dot_dimension_numbers<[1], [0], [0], [1], [0, 0, 1, 1], [], []>} : vector<8x56xf32>, vector<56x8xf32>, vector<8x8xf32> -> vector<8x8xf32>
    %463 = arith.mulf %462, %462 : vector<8x8xf32>
    %464 = arith.addf %455, %463 : vector<8x8xf32>
    %cst_175 = arith.constant dense<true> : vector<56x56xi1>
    %465 = arith.xori %424, %cst_175 : vector<56x56xi1>
    %466 = arith.andi %422, %465 : vector<56x56xi1>
    %467 = arith.andi %466, %414 : vector<56x56xi1>
    %cst_176 = arith.constant 0.000000e+00 : f32
    %468 = vector.broadcast %cst_176 : f32 to vector<56x56xf32>
    %469 = arith.select %467, %409, %468 : vector<56x56xi1>, vector<56x56xf32>
    %cst_177 = arith.constant dense<0.000000e+00> : vector<56x8xf32>
    %470 = tpu.matmul %469, %0, %cst_177 {dimension_numbers = #tpu.dot_dimension_numbers<[1], [0], [0], [1], [0, 0, 1, 1], [], []>} : vector<56x56xf32>, vector<56x8xf32>, vector<56x8xf32> -> vector<56x8xf32>
    %cst_178 = arith.constant dense<0.000000e+00> : vector<8x8xf32>
    %471 = tpu.matmul %1, %470, %cst_178 {dimension_numbers = #tpu.dot_dimension_numbers<[1], [0], [0], [1], [0, 0, 1, 1], [], []>} : vector<8x56xf32>, vector<56x8xf32>, vector<8x8xf32> -> vector<8x8xf32>
    %472 = arith.mulf %471, %471 : vector<8x8xf32>
    %473 = arith.addf %464, %472 : vector<8x8xf32>
    %cst_179 = arith.constant dense<true> : vector<56x56xi1>
    %474 = arith.xori %426, %cst_179 : vector<56x56xi1>
    %475 = arith.andi %424, %474 : vector<56x56xi1>
    %476 = arith.andi %475, %414 : vector<56x56xi1>
    %cst_180 = arith.constant 0.000000e+00 : f32
    %477 = vector.broadcast %cst_180 : f32 to vector<56x56xf32>
    %478 = arith.select %476, %409, %477 : vector<56x56xi1>, vector<56x56xf32>
    %cst_181 = arith.constant dense<0.000000e+00> : vector<56x8xf32>
    %479 = tpu.matmul %478, %0, %cst_181 {dimension_numbers = #tpu.dot_dimension_numbers<[1], [0], [0], [1], [0, 0, 1, 1], [], []>} : vector<56x56xf32>, vector<56x8xf32>, vector<56x8xf32> -> vector<56x8xf32>
    %cst_182 = arith.constant dense<0.000000e+00> : vector<8x8xf32>
    %480 = tpu.matmul %1, %479, %cst_182 {dimension_numbers = #tpu.dot_dimension_numbers<[1], [0], [0], [1], [0, 0, 1, 1], [], []>} : vector<8x56xf32>, vector<56x8xf32>, vector<8x8xf32> -> vector<8x8xf32>
    %481 = arith.mulf %480, %480 : vector<8x8xf32>
    %482 = arith.addf %473, %481 : vector<8x8xf32>
    %cst_183 = arith.constant dense<true> : vector<56x56xi1>
    %483 = arith.xori %428, %cst_183 : vector<56x56xi1>
    %484 = arith.andi %426, %483 : vector<56x56xi1>
    %485 = arith.andi %484, %414 : vector<56x56xi1>
    %cst_184 = arith.constant 0.000000e+00 : f32
    %486 = vector.broadcast %cst_184 : f32 to vector<56x56xf32>
    %487 = arith.select %485, %409, %486 : vector<56x56xi1>, vector<56x56xf32>
    %cst_185 = arith.constant dense<0.000000e+00> : vector<56x8xf32>
    %488 = tpu.matmul %487, %0, %cst_185 {dimension_numbers = #tpu.dot_dimension_numbers<[1], [0], [0], [1], [0, 0, 1, 1], [], []>} : vector<56x56xf32>, vector<56x8xf32>, vector<56x8xf32> -> vector<56x8xf32>
    %cst_186 = arith.constant dense<0.000000e+00> : vector<8x8xf32>
    %489 = tpu.matmul %1, %488, %cst_186 {dimension_numbers = #tpu.dot_dimension_numbers<[1], [0], [0], [1], [0, 0, 1, 1], [], []>} : vector<8x56xf32>, vector<56x8xf32>, vector<8x8xf32> -> vector<8x8xf32>
    %490 = arith.mulf %489, %489 : vector<8x8xf32>
    %491 = arith.addf %482, %490 : vector<8x8xf32>
    %cst_187 = arith.constant dense<true> : vector<56x56xi1>
    %492 = arith.xori %430, %cst_187 : vector<56x56xi1>
    %493 = arith.andi %428, %492 : vector<56x56xi1>
    %494 = arith.andi %493, %414 : vector<56x56xi1>
    %cst_188 = arith.constant 0.000000e+00 : f32
    %495 = vector.broadcast %cst_188 : f32 to vector<56x56xf32>
    %496 = arith.select %494, %409, %495 : vector<56x56xi1>, vector<56x56xf32>
    %cst_189 = arith.constant dense<0.000000e+00> : vector<56x8xf32>
    %497 = tpu.matmul %496, %0, %cst_189 {dimension_numbers = #tpu.dot_dimension_numbers<[1], [0], [0], [1], [0, 0, 1, 1], [], []>} : vector<56x56xf32>, vector<56x8xf32>, vector<56x8xf32> -> vector<56x8xf32>
    %cst_190 = arith.constant dense<0.000000e+00> : vector<8x8xf32>
    %498 = tpu.matmul %1, %497, %cst_190 {dimension_numbers = #tpu.dot_dimension_numbers<[1], [0], [0], [1], [0, 0, 1, 1], [], []>} : vector<8x56xf32>, vector<56x8xf32>, vector<8x8xf32> -> vector<8x8xf32>
    %499 = arith.mulf %498, %498 : vector<8x8xf32>
    %500 = arith.addf %491, %499 : vector<8x8xf32>
    %501 = arith.andi %430, %414 : vector<56x56xi1>
    %cst_191 = arith.constant 0.000000e+00 : f32
    %502 = vector.broadcast %cst_191 : f32 to vector<56x56xf32>
    %503 = arith.select %501, %409, %502 : vector<56x56xi1>, vector<56x56xf32>
    %cst_192 = arith.constant dense<0.000000e+00> : vector<56x8xf32>
    %504 = tpu.matmul %503, %0, %cst_192 {dimension_numbers = #tpu.dot_dimension_numbers<[1], [0], [0], [1], [0, 0, 1, 1], [], []>} : vector<56x56xf32>, vector<56x8xf32>, vector<56x8xf32> -> vector<56x8xf32>
    %cst_193 = arith.constant dense<0.000000e+00> : vector<8x8xf32>
    %505 = tpu.matmul %1, %504, %cst_193 {dimension_numbers = #tpu.dot_dimension_numbers<[1], [0], [0], [1], [0, 0, 1, 1], [], []>} : vector<8x56xf32>, vector<56x8xf32>, vector<8x8xf32> -> vector<8x8xf32>
    %506 = arith.mulf %505, %505 : vector<8x8xf32>
    %507 = arith.addf %500, %506 : vector<8x8xf32>
    %508 = math.rsqrt %507 : vector<8x8xf32>
    %cst_194 = arith.constant 9.99999995E+11 : f32
    %509 = vector.broadcast %cst_194 : f32 to vector<8x8xf32>
    %510 = arith.minimumf %508, %509 : vector<8x8xf32>
    %511 = arith.mulf %436, %510 : vector<8x8xf32>
    %512 = arith.mulf %444, %510 : vector<8x8xf32>
    %513 = arith.mulf %453, %510 : vector<8x8xf32>
    %514 = arith.mulf %462, %510 : vector<8x8xf32>
    %515 = arith.mulf %471, %510 : vector<8x8xf32>
    %516 = arith.mulf %480, %510 : vector<8x8xf32>
    %517 = arith.mulf %489, %510 : vector<8x8xf32>
    %518 = arith.mulf %498, %510 : vector<8x8xf32>
    %519 = arith.mulf %505, %510 : vector<8x8xf32>
    %520 = tpu.concatenate %511, %512, %513, %514, %515, %516, %517, %518, %519 in 0 : vector<8x8xf32>, vector<8x8xf32>, vector<8x8xf32>, vector<8x8xf32>, vector<8x8xf32>, vector<8x8xf32>, vector<8x8xf32>, vector<8x8xf32>, vector<8x8xf32> -> vector<72x8xf32>
    %c0_195 = arith.constant 0 : index
    %c0_196 = arith.constant 0 : index
    %c16 = arith.constant 16 : index
    %521 = vector.load %arg4[%c0_195, %c0_196, %c16] : memref<1x72x24xf32, #tpu.memory_space<vmem>>, vector<1x72x8xf32>
    %522 = vector.shape_cast %521 : vector<1x72x8xf32> to vector<72x8xf32>
    %523 = vector.shape_cast %520 : vector<72x8xf32> to vector<1x72x8xf32>
    tpu.vector_store %arg4[%c0_195, %c0_196, %c16], %523 {strides = array<i32>} : memref<1x72x24xf32, #tpu.memory_space<vmem>>, vector<1x72x8xf32>,
    return
  }
  func.func @transform_0(%arg0: i32) -> (i32, i32, i32) {
    %c0_i32 = arith.constant 0 : i32
    %c0_i32_0 = arith.constant 0 : i32
    %c0_i32_1 = arith.constant 0 : i32
    return %arg0, %c0_i32, %c0_i32_0 : i32, i32, i32
  }
  func.func @transform_1(%arg0: i32) -> (i32, i32) {
    %c0_i32 = arith.constant 0 : i32
    %c0_i32_0 = arith.constant 0 : i32
    %c0_i32_1 = arith.constant 0 : i32
    return %c0_i32, %c0_i32_0 : i32, i32
  }
  func.func @transform_2(%arg0: i32) -> (i32, i32) {
    %c0_i32 = arith.constant 0 : i32
    %c0_i32_0 = arith.constant 0 : i32
    %c0_i32_1 = arith.constant 0 : i32
    return %c0_i32, %c0_i32_0 : i32, i32
  }
  func.func @transform_3(%arg0: i32) -> (i32, i32, i32) {
    %c0_i32 = arith.constant 0 : i32
    %c0_i32_0 = arith.constant 0 : i32
    %c0_i32_1 = arith.constant 0 : i32
    return %arg0, %c0_i32, %c0_i32_0 : i32, i32, i32
  }
}

</mosaic_0001>

<llo_original>
// kernel: tpu_custom_call.1
$region0: #{tpu_custom_call.1}
  #allocation0 [shape = 'u32[]', space=smem, size = 0x4, offset = 0x4, fixed_abs, tag = 'smem constant byte address 0x4 - core index']
  #allocation1 [shape = 'u32[72,128]{1,0:T(1,128)}', space=vmem, size = 0x9000, scoped, tag = 'internal scratch']
  %s0 = inlined_call_operand.hbm [shape: f32[6,56,56], index: 0, kind: input, shape index: {}]
  %s1 = inlined_call_operand.vmem [shape: f32[56,8], index: 1, kind: input, shape index: {}]
  %s2 = inlined_call_operand.vmem [shape: f32[8,56], index: 2, kind: input, shape index: {}]
  %s3 = inlined_call_operand.vmem [shape: f32[2,72,24], index: 3, kind: output, shape index: {}]
  %s4 = sld [smem:[#allocation0]]
  $region49: #{tpu_custom_call.1} parent=0
    _
  %s6 = ssub.s32 1, %s4
  %s7 = scalar_select 0, %s6, %s4
  $region1: #{tpu_custom_call.1} parent=0
    #allocation2 [shape = 'u8[172032]{0}', space=vmem, size = 0x2a000, scoped, tag = 'input window, operand 0']
    #allocation3 [shape = 's32[2]{0}', space=sflag, size = 0x8, scoped, tag = 'scoped memory for tpu_custom_call.1']
    %8 = vsyncpa [#allocation3], 0
    %s9 = scalar_lea.sflag [#allocation3], 1
    %10 = vsyncpa %s9, 0
    loop: start=0, step=1, limit=4
    $region2: #{tpu_custom_call.1} parent=1 // loop_pre_header
      _
    $region3: #{tpu_custom_call.1} parent=1 // loop_header
      %s12 = sphi 0, %s16
      %p13 = scmp.ge.s32.totalorder %s12, 4
      %s22 = sphi 0, %s24
      %s25 = sphi 0, %s22
      %s26 = sphi 0, %s25
      %s42 = sphi 0, %s26
      %s46 = sphi 0, %s46
      %s48 = sphi 0, %s46
      %s49 = sphi 0, %s48
      %s63 = sphi 0, %s49
      %s67 = sphi 0, %s67
      %s69 = sphi 0, %s67
      %s70 = sphi 0, %s69
      %s84 = sphi 0, %s70
      %s90 = sphi 0, %s92
      %s93 = sphi 0, %s90
      %s94 = sphi 0, %s93
      %s110 = sphi 0, %s94
    $region4: #{tpu_custom_call.1} parent=1 // loop_header_branch
      %15 = sbr.rel (%p13) target = $region8
    $region5: #{tpu_custom_call.1} parent=1 // loop_body
      %s17 = ssub.s32 %s12, 1
      %s18 = ssub.s32 %s12, 2
      %s19 = sadd.s32 %s12, 1
      %s20 = ssub.s32 %s12, %s19
      %p21 = scmp.eq.s32.totalorder %s20, 0
      %s23 = sadd.s32 %s22, 1
      %s24 = scalar_select %p21, %s22, %s23
      %p27 = pneg %p21
      %p28 = scmp.eq.s32.totalorder %s12, 1
      %p29 = por %p27, %p28
      %p30 = scmp.ne.s32.totalorder %s22, %s25
      %p31 = scmp.eq.s32.totalorder %s12, 0
      %p32 = por %p30, %p31
      %p33 = scmp.ne.s32.totalorder %s22, %s25
      %p34 = scmp.eq.s32.totalorder %s17, 1
      %p35 = por %p33, %p34
      %p36 = scmp.ne.s32.totalorder %s25, %s26
      %p37 = scmp.eq.s32.totalorder %s17, 0
      %p38 = por %p36, %p37
      %p39 = scmp.ne.s32.totalorder %s25, %s26
      %p40 = scmp.eq.s32.totalorder %s18, 1
      %p41 = por %p39, %p40
      %p43 = scmp.ne.s32.totalorder %s26, %s42
      %p44 = scmp.eq.s32.totalorder %s18, 0
      %p45 = por %p43, %p44
      %s47 = sadd.s32 %s46, 1
      %p50 = scmp.eq.s32.totalorder %s12, 1
      %p51 = scmp.ne.s32.totalorder %s46, %s48
      %p52 = scmp.eq.s32.totalorder %s12, 0
      %p53 = por %p51, %p52
      %p54 = scmp.ne.s32.totalorder %s46, %s48
      %p55 = scmp.eq.s32.totalorder %s17, 1
      %p56 = por %p54, %p55
      %p57 = scmp.ne.s32.totalorder %s48, %s49
      %p58 = scmp.eq.s32.totalorder %s17, 0
      %p59 = por %p57, %p58
      %p60 = scmp.ne.s32.totalorder %s48, %s49
      %p61 = scmp.eq.s32.totalorder %s18, 1
      %p62 = por %p60, %p61
      %p64 = scmp.ne.s32.totalorder %s49, %s63
      %p65 = scmp.eq.s32.totalorder %s18, 0
      %p66 = por %p64, %p65
      %s68 = sadd.s32 %s67, 1
      %p71 = scmp.eq.s32.totalorder %s12, 1
      %p72 = scmp.ne.s32.totalorder %s67, %s69
      %p73 = scmp.eq.s32.totalorder %s12, 0
      %p74 = por %p72, %p73
      %p75 = scmp.ne.s32.totalorder %s67, %s69
      %p76 = scmp.eq.s32.totalorder %s17, 1
      %p77 = por %p75, %p76
      %p78 = scmp.ne.s32.totalorder %s69, %s70
      %p79 = scmp.eq.s32.totalorder %s17, 0
      %p80 = por %p78, %p79
      %p81 = scmp.ne.s32.totalorder %s69, %s70
      %p82 = scmp.eq.s32.totalorder %s18, 1
      %p83 = por %p81, %p82
      %p85 = scmp.ne.s32.totalorder %s70, %s84
      %p86 = scmp.eq.s32.totalorder %s18, 0
      %p87 = por %p85, %p86
      %s88 = ssub.s32 %s12, %s19
      %p89 = scmp.eq.s32.totalorder %s88, 0
      %s91 = sadd.s32 %s90, 1
      %s92 = scalar_select %p89, %s90, %s91
      %p95 = pneg %p89
      %p96 = scmp.eq.s32.totalorder %s12, 1
      %p97 = por %p95, %p96
      %p98 = scmp.ne.s32.totalorder %s90, %s93
      %p99 = scmp.eq.s32.totalorder %s12, 0
      %p100 = por %p98, %p99
      %p101 = scmp.ne.s32.totalorder %s90, %s93
      %p102 = scmp.eq.s32.totalorder %s17, 1
      %p103 = por %p101, %p102
      %p104 = scmp.ne.s32.totalorder %s93, %s94
      %p105 = scmp.eq.s32.totalorder %s17, 0
      %p106 = por %p104, %p105
      %p107 = scmp.ne.s32.totalorder %s93, %s94
      %p108 = scmp.eq.s32.totalorder %s18, 1
      %p109 = por %p107, %p108
      %p111 = scmp.ne.s32.totalorder %s94, %s110
      %p112 = scmp.eq.s32.totalorder %s18, 0
      %p113 = por %p111, %p112
      %p114 = scmp.le.s32.totalorder 1, %s12
      %p115 = scmp.lt.s32.totalorder %s12, 3
      %p116 = pnand %p114, %p115
      %p117 = pneg %p116
      // Predicated region
      $region9: #{tpu_custom_call.1} parent=5 // pred_check
        _
      $region10: #{tpu_custom_call.1} parent=5 // pred_check_branch
        %119 = sbr.rel (%p116) target = $region12
      $region11: #{tpu_custom_call.1} parent=5 // pred_region
        %s120 = ssub.s32 %s12, 1
        // Predicated region
        $region13: #{tpu_custom_call.1} parent=11 // pred_check
          %p121 = pneg %p59
        $region14: #{tpu_custom_call.1} parent=11 // pred_check_branch
          %123 = sbr.rel (%p121) target = $region16
        $region15: #{tpu_custom_call.1} parent=11 // pred_region
          _
        $region16: #{tpu_custom_call.1} parent=11 // pred_fallthru
          _
        // Predicated region
        $region17: #{tpu_custom_call.1} parent=11 // pred_check
          %p124 = pneg %p80
        $region18: #{tpu_custom_call.1} parent=11 // pred_check_branch
          %126 = sbr.rel (%p124) target = $region20
        $region19: #{tpu_custom_call.1} parent=11 // pred_region
          _
        $region20: #{tpu_custom_call.1} parent=11 // pred_fallthru
          _
      $region12: #{tpu_custom_call.1} parent=5 // pred_fallthru
        _
      %p127 = scmp.lt.s32.totalorder %s12, 2
      // Predicated region
      $region21: #{tpu_custom_call.1} parent=5 // pred_check
        %p128 = pneg %p127
      $region22: #{tpu_custom_call.1} parent=5 // pred_check_branch
        %130 = sbr.rel (%p128) target = $region24
      $region23: #{tpu_custom_call.1} parent=5 // pred_region
        // Predicated region
        $region25: #{tpu_custom_call.1} parent=23 // pred_check
          %p131 = pneg %p32
        $region26: #{tpu_custom_call.1} parent=23 // pred_check_branch
          %133 = sbr.rel (%p131) target = $region28
        $region27: #{tpu_custom_call.1} parent=23 // pred_region
          %s134 = sand.u32 %s22, 1
          %s135 = scalar_lea.sflag [#allocation3], %s134
          %s136 = sand.u32 %s22, 1
          %s137 = smul.addr %s136, 168
          %s138 = scalar_lea.vmem [#allocation2], %s137
          %s139 = smul.u32 3, %s12
          %141 = vsyncadd %s135, 0
          %s142 = smul.addr %s139, 7
          %s143 = smul.addr %s142, 8
          %s144 = scalar_lea.hbm %s0, %s143
          %s145 = sshll.u32 %s144, 4
          %s146 = int_to_ptr.hbm [resolvable:$true] %s145
          %s147 = sshll.u32 %s138, 4
          %s148 = int_to_ptr.vmem [resolvable:$true] %s147
          %153 = dma.hbm_to_vmem [thread:$0]  %s146, 2688, %s148, %s135, 128, 128, 8
        $region28: #{tpu_custom_call.1} parent=23 // pred_fallthru
          _
      $region24: #{tpu_custom_call.1} parent=5 // pred_fallthru
        _
      %p154 = scmp.le.s32.totalorder 1, %s12
      %p155 = scmp.lt.s32.totalorder %s12, 3
      %p156 = pnand %p154, %p155
      %p157 = pneg %p156
      // Predicated region
      $region29: #{tpu_custom_call.1} parent=5 // pred_check
        _
      $region30: #{tpu_custom_call.1} parent=5 // pred_check_branch
        %159 = sbr.rel (%p156) target = $region32
      $region31: #{tpu_custom_call.1} parent=5 // pred_region
        %s160 = ssub.s32 %s12, 1
        %s161 = sand.u32 %s25, 1
        %s162 = scalar_lea.sflag [#allocation3], %s161
        %s163 = sand.u32 %s25, 1
        %s164 = smul.addr %s163, 168
        %s165 = scalar_lea.vmem [#allocation2], %s164
        // Predicated region
        $region33: #{tpu_custom_call.1} parent=31 // pred_check
          %p166 = pneg %p38
        $region34: #{tpu_custom_call.1} parent=31 // pred_check_branch
          %168 = sbr.rel (%p166) target = $region36
        $region35: #{tpu_custom_call.1} parent=31 // pred_region
          %170 = dma.done %s162, 2688
        $region36: #{tpu_custom_call.1} parent=31 // pred_fallthru
          _
        %s171 = sand.u32 %s25, 1
        %s172 = scalar_lea.sflag [#allocation3], %s171
        %s173 = sand.u32 %s25, 1
        %s174 = smul.addr %s173, 168
        %s175 = scalar_lea.vmem [#allocation2], %s174
        %p176 = pneg %p38
        %p177 = pneg %p35
        %p178 = pneg %p59
        %p179 = pneg %p56
        %p180 = pneg %p80
        %p181 = pneg %p77
        %p182 = pneg %p106
        %p183 = pneg %p103
        %p184 = scmp.lt.s32.totalorder %s17, 1
        %s185 = scalar_select %p184, %s17, 1
        %s186 = smul.addr %s185, 9
        %s187 = smul.addr %s186, 8
        %s188 = scalar_lea.vmem %s3, %s187
        %s189 = smul.u32 3, %s17
        %p190 = scmp.lt.s32.totalorder %s17, 1
        %s191 = scalar_select %p190, %s17, 1
        %s192 = smul.addr %s191, 9
        %s193 = smul.addr %s192, 8
        %s194 = scalar_lea.vmem %s3, %s193
        %v195 = vld [vmem:[%s1] sm:$0xff]
        %v196 = vld [vmem:[%s1 + $0x8] sm:$0xff]
        %v197 = vld [vmem:[%s1 + $0x10] sm:$0xff]
        %v198 = vld [vmem:[%s1 + $0x18] sm:$0xff]
        %v199 = vld [vmem:[%s1 + $0x20] sm:$0xff]
        %v200 = vld [vmem:[%s1 + $0x28] sm:$0xff]
        %v201 = vld [vmem:[%s1 + $0x30] sm:$0xff]
        %v202 = vld [vmem:[%s2] sm:$0xff]
        %v203 = vlaneseq
        %v204 = vshrl.u32 %v203, 7
        %v205 = vadd.s32 %v204, 8
        %v206 = vadd.s32 %v204, 16
        %v207 = vadd.s32 %v204, 24
        %v208 = vadd.s32 %v204, 32
        %v209 = vadd.s32 %v204, 40
        %v210 = vadd.s32 %v204, 48
        %v211 = vlaneseq
        %v212 = vand.u32 %v211, 127
        %vm213 = vcmp.eq.s32.totalorder %v204, 0
        %vm214 = vcmp.eq.s32.totalorder %v205, 0
        %vm215 = vcmp.eq.s32.totalorder %v206, 0
        %vm216 = vcmp.eq.s32.totalorder %v207, 0
        %vm217 = vcmp.eq.s32.totalorder %v208, 0
        %vm218 = vcmp.eq.s32.totalorder %v209, 0
        %vm219 = vcmp.eq.s32.totalorder %v210, 0
        %vm220 = vcmp.eq.s32.totalorder %v204, 55
        %vm221 = vcmp.eq.s32.totalorder %v205, 55
        %vm222 = vcmp.eq.s32.totalorder %v206, 55
        %vm223 = vcmp.eq.s32.totalorder %v207, 55
        %vm224 = vcmp.eq.s32.totalorder %v208, 55
        %vm225 = vcmp.eq.s32.totalorder %v209, 55
        %vm226 = vcmp.eq.s32.totalorder %v210, 55
        %vm227 = vcmp.eq.s32.totalorder %v212, 0
        %vm228 = vcmp.eq.s32.totalorder %v212, 55
        %vm229 = vmor %vm213, %vm220
        %vm230 = vmor %vm214, %vm221
        %vm231 = vmor %vm215, %vm222
        %vm232 = vmor %vm216, %vm223
        %vm233 = vmor %vm217, %vm224
        %vm234 = vmor %vm218, %vm225
        %vm235 = vmor %vm219, %vm226
        %vm236 = vmor %vm227, %vm228
        %v237 = vld [vmem:[%s165] sm:$0xff]
        %v238 = vld [vmem:[%s165 + $0x8] sm:$0xff]
        %v239 = vld [vmem:[%s165 + $0x10] sm:$0xff]
        %v240 = vld [vmem:[%s165 + $0x18] sm:$0xff]
        %v241 = vld [vmem:[%s165 + $0x20] sm:$0xff]
        %v242 = vld [vmem:[%s165 + $0x28] sm:$0xff]
        %v243 = vld [vmem:[%s165 + $0x30] sm:$0xff]
        %vm244 = vcmask 1048000
        %245 = vrot.lane.b32.xlu0 %v237, 56
        %v246 = vpop.permute.xlu0 %245
        %v247 = vsel %vm244, %v246, %v237
        %248 = vrot.lane.b32.xlu0 %v238, 56
        %v249 = vpop.permute.xlu0 %248
        %v250 = vsel %vm244, %v249, %v238
        %251 = vrot.lane.b32.xlu0 %v239, 56
        %v252 = vpop.permute.xlu0 %251
        %v253 = vsel %vm244, %v252, %v239
        %254 = vrot.lane.b32.xlu0 %v240, 56
        %v255 = vpop.permute.xlu0 %254
        %v256 = vsel %vm244, %v255, %v240
        %257 = vrot.lane.b32.xlu0 %v241, 56
        %v258 = vpop.permute.xlu0 %257
        %v259 = vsel %vm244, %v258, %v241
        %260 = vrot.lane.b32.xlu0 %v242, 56
        %v261 = vpop.permute.xlu0 %260
        %v262 = vsel %vm244, %v261, %v242
        %263 = vrot.lane.b32.xlu0 %v243, 56
        %v264 = vpop.permute.xlu0 %263
        %v265 = vsel %vm244, %v264, %v243
        %266 = vrot.lane.b32.xlu0 %v247, 56
        %v267 = vpop.permute.xlu0 %266
        %268 = vrot.lane.b32.xlu0 %v250, 56
        %v269 = vpop.permute.xlu0 %268
        %270 = vrot.lane.b32.xlu0 %v253, 56
        %v271 = vpop.permute.xlu0 %270
        %272 = vrot.lane.b32.xlu0 %v256, 56
        %v273 = vpop.permute.xlu0 %272
        %274 = vrot.lane.b32.xlu0 %v259, 56
        %v275 = vpop.permute.xlu0 %274
        %276 = vrot.lane.b32.xlu0 %v262, 56
        %v277 = vpop.permute.xlu0 %276
        %278 = vrot.lane.b32.xlu0 %v265, 56
        %v279 = vpop.permute.xlu0 %278
        %v280 = vsel %vm244, %v267, %v237
        %v281 = vsel %vm244, %v269, %v238
        %v282 = vsel %vm244, %v271, %v239
        %v283 = vsel %vm244, %v273, %v240
        %v284 = vsel %vm244, %v275, %v241
        %v285 = vsel %vm244, %v277, %v242
        %v286 = vsel %vm244, %v279, %v243
        %294 = vrot.lane.b32.xlu0 %v280, 54
        %v295 = vpop.permute.xlu0 %294
        %296 = vrot.lane.b32.xlu0 %v281, 54
        %v297 = vpop.permute.xlu0 %296
        %298 = vrot.lane.b32.xlu0 %v282, 54
        %v299 = vpop.permute.xlu0 %298
        %300 = vrot.lane.b32.xlu0 %v283, 54
        %v301 = vpop.permute.xlu0 %300
        %302 = vrot.lane.b32.xlu0 %v284, 54
        %v303 = vpop.permute.xlu0 %302
        %304 = vrot.lane.b32.xlu0 %v285, 54
        %v305 = vpop.permute.xlu0 %304
        %306 = vrot.lane.b32.xlu0 %v286, 54
        %v307 = vpop.permute.xlu0 %306
        %v315 = vsub.f32 %v280, %v295
        %v316 = vsub.f32 %v281, %v297
        %v317 = vsub.f32 %v282, %v299
        %v318 = vsub.f32 %v283, %v301
        %v319 = vsub.f32 %v284, %v303
        %v320 = vsub.f32 %v285, %v305
        %v321 = vsub.f32 %v286, %v307
        %329 = vrot.lane.b32.xlu0 %v315, 73
        %v330 = vpop.permute.xlu0 %329
        %331 = vrot.lane.b32.xlu0 %v316, 73
        %v332 = vpop.permute.xlu0 %331
        %333 = vrot.lane.b32.xlu0 %v317, 73
        %v334 = vpop.permute.xlu0 %333
        %335 = vrot.lane.b32.xlu0 %v318, 73
        %v336 = vpop.permute.xlu0 %335
        %337 = vrot.lane.b32.xlu0 %v319, 73
        %v338 = vpop.permute.xlu0 %337
        %339 = vrot.lane.b32.xlu0 %v320, 73
        %v340 = vpop.permute.xlu0 %339
        %341 = vrot.lane.b32.xlu0 %v321, 73
        %v342 = vpop.permute.xlu0 %341
        %v350 = vsel %vm236, 0.0, %v330
        %v351 = vsel %vm236, 0.0, %v332
        %v352 = vsel %vm236, 0.0, %v334
        %v353 = vsel %vm236, 0.0, %v336
        %v354 = vsel %vm236, 0.0, %v338
        %v355 = vsel %vm236, 0.0, %v340
        %v356 = vsel %vm236, 0.0, %v342
        %v357 = vrot.slane %v237, 7
        %v358 = vrot.slane %v238, 7
        %v359 = vrot.slane %v239, 7
        %v360 = vrot.slane %v240, 7
        %v361 = vrot.slane %v241, 7
        %v362 = vrot.slane %v242, 7
        %v363 = vrot.slane %v243, 7
        %vm364 = vcmp.lt.s32.totalorder %v204, 1
        %v365 = vsel %vm364, %v362, %v363
        %v366 = vsel %vm364, %v361, %v362
        %v367 = vsel %vm364, %v360, %v361
        %v368 = vsel %vm364, %v359, %v360
        %v369 = vsel %vm364, %v358, %v359
        %v370 = vsel %vm364, %v357, %v358
        %v371 = vsel %vm364, %v363, %v357
        %v372 = vrot.slane %v237, 1
        %v373 = vrot.slane %v238, 1
        %v374 = vrot.slane %v239, 1
        %v375 = vrot.slane %v240, 1
        %v376 = vrot.slane %v241, 1
        %v377 = vrot.slane %v242, 1
        %v378 = vrot.slane %v243, 1
        %vm379 = vcmp.lt.s32.totalorder %v204, 7
        %v380 = vsel %vm379, %v377, %v378
        %v381 = vsel %vm379, %v376, %v377
        %v382 = vsel %vm379, %v375, %v376
        %v383 = vsel %vm379, %v374, %v375
        %v384 = vsel %vm379, %v373, %v374
        %v385 = vsel %vm379, %v372, %v373
        %v386 = vsel %vm379, %v378, %v372
        %v387 = vsub.f32 %v371, %v385
        %v388 = vsub.f32 %v370, %v384
        %v389 = vsub.f32 %v369, %v383
        %v390 = vsub.f32 %v368, %v382
        %v391 = vsub.f32 %v367, %v381
        %v392 = vsub.f32 %v366, %v380
        %v393 = vsub.f32 %v365, %v386
        %v394 = vsel %vm229, 0.0, %v387
        %v395 = vsel %vm230, 0.0, %v388
        %v396 = vsel %vm231, 0.0, %v389
        %v397 = vsel %vm232, 0.0, %v390
        %v398 = vsel %vm233, 0.0, %v391
        %v399 = vsel %vm234, 0.0, %v392
        %v400 = vsel %vm235, 0.0, %v393
        %v401 = vrot.slane %v350, 7
        %v402 = vrot.slane %v351, 7
        %v403 = vrot.slane %v352, 7
        %v404 = vrot.slane %v353, 7
        %v405 = vrot.slane %v354, 7
        %v406 = vrot.slane %v355, 7
        %v407 = vrot.slane %v356, 7
        %v408 = vsel %vm364, %v406, %v407
        %v409 = vsel %vm364, %v405, %v406
        %v410 = vsel %vm364, %v404, %v405
        %v411 = vsel %vm364, %v403, %v404
        %v412 = vsel %vm364, %v402, %v403
        %v413 = vsel %vm364, %v401, %v402
        %v414 = vsel %vm364, %v407, %v401
        %v415 = vmul.f32 %v350, 2.0
        %v416 = vmul.f32 %v351, 2.0
        %v417 = vmul.f32 %v352, 2.0
        %v418 = vmul.f32 %v353, 2.0
        %v419 = vmul.f32 %v354, 2.0
        %v420 = vmul.f32 %v355, 2.0
        %v421 = vmul.f32 %v356, 2.0
        %v422 = vadd.f32 %v414, %v415
        %v423 = vadd.f32 %v413, %v416
        %v424 = vadd.f32 %v412, %v417
        %v425 = vadd.f32 %v411, %v418
        %v426 = vadd.f32 %v410, %v419
        %v427 = vadd.f32 %v409, %v420
        %v428 = vadd.f32 %v408, %v421
        %v429 = vrot.slane %v350, 1
        %v430 = vrot.slane %v351, 1
        %v431 = vrot.slane %v352, 1
        %v432 = vrot.slane %v353, 1
        %v433 = vrot.slane %v354, 1
        %v434 = vrot.slane %v355, 1
        %v435 = vrot.slane %v356, 1
        %v436 = vsel %vm379, %v434, %v435
        %v437 = vsel %vm379, %v433, %v434
        %v438 = vsel %vm379, %v432, %v433
        %v439 = vsel %vm379, %v431, %v432
        %v440 = vsel %vm379, %v430, %v431
        %v441 = vsel %vm379, %v429, %v430
        %v442 = vsel %vm379, %v435, %v429
        %v443 = vadd.f32 %v422, %v441
        %v444 = vadd.f32 %v423, %v440
        %v445 = vadd.f32 %v424, %v439
        %v446 = vadd.f32 %v425, %v438
        %v447 = vadd.f32 %v426, %v437
        %v448 = vadd.f32 %v427, %v436
        %v449 = vadd.f32 %v428, %v442
        %v451 = vrot.slane %v356, 6
        %v453 = vsub.f32 %v350, %v451
        %v455 = vrot.slane %v350, 2
        %v457 = vsub.f32 %v356, %v455
        %v458 = vperm.slane %v457, 6
        %v459 = vsel %vm220, %v458, 0.0
        %v460 = vsel %vm221, %v458, 0.0
        %v461 = vsel %vm222, %v458, 0.0
        %v462 = vsel %vm223, %v458, 0.0
        %v463 = vsel %vm224, %v458, 0.0
        %v464 = vsel %vm225, %v458, 0.0
        %v465 = vsel %vm226, %v458, 0.0
        %v466 = vperm.slane %v453, 1
        %v467 = vsel %vm213, %v466, %v459
        %v468 = vsel %vm214, %v466, %v460
        %v469 = vsel %vm215, %v466, %v461
        %v470 = vsel %vm216, %v466, %v462
        %v471 = vsel %vm217, %v466, %v463
        %v472 = vsel %vm218, %v466, %v464
        %v473 = vsel %vm219, %v466, %v465
        %v474 = vadd.f32 %v443, %v467
        %v475 = vadd.f32 %v444, %v468
        %v476 = vadd.f32 %v445, %v469
        %v477 = vadd.f32 %v446, %v470
        %v478 = vadd.f32 %v447, %v471
        %v479 = vadd.f32 %v448, %v472
        %v480 = vadd.f32 %v449, %v473
        %481 = vrot.lane.b32.xlu0 %v394, 56
        %v482 = vpop.permute.xlu0 %481
        %v483 = vsel %vm244, %v482, %v394
        %484 = vrot.lane.b32.xlu0 %v395, 56
        %v485 = vpop.permute.xlu0 %484
        %v486 = vsel %vm244, %v485, %v395
        %487 = vrot.lane.b32.xlu0 %v396, 56
        %v488 = vpop.permute.xlu0 %487
        %v489 = vsel %vm244, %v488, %v396
        %490 = vrot.lane.b32.xlu0 %v397, 56
        %v491 = vpop.permute.xlu0 %490
        %v492 = vsel %vm244, %v491, %v397
        %493 = vrot.lane.b32.xlu0 %v398, 56
        %v494 = vpop.permute.xlu0 %493
        %v495 = vsel %vm244, %v494, %v398
        %496 = vrot.lane.b32.xlu0 %v399, 56
        %v497 = vpop.permute.xlu0 %496
        %v498 = vsel %vm244, %v497, %v399
        %499 = vrot.lane.b32.xlu0 %v400, 56
        %v500 = vpop.permute.xlu0 %499
        %v501 = vsel %vm244, %v500, %v400
        %502 = vrot.lane.b32.xlu0 %v483, 56
        %v503 = vpop.permute.xlu0 %502
        %504 = vrot.lane.b32.xlu0 %v486, 56
        %v505 = vpop.permute.xlu0 %504
        %506 = vrot.lane.b32.xlu0 %v489, 56
        %v507 = vpop.permute.xlu0 %506
        %508 = vrot.lane.b32.xlu0 %v492, 56
        %v509 = vpop.permute.xlu0 %508
        %510 = vrot.lane.b32.xlu0 %v495, 56
        %v511 = vpop.permute.xlu0 %510
        %512 = vrot.lane.b32.xlu0 %v498, 56
        %v513 = vpop.permute.xlu0 %512
        %514 = vrot.lane.b32.xlu0 %v501, 56
        %v515 = vpop.permute.xlu0 %514
        %v516 = vsel %vm244, %v503, %v394
        %v517 = vsel %vm244, %v505, %v395
        %v518 = vsel %vm244, %v507, %v396
        %v519 = vsel %vm244, %v509, %v397
        %v520 = vsel %vm244, %v511, %v398
        %v521 = vsel %vm244, %v513, %v399
        %v522 = vsel %vm244, %v515, %v400
        %v523 = vmul.f32 %v394, 2.0
        %v524 = vmul.f32 %v395, 2.0
        %v525 = vmul.f32 %v396, 2.0
        %v526 = vmul.f32 %v397, 2.0
        %v527 = vmul.f32 %v398, 2.0
        %v528 = vmul.f32 %v399, 2.0
        %v529 = vmul.f32 %v400, 2.0
        %537 = vrot.lane.b32.xlu0 %v523, 55
        %v538 = vpop.permute.xlu0 %537
        %539 = vrot.lane.b32.xlu0 %v524, 55
        %v540 = vpop.permute.xlu0 %539
        %541 = vrot.lane.b32.xlu0 %v525, 55
        %v542 = vpop.permute.xlu0 %541
        %543 = vrot.lane.b32.xlu0 %v526, 55
        %v544 = vpop.permute.xlu0 %543
        %545 = vrot.lane.b32.xlu0 %v527, 55
        %v546 = vpop.permute.xlu0 %545
        %547 = vrot.lane.b32.xlu0 %v528, 55
        %v548 = vpop.permute.xlu0 %547
        %549 = vrot.lane.b32.xlu0 %v529, 55
        %v550 = vpop.permute.xlu0 %549
        %v558 = vadd.f32 %v516, %v538
        %v559 = vadd.f32 %v517, %v540
        %v560 = vadd.f32 %v518, %v542
        %v561 = vadd.f32 %v519, %v544
        %v562 = vadd.f32 %v520, %v546
        %v563 = vadd.f32 %v521, %v548
        %v564 = vadd.f32 %v522, %v550
        %572 = vrot.lane.b32.xlu0 %v516, 54
        %v573 = vpop.permute.xlu0 %572
        %574 = vrot.lane.b32.xlu0 %v517, 54
        %v575 = vpop.permute.xlu0 %574
        %576 = vrot.lane.b32.xlu0 %v518, 54
        %v577 = vpop.permute.xlu0 %576
        %578 = vrot.lane.b32.xlu0 %v519, 54
        %v579 = vpop.permute.xlu0 %578
        %580 = vrot.lane.b32.xlu0 %v520, 54
        %v581 = vpop.permute.xlu0 %580
        %582 = vrot.lane.b32.xlu0 %v521, 54
        %v583 = vpop.permute.xlu0 %582
        %584 = vrot.lane.b32.xlu0 %v522, 54
        %v585 = vpop.permute.xlu0 %584
        %v593 = vadd.f32 %v558, %v573
        %v594 = vadd.f32 %v559, %v575
        %v595 = vadd.f32 %v560, %v577
        %v596 = vadd.f32 %v561, %v579
        %v597 = vadd.f32 %v562, %v581
        %v598 = vadd.f32 %v563, %v583
        %v599 = vadd.f32 %v564, %v585
        %607 = vrot.lane.b32.xlu0 %v394, 74
        %v608 = vpop.permute.xlu0 %607
        %609 = vrot.lane.b32.xlu0 %v395, 74
        %v610 = vpop.permute.xlu0 %609
        %611 = vrot.lane.b32.xlu0 %v396, 74
        %v612 = vpop.permute.xlu0 %611
        %613 = vrot.lane.b32.xlu0 %v397, 74
        %v614 = vpop.permute.xlu0 %613
        %615 = vrot.lane.b32.xlu0 %v398, 74
        %v616 = vpop.permute.xlu0 %615
        %617 = vrot.lane.b32.xlu0 %v399, 74
        %v618 = vpop.permute.xlu0 %617
        %619 = vrot.lane.b32.xlu0 %v400, 74
        %v620 = vpop.permute.xlu0 %619
        %v628 = vsub.f32 %v394, %v608
        %v629 = vsub.f32 %v395, %v610
        %v630 = vsub.f32 %v396, %v612
        %v631 = vsub.f32 %v397, %v614
        %v632 = vsub.f32 %v398, %v616
        %v633 = vsub.f32 %v399, %v618
        %v634 = vsub.f32 %v400, %v620
        %635 = vrot.lane.b32.xlu0 %v394, 54
        %v636 = vpop.permute.xlu0 %635
        %637 = vrot.lane.b32.xlu0 %v395, 54
        %v638 = vpop.permute.xlu0 %637
        %639 = vrot.lane.b32.xlu0 %v396, 54
        %v640 = vpop.permute.xlu0 %639
        %641 = vrot.lane.b32.xlu0 %v397, 54
        %v642 = vpop.permute.xlu0 %641
        %643 = vrot.lane.b32.xlu0 %v398, 54
        %v644 = vpop.permute.xlu0 %643
        %645 = vrot.lane.b32.xlu0 %v399, 54
        %v646 = vpop.permute.xlu0 %645
        %647 = vrot.lane.b32.xlu0 %v400, 54
        %v648 = vpop.permute.xlu0 %647
        %v656 = vsub.f32 %v394, %v636
        %v657 = vsub.f32 %v395, %v638
        %v658 = vsub.f32 %v396, %v640
        %v659 = vsub.f32 %v397, %v642
        %v660 = vsub.f32 %v398, %v644
        %v661 = vsub.f32 %v399, %v646
        %v662 = vsub.f32 %v400, %v648
        %664 = vset.pattern.permute.xlu0 54
        %665 = vperm.xlu0 %664, %v656
        %v666 = vpop.permute.xlu0 %665
        %669 = vset.pattern.permute.xlu0 54
        %670 = vperm.xlu0 %669, %v657
        %v671 = vpop.permute.xlu0 %670
        %674 = vset.pattern.permute.xlu0 54
        %675 = vperm.xlu0 %674, %v658
        %v676 = vpop.permute.xlu0 %675
        %679 = vset.pattern.permute.xlu0 54
        %680 = vperm.xlu0 %679, %v659
        %v681 = vpop.permute.xlu0 %680
        %684 = vset.pattern.permute.xlu0 54
        %685 = vperm.xlu0 %684, %v660
        %v686 = vpop.permute.xlu0 %685
        %689 = vset.pattern.permute.xlu0 54
        %690 = vperm.xlu0 %689, %v661
        %v691 = vpop.permute.xlu0 %690
        %694 = vset.pattern.permute.xlu0 54
        %695 = vperm.xlu0 %694, %v662
        %v696 = vpop.permute.xlu0 %695
        %v698 = vsel %vm228, %v666, 0.0
        %v699 = vsel %vm228, %v671, 0.0
        %v700 = vsel %vm228, %v676, 0.0
        %v701 = vsel %vm228, %v681, 0.0
        %v702 = vsel %vm228, %v686, 0.0
        %v703 = vsel %vm228, %v691, 0.0
        %v704 = vsel %vm228, %v696, 0.0
        %706 = vset.pattern.permute.xlu0 1
        %707 = vperm.xlu0 %706, %v628
        %v708 = vpop.permute.xlu0 %707
        %711 = vset.pattern.permute.xlu0 1
        %712 = vperm.xlu0 %711, %v629
        %v713 = vpop.permute.xlu0 %712
        %716 = vset.pattern.permute.xlu0 1
        %717 = vperm.xlu0 %716, %v630
        %v718 = vpop.permute.xlu0 %717
        %721 = vset.pattern.permute.xlu0 1
        %722 = vperm.xlu0 %721, %v631
        %v723 = vpop.permute.xlu0 %722
        %726 = vset.pattern.permute.xlu0 1
        %727 = vperm.xlu0 %726, %v632
        %v728 = vpop.permute.xlu0 %727
        %731 = vset.pattern.permute.xlu0 1
        %732 = vperm.xlu0 %731, %v633
        %v733 = vpop.permute.xlu0 %732
        %736 = vset.pattern.permute.xlu0 1
        %737 = vperm.xlu0 %736, %v634
        %v738 = vpop.permute.xlu0 %737
        %v740 = vsel %vm227, %v708, %v698
        %v741 = vsel %vm227, %v713, %v699
        %v742 = vsel %vm227, %v718, %v700
        %v743 = vsel %vm227, %v723, %v701
        %v744 = vsel %vm227, %v728, %v702
        %v745 = vsel %vm227, %v733, %v703
        %v746 = vsel %vm227, %v738, %v704
        %754 = vrot.lane.b32.xlu0 %v740, 55
        %v755 = vpop.permute.xlu0 %754
        %756 = vrot.lane.b32.xlu0 %v741, 55
        %v757 = vpop.permute.xlu0 %756
        %758 = vrot.lane.b32.xlu0 %v742, 55
        %v759 = vpop.permute.xlu0 %758
        %760 = vrot.lane.b32.xlu0 %v743, 55
        %v761 = vpop.permute.xlu0 %760
        %762 = vrot.lane.b32.xlu0 %v744, 55
        %v763 = vpop.permute.xlu0 %762
        %764 = vrot.lane.b32.xlu0 %v745, 55
        %v765 = vpop.permute.xlu0 %764
        %766 = vrot.lane.b32.xlu0 %v746, 55
        %v767 = vpop.permute.xlu0 %766
        %v775 = vadd.f32 %v593, %v755
        %v776 = vadd.f32 %v594, %v757
        %v777 = vadd.f32 %v595, %v759
        %v778 = vadd.f32 %v596, %v761
        %v779 = vadd.f32 %v597, %v763
        %v780 = vadd.f32 %v598, %v765
        %v781 = vadd.f32 %v599, %v767
        %v782 = vmul.f32 %v474, %v474
        %v783 = vmul.f32 %v475, %v475
        %v784 = vmul.f32 %v476, %v476
        %v785 = vmul.f32 %v477, %v477
        %v786 = vmul.f32 %v478, %v478
        %v787 = vmul.f32 %v479, %v479
        %v788 = vmul.f32 %v480, %v480
        %v789 = vmul.f32 %v775, %v775
        %v790 = vmul.f32 %v776, %v776
        %v791 = vmul.f32 %v777, %v777
        %v792 = vmul.f32 %v778, %v778
        %v793 = vmul.f32 %v779, %v779
        %v794 = vmul.f32 %v780, %v780
        %v795 = vmul.f32 %v781, %v781
        %803 = vrot.lane.b32.xlu0 %v789, 73
        %v804 = vpop.permute.xlu0 %803
        %805 = vrot.lane.b32.xlu0 %v790, 73
        %v806 = vpop.permute.xlu0 %805
        %807 = vrot.lane.b32.xlu0 %v791, 73
        %v808 = vpop.permute.xlu0 %807
        %809 = vrot.lane.b32.xlu0 %v792, 73
        %v810 = vpop.permute.xlu0 %809
        %811 = vrot.lane.b32.xlu0 %v793, 73
        %v812 = vpop.permute.xlu0 %811
        %813 = vrot.lane.b32.xlu0 %v794, 73
        %v814 = vpop.permute.xlu0 %813
        %815 = vrot.lane.b32.xlu0 %v795, 73
        %v816 = vpop.permute.xlu0 %815
        %v824 = vadd.f32 %v782, %v804
        %v825 = vadd.f32 %v783, %v806
        %v826 = vadd.f32 %v784, %v808
        %v827 = vadd.f32 %v785, %v810
        %v828 = vadd.f32 %v786, %v812
        %v829 = vadd.f32 %v787, %v814
        %v830 = vadd.f32 %v788, %v816
        %v831 = vrsqrt.pop %v824
        %v832 = vmul.f32 %v831, %v824
        %v833 = vmul.f32 %v832, %v831
        %v834 = vmul.f32 0.5, %v833
        %v835 = vsub.f32 1.5, %v834
        %v836 = vmul.f32 %v831, %v835
        %v837 = vmul.f32 %v824, %v836
        %vm838 = vcmp.eq.f32.partialorder %v824, inf
        %v839 = vsel %vm838, %v824, %v837
        %vm840 = vcmp.eq.f32.partialorder %v824, 0.0
        %v841 = vand.u32 %v824, 2147483648
        %v842 = vsel %vm840, %v841, %v839
        %v843 = vrsqrt.pop %v825
        %v844 = vmul.f32 %v843, %v825
        %v845 = vmul.f32 %v844, %v843
        %v846 = vmul.f32 0.5, %v845
        %v847 = vsub.f32 1.5, %v846
        %v848 = vmul.f32 %v843, %v847
        %v849 = vmul.f32 %v825, %v848
        %vm850 = vcmp.eq.f32.partialorder %v825, inf
        %v851 = vsel %vm850, %v825, %v849
        %vm852 = vcmp.eq.f32.partialorder %v825, 0.0
        %v853 = vand.u32 %v825, 2147483648
        %v854 = vsel %vm852, %v853, %v851
        %v855 = vrsqrt.pop %v826
        %v856 = vmul.f32 %v855, %v826
        %v857 = vmul.f32 %v856, %v855
        %v858 = vmul.f32 0.5, %v857
        %v859 = vsub.f32 1.5, %v858
        %v860 = vmul.f32 %v855, %v859
        %v861 = vmul.f32 %v826, %v860
        %vm862 = vcmp.eq.f32.partialorder %v826, inf
        %v863 = vsel %vm862, %v826, %v861
        %vm864 = vcmp.eq.f32.partialorder %v826, 0.0
        %v865 = vand.u32 %v826, 2147483648
        %v866 = vsel %vm864, %v865, %v863
        %v867 = vrsqrt.pop %v827
        %v868 = vmul.f32 %v867, %v827
        %v869 = vmul.f32 %v868, %v867
        %v870 = vmul.f32 0.5, %v869
        %v871 = vsub.f32 1.5, %v870
        %v872 = vmul.f32 %v867, %v871
        %v873 = vmul.f32 %v827, %v872
        %vm874 = vcmp.eq.f32.partialorder %v827, inf
        %v875 = vsel %vm874, %v827, %v873
        %vm876 = vcmp.eq.f32.partialorder %v827, 0.0
        %v877 = vand.u32 %v827, 2147483648
        %v878 = vsel %vm876, %v877, %v875
        %v879 = vrsqrt.pop %v828
        %v880 = vmul.f32 %v879, %v828
        %v881 = vmul.f32 %v880, %v879
        %v882 = vmul.f32 0.5, %v881
        %v883 = vsub.f32 1.5, %v882
        %v884 = vmul.f32 %v879, %v883
        %v885 = vmul.f32 %v828, %v884
        %vm886 = vcmp.eq.f32.partialorder %v828, inf
        %v887 = vsel %vm886, %v828, %v885
        %vm888 = vcmp.eq.f32.partialorder %v828, 0.0
        %v889 = vand.u32 %v828, 2147483648
        %v890 = vsel %vm888, %v889, %v887
        %v891 = vrsqrt.pop %v829
        %v892 = vmul.f32 %v891, %v829
        %v893 = vmul.f32 %v892, %v891
        %v894 = vmul.f32 0.5, %v893
        %v895 = vsub.f32 1.5, %v894
        %v896 = vmul.f32 %v891, %v895
        %v897 = vmul.f32 %v829, %v896
        %vm898 = vcmp.eq.f32.partialorder %v829, inf
        %v899 = vsel %vm898, %v829, %v897
        %vm900 = vcmp.eq.f32.partialorder %v829, 0.0
        %v901 = vand.u32 %v829, 2147483648
        %v902 = vsel %vm900, %v901, %v899
        %v903 = vrsqrt.pop %v830
        %v904 = vmul.f32 %v903, %v830
        %v905 = vmul.f32 %v904, %v903
        %v906 = vmul.f32 0.5, %v905
        %v907 = vsub.f32 1.5, %v906
        %v908 = vmul.f32 %v903, %v907
        %v909 = vmul.f32 %v830, %v908
        %vm910 = vcmp.eq.f32.partialorder %v830, inf
        %v911 = vsel %vm910, %v830, %v909
        %vm912 = vcmp.eq.f32.partialorder %v830, 0.0
        %v913 = vand.u32 %v830, 2147483648
        %v914 = vsel %vm912, %v913, %v911
        %v915 = vrcp.pop %v474
        %v916 = vrcp.pop %v475
        %v917 = vrcp.pop %v476
        %v918 = vrcp.pop %v477
        %v919 = vrcp.pop %v478
        %v920 = vrcp.pop %v479
        %v921 = vrcp.pop %v480
        %929 = vrot.lane.b32.xlu0 %v915, 55
        %v930 = vpop.permute.xlu0 %929
        %931 = vrot.lane.b32.xlu0 %v916, 55
        %v932 = vpop.permute.xlu0 %931
        %933 = vrot.lane.b32.xlu0 %v917, 55
        %v934 = vpop.permute.xlu0 %933
        %935 = vrot.lane.b32.xlu0 %v918, 55
        %v936 = vpop.permute.xlu0 %935
        %937 = vrot.lane.b32.xlu0 %v919, 55
        %v938 = vpop.permute.xlu0 %937
        %939 = vrot.lane.b32.xlu0 %v920, 55
        %v940 = vpop.permute.xlu0 %939
        %941 = vrot.lane.b32.xlu0 %v921, 55
        %v942 = vpop.permute.xlu0 %941
        %v950 = vmul.f32 %v775, %v930
        %v951 = vmul.f32 %v776, %v932
        %v952 = vmul.f32 %v777, %v934
        %v953 = vmul.f32 %v778, %v936
        %v954 = vmul.f32 %v779, %v938
        %v955 = vmul.f32 %v780, %v940
        %v956 = vmul.f32 %v781, %v942
        %vm957 = vcmp.eq.f32.partialorder %v474, 0.0
        %vm958 = vcmp.eq.f32.partialorder %v475, 0.0
        %vm959 = vcmp.eq.f32.partialorder %v476, 0.0
        %vm960 = vcmp.eq.f32.partialorder %v477, 0.0
        %vm961 = vcmp.eq.f32.partialorder %v478, 0.0
        %vm962 = vcmp.eq.f32.partialorder %v479, 0.0
        %vm963 = vcmp.eq.f32.partialorder %v480, 0.0
        %vm964 = vmxor %vm957, 1
        %vm965 = vmxor %vm958, 1
        %vm966 = vmxor %vm959, 1
        %vm967 = vmxor %vm960, 1
        %vm968 = vmxor %vm961, 1
        %vm969 = vmxor %vm962, 1
        %vm970 = vmxor %vm963, 1
        %vm971 = vcmp.le.f32.partialorder %v950, 2.7474775
        %vm972 = vcmp.le.f32.partialorder %v951, 2.7474775
        %vm973 = vcmp.le.f32.partialorder %v952, 2.7474775
        %vm974 = vcmp.le.f32.partialorder %v953, 2.7474775
        %vm975 = vcmp.le.f32.partialorder %v954, 2.7474775
        %vm976 = vcmp.le.f32.partialorder %v955, 2.7474775
        %vm977 = vcmp.le.f32.partialorder %v956, 2.7474775
        %vm978 = vcmp.le.f32.partialorder %v950, 1.1917536
        %vm979 = vcmp.le.f32.partialorder %v951, 1.1917536
        %vm980 = vcmp.le.f32.partialorder %v952, 1.1917536
        %vm981 = vcmp.le.f32.partialorder %v953, 1.1917536
        %vm982 = vcmp.le.f32.partialorder %v954, 1.1917536
        %vm983 = vcmp.le.f32.partialorder %v955, 1.1917536
        %vm984 = vcmp.le.f32.partialorder %v956, 1.1917536
        %vm985 = vcmp.le.f32.partialorder %v950, 0.57735026
        %vm986 = vcmp.le.f32.partialorder %v951, 0.57735026
        %vm987 = vcmp.le.f32.partialorder %v952, 0.57735026
        %vm988 = vcmp.le.f32.partialorder %v953, 0.57735026
        %vm989 = vcmp.le.f32.partialorder %v954, 0.57735026
        %vm990 = vcmp.le.f32.partialorder %v955, 0.57735026
        %vm991 = vcmp.le.f32.partialorder %v956, 0.57735026
        %vm992 = vcmp.le.f32.partialorder %v950, 0.17632698
        %vm993 = vcmp.le.f32.partialorder %v951, 0.17632698
        %vm994 = vcmp.le.f32.partialorder %v952, 0.17632698
        %vm995 = vcmp.le.f32.partialorder %v953, 0.17632698
        %vm996 = vcmp.le.f32.partialorder %v954, 0.17632698
        %vm997 = vcmp.le.f32.partialorder %v955, 0.17632698
        %vm998 = vcmp.le.f32.partialorder %v956, 0.17632698
        %vm999 = vcmp.le.f32.partialorder %v950, -0.17632698
        %vm1000 = vcmp.le.f32.partialorder %v951, -0.17632698
        %vm1001 = vcmp.le.f32.partialorder %v952, -0.17632698
        %vm1002 = vcmp.le.f32.partialorder %v953, -0.17632698
        %vm1003 = vcmp.le.f32.partialorder %v954, -0.17632698
        %vm1004 = vcmp.le.f32.partialorder %v955, -0.17632698
        %vm1005 = vcmp.le.f32.partialorder %v956, -0.17632698
        %vm1006 = vcmp.le.f32.partialorder %v950, -0.57735026
        %vm1007 = vcmp.le.f32.partialorder %v951, -0.57735026
        %vm1008 = vcmp.le.f32.partialorder %v952, -0.57735026
        %vm1009 = vcmp.le.f32.partialorder %v953, -0.57735026
        %vm1010 = vcmp.le.f32.partialorder %v954, -0.57735026
        %vm1011 = vcmp.le.f32.partialorder %v955, -0.57735026
        %vm1012 = vcmp.le.f32.partialorder %v956, -0.57735026
        %vm1013 = vcmp.le.f32.partialorder %v950, -1.1917536
        %vm1014 = vcmp.le.f32.partialorder %v951, -1.1917536
        %vm1015 = vcmp.le.f32.partialorder %v952, -1.1917536
        %vm1016 = vcmp.le.f32.partialorder %v953, -1.1917536
        %vm1017 = vcmp.le.f32.partialorder %v954, -1.1917536
        %vm1018 = vcmp.le.f32.partialorder %v955, -1.1917536
        %vm1019 = vcmp.le.f32.partialorder %v956, -1.1917536
        %vm1020 = vcmp.le.f32.partialorder %v950, -2.7474775
        %vm1021 = vcmp.le.f32.partialorder %v951, -2.7474775
        %vm1022 = vcmp.le.f32.partialorder %v952, -2.7474775
        %vm1023 = vcmp.le.f32.partialorder %v953, -2.7474775
        %vm1024 = vcmp.le.f32.partialorder %v954, -2.7474775
        %vm1025 = vcmp.le.f32.partialorder %v955, -2.7474775
        %vm1026 = vcmp.le.f32.partialorder %v956, -2.7474775
        %vm1027 = vmxor %vm971, 1
        %vm1028 = vmxor %vm972, 1
        %vm1029 = vmxor %vm973, 1
        %vm1030 = vmxor %vm974, 1
        %vm1031 = vmxor %vm975, 1
        %vm1032 = vmxor %vm976, 1
        %vm1033 = vmxor %vm977, 1
        %v1034 = vsel %vm957, 1, 0
        %v1035 = vsel %vm958, 1, 0
        %v1036 = vsel %vm959, 1, 0
        %v1037 = vsel %vm960, 1, 0
        %v1038 = vsel %vm961, 1, 0
        %v1039 = vsel %vm962, 1, 0
        %v1040 = vsel %vm963, 1, 0
        %1041 = vrot.lane.b32.xlu0 %v1034, 55
        %v1042 = vpop.permute.xlu0 %1041
        %1043 = vrot.lane.b32.xlu0 %v1035, 55
        %v1044 = vpop.permute.xlu0 %1043
        %1045 = vrot.lane.b32.xlu0 %v1036, 55
        %v1046 = vpop.permute.xlu0 %1045
        %1047 = vrot.lane.b32.xlu0 %v1037, 55
        %v1048 = vpop.permute.xlu0 %1047
        %1049 = vrot.lane.b32.xlu0 %v1038, 55
        %v1050 = vpop.permute.xlu0 %1049
        %1051 = vrot.lane.b32.xlu0 %v1039, 55
        %v1052 = vpop.permute.xlu0 %1051
        %1053 = vrot.lane.b32.xlu0 %v1040, 55
        %v1054 = vpop.permute.xlu0 %1053
        %vm1055 = vcmp.ne.s32.totalorder %v1042, 0
        %vm1056 = vcmp.ne.s32.totalorder %v1044, 0
        %vm1057 = vcmp.ne.s32.totalorder %v1046, 0
        %vm1058 = vcmp.ne.s32.totalorder %v1048, 0
        %vm1059 = vcmp.ne.s32.totalorder %v1050, 0
        %vm1060 = vcmp.ne.s32.totalorder %v1052, 0
        %vm1061 = vcmp.ne.s32.totalorder %v1054, 0
        %vm1062 = vmor %vm1027, %vm1055
        %vm1063 = vmor %vm1028, %vm1056
        %vm1064 = vmor %vm1029, %vm1057
        %vm1065 = vmor %vm1030, %vm1058
        %vm1066 = vmor %vm1031, %vm1059
        %vm1067 = vmor %vm1032, %vm1060
        %vm1068 = vmor %vm1033, %vm1061
        %1076 = vrot.lane.b32.xlu0 %v842, 55
        %v1077 = vpop.permute.xlu0 %1076
        %1078 = vrot.lane.b32.xlu0 %v854, 55
        %v1079 = vpop.permute.xlu0 %1078
        %1080 = vrot.lane.b32.xlu0 %v866, 55
        %v1081 = vpop.permute.xlu0 %1080
        %1082 = vrot.lane.b32.xlu0 %v878, 55
        %v1083 = vpop.permute.xlu0 %1082
        %1084 = vrot.lane.b32.xlu0 %v890, 55
        %v1085 = vpop.permute.xlu0 %1084
        %1086 = vrot.lane.b32.xlu0 %v902, 55
        %v1087 = vpop.permute.xlu0 %1086
        %1088 = vrot.lane.b32.xlu0 %v914, 55
        %v1089 = vpop.permute.xlu0 %1088
        %v1097 = vsel %vm1062, %v1077, 0.0
        %v1098 = vsel %vm1063, %v1079, 0.0
        %v1099 = vsel %vm1064, %v1081, 0.0
        %v1100 = vsel %vm1065, %v1083, 0.0
        %v1101 = vsel %vm1066, %v1085, 0.0
        %v1102 = vsel %vm1067, %v1087, 0.0
        %v1103 = vsel %vm1068, %v1089, 0.0
        %1111 = vrot.lane.b32.xlu0 %v1097, 73
        %v1112 = vpop.permute.xlu0 %1111
        %1113 = vrot.lane.b32.xlu0 %v1098, 73
        %v1114 = vpop.permute.xlu0 %1113
        %1115 = vrot.lane.b32.xlu0 %v1099, 73
        %v1116 = vpop.permute.xlu0 %1115
        %1117 = vrot.lane.b32.xlu0 %v1100, 73
        %v1118 = vpop.permute.xlu0 %1117
        %1119 = vrot.lane.b32.xlu0 %v1101, 73
        %v1120 = vpop.permute.xlu0 %1119
        %1121 = vrot.lane.b32.xlu0 %v1102, 73
        %v1122 = vpop.permute.xlu0 %1121
        %1123 = vrot.lane.b32.xlu0 %v1103, 73
        %v1124 = vpop.permute.xlu0 %1123
        %vm1125 = vcmask 457728
        %v1126 = vsel %vm1125, %v1112, 0
        %v1128 = vsel %vm1125, %v1114, 0
        %v1130 = vsel %vm1125, %v1116, 0
        %v1132 = vsel %vm1125, %v1118, 0
        %v1134 = vsel %vm1125, %v1120, 0
        %v1136 = vsel %vm1125, %v1122, 0
        %v1138 = vsel %vm1125, %v1124, 0
        %1140 = vmatpush.msra.mxu0 0.0
        %1141 = vmatpush.msra.mxu0 0.0
        %1142 = vmatpush.msra.mxu0 0.0
        %1143 = vmatpush.msra.mxu0 0.0
        %1144 = vmatpush.msra.mxu0 0.0
        %1145 = vmatpush.msra.mxu0 0.0
        %1146 = vmatpush.msra.mxu0 0.0
        %1147 = vmatpush.msra.mxu0 0.0
        %1148 = vmatpush.msra.mxu0 0.0
        %1149 = vmatpush.msra.mxu0 %v201
        %1150 = vmatpush.msra.mxu0 %v200
        %1151 = vmatpush.msra.mxu0 %v199
        %1152 = vmatpush.msra.mxu0 %v198
        %1153 = vmatpush.msra.mxu0 %v197
        %1154 = vmatpush.msra.mxu0 %v196
        %1155 = vmatpush.msra.mxu0 %v195
        %1156 = vmatmul.f32.gmra.mxu0 %v1126
        %v1157 = vpop.f32.mrf.mxu0
        %v1158 = vadd.f32 0.0, %v1157
        %1159 = vmatmul.f32.gmra.mxu0 %v1128
        %v1160 = vpop.f32.mrf.mxu0
        %v1161 = vadd.f32 0.0, %v1160
        %1162 = vmatmul.f32.gmra.mxu0 %v1130
        %v1163 = vpop.f32.mrf.mxu0
        %v1164 = vadd.f32 0.0, %v1163
        %1165 = vmatmul.f32.gmra.mxu0 %v1132
        %v1166 = vpop.f32.mrf.mxu0
        %v1167 = vadd.f32 0.0, %v1166
        %1168 = vmatmul.f32.gmra.mxu0 %v1134
        %v1169 = vpop.f32.mrf.mxu0
        %v1170 = vadd.f32 0.0, %v1169
        %1171 = vmatmul.f32.gmra.mxu0 %v1136
        %v1172 = vpop.f32.mrf.mxu0
        %v1173 = vadd.f32 0.0, %v1172
        %1174 = vmatmul.f32.gmra.mxu0 %v1138
        %v1175 = vpop.f32.mrf.mxu0
        %v1176 = vadd.f32 0.0, %v1175
        %1177 = vdwg.mxu0
        %v1179 = vsel %vm1125, %v202, 0
        %1181 = vmatpush.msra.mxu0 0.0
        %1182 = vmatpush.msra.mxu0 0.0
        %1183 = vmatpush.msra.mxu0 0.0
        %1184 = vmatpush.msra.mxu0 0.0
        %1185 = vmatpush.msra.mxu0 0.0
        %1186 = vmatpush.msra.mxu0 0.0
        %1187 = vmatpush.msra.mxu0 0.0
        %1188 = vmatpush.msra.mxu0 0.0
        %1189 = vmatpush.msra.mxu0 0.0
        %1190 = vmatpush.msra.mxu0 %v1176
        %1191 = vmatpush.msra.mxu0 %v1173
        %1192 = vmatpush.msra.mxu0 %v1170
        %1193 = vmatpush.msra.mxu0 %v1167
        %1194 = vmatpush.msra.mxu0 %v1164
        %1195 = vmatpush.msra.mxu0 %v1161
        %1196 = vmatpush.msra.mxu0 %v1158
        %1197 = vmatmul.f32.gmra.mxu0 %v1179
        %v1198 = vpop.f32.mrf.mxu0
        %v1199 = vadd.f32 0.0, %v1198
        %1200 = vdwg.mxu0
        %v1201 = vmul.f32 %v1199, %v1199
        %vm1202 = vmxor %vm978, 1
        %vm1203 = vmxor %vm979, 1
        %vm1204 = vmxor %vm980, 1
        %vm1205 = vmxor %vm981, 1
        %vm1206 = vmxor %vm982, 1
        %vm1207 = vmxor %vm983, 1
        %vm1208 = vmxor %vm984, 1
        %vm1209 = vmand %vm971, %vm1202
        %vm1210 = vmand %vm972, %vm1203
        %vm1211 = vmand %vm973, %vm1204
        %vm1212 = vmand %vm974, %vm1205
        %vm1213 = vmand %vm975, %vm1206
        %vm1214 = vmand %vm976, %vm1207
        %vm1215 = vmand %vm977, %vm1208
        %v1216 = vsel %vm964, 1, 0
        %v1217 = vsel %vm965, 1, 0
        %v1218 = vsel %vm966, 1, 0
        %v1219 = vsel %vm967, 1, 0
        %v1220 = vsel %vm968, 1, 0
        %v1221 = vsel %vm969, 1, 0
        %v1222 = vsel %vm970, 1, 0
        %1223 = vrot.lane.b32.xlu0 %v1216, 55
        %v1224 = vpop.permute.xlu0 %1223
        %1225 = vrot.lane.b32.xlu0 %v1217, 55
        %v1226 = vpop.permute.xlu0 %1225
        %1227 = vrot.lane.b32.xlu0 %v1218, 55
        %v1228 = vpop.permute.xlu0 %1227
        %1229 = vrot.lane.b32.xlu0 %v1219, 55
        %v1230 = vpop.permute.xlu0 %1229
        %1231 = vrot.lane.b32.xlu0 %v1220, 55
        %v1232 = vpop.permute.xlu0 %1231
        %1233 = vrot.lane.b32.xlu0 %v1221, 55
        %v1234 = vpop.permute.xlu0 %1233
        %1235 = vrot.lane.b32.xlu0 %v1222, 55
        %v1236 = vpop.permute.xlu0 %1235
        %vm1237 = vcmp.ne.s32.totalorder %v1224, 0
        %vm1238 = vcmp.ne.s32.totalorder %v1226, 0
        %vm1239 = vcmp.ne.s32.totalorder %v1228, 0
        %vm1240 = vcmp.ne.s32.totalorder %v1230, 0
        %vm1241 = vcmp.ne.s32.totalorder %v1232, 0
        %vm1242 = vcmp.ne.s32.totalorder %v1234, 0
        %vm1243 = vcmp.ne.s32.totalorder %v1236, 0
        %vm1244 = vmand %vm1209, %vm1237
        %vm1245 = vmand %vm1210, %vm1238
        %vm1246 = vmand %vm1211, %vm1239
        %vm1247 = vmand %vm1212, %vm1240
        %vm1248 = vmand %vm1213, %vm1241
        %vm1249 = vmand %vm1214, %vm1242
        %vm1250 = vmand %vm1215, %vm1243
        %v1251 = vsel %vm1244, %v1077, 0.0
        %v1252 = vsel %vm1245, %v1079, 0.0
        %v1253 = vsel %vm1246, %v1081, 0.0
        %v1254 = vsel %vm1247, %v1083, 0.0
        %v1255 = vsel %vm1248, %v1085, 0.0
        %v1256 = vsel %vm1249, %v1087, 0.0
        %v1257 = vsel %vm1250, %v1089, 0.0
        %1265 = vrot.lane.b32.xlu0 %v1251, 73
        %v1266 = vpop.permute.xlu0 %1265
        %1267 = vrot.lane.b32.xlu0 %v1252, 73
        %v1268 = vpop.permute.xlu0 %1267
        %1269 = vrot.lane.b32.xlu0 %v1253, 73
        %v1270 = vpop.permute.xlu0 %1269
        %1271 = vrot.lane.b32.xlu0 %v1254, 73
        %v1272 = vpop.permute.xlu0 %1271
        %1273 = vrot.lane.b32.xlu0 %v1255, 73
        %v1274 = vpop.permute.xlu0 %1273
        %1275 = vrot.lane.b32.xlu0 %v1256, 73
        %v1276 = vpop.permute.xlu0 %1275
        %1277 = vrot.lane.b32.xlu0 %v1257, 73
        %v1278 = vpop.permute.xlu0 %1277
        %v1279 = vsel %vm1125, %v1266, 0
        %v1281 = vsel %vm1125, %v1268, 0
        %v1283 = vsel %vm1125, %v1270, 0
        %v1285 = vsel %vm1125, %v1272, 0
        %v1287 = vsel %vm1125, %v1274, 0
        %v1289 = vsel %vm1125, %v1276, 0
        %v1291 = vsel %vm1125, %v1278, 0
        %1293 = vmatpush.msra.mxu0 0.0
        %1294 = vmatpush.msra.mxu0 0.0
        %1295 = vmatpush.msra.mxu0 0.0
        %1296 = vmatpush.msra.mxu0 0.0
        %1297 = vmatpush.msra.mxu0 0.0
        %1298 = vmatpush.msra.mxu0 0.0
        %1299 = vmatpush.msra.mxu0 0.0
        %1300 = vmatpush.msra.mxu0 0.0
        %1301 = vmatpush.msra.mxu0 0.0
        %1302 = vmatpush.msra.mxu0 %v201
        %1303 = vmatpush.msra.mxu0 %v200
        %1304 = vmatpush.msra.mxu0 %v199
        %1305 = vmatpush.msra.mxu0 %v198
        %1306 = vmatpush.msra.mxu0 %v197
        %1307 = vmatpush.msra.mxu0 %v196
        %1308 = vmatpush.msra.mxu0 %v195
        %1309 = vmatmul.f32.gmra.mxu0 %v1279
        %v1310 = vpop.f32.mrf.mxu0
        %v1311 = vadd.f32 0.0, %v1310
        %1312 = vmatmul.f32.gmra.mxu0 %v1281
        %v1313 = vpop.f32.mrf.mxu0
        %v1314 = vadd.f32 0.0, %v1313
        %1315 = vmatmul.f32.gmra.mxu0 %v1283
        %v1316 = vpop.f32.mrf.mxu0
        %v1317 = vadd.f32 0.0, %v1316
        %1318 = vmatmul.f32.gmra.mxu0 %v1285
        %v1319 = vpop.f32.mrf.mxu0
        %v1320 = vadd.f32 0.0, %v1319
        %1321 = vmatmul.f32.gmra.mxu0 %v1287
        %v1322 = vpop.f32.mrf.mxu0
        %v1323 = vadd.f32 0.0, %v1322
        %1324 = vmatmul.f32.gmra.mxu0 %v1289
        %v1325 = vpop.f32.mrf.mxu0
        %v1326 = vadd.f32 0.0, %v1325
        %1327 = vmatmul.f32.gmra.mxu0 %v1291
        %v1328 = vpop.f32.mrf.mxu0
        %v1329 = vadd.f32 0.0, %v1328
        %1330 = vdwg.mxu0
        %1331 = vmatpush.msra.mxu0 0.0
        %1332 = vmatpush.msra.mxu0 0.0
        %1333 = vmatpush.msra.mxu0 0.0
        %1334 = vmatpush.msra.mxu0 0.0
        %1335 = vmatpush.msra.mxu0 0.0
        %1336 = vmatpush.msra.mxu0 0.0
        %1337 = vmatpush.msra.mxu0 0.0
        %1338 = vmatpush.msra.mxu0 0.0
        %1339 = vmatpush.msra.mxu0 0.0
        %1340 = vmatpush.msra.mxu0 %v1329
        %1341 = vmatpush.msra.mxu0 %v1326
        %1342 = vmatpush.msra.mxu0 %v1323
        %1343 = vmatpush.msra.mxu0 %v1320
        %1344 = vmatpush.msra.mxu0 %v1317
        %1345 = vmatpush.msra.mxu0 %v1314
        %1346 = vmatpush.msra.mxu0 %v1311
        %1347 = vmatmul.f32.gmra.mxu0 %v1179
        %v1348 = vpop.f32.mrf.mxu0
        %v1349 = vadd.f32 0.0, %v1348
        %1350 = vdwg.mxu0
        %v1351 = vmul.f32 %v1349, %v1349
        %v1352 = vadd.f32 %v1201, %v1351
        %vm1353 = vmxor %vm985, 1
        %vm1354 = vmxor %vm986, 1
        %vm1355 = vmxor %vm987, 1
        %vm1356 = vmxor %vm988, 1
        %vm1357 = vmxor %vm989, 1
        %vm1358 = vmxor %vm990, 1
        %vm1359 = vmxor %vm991, 1
        %vm1360 = vmand %vm978, %vm1353
        %vm1361 = vmand %vm979, %vm1354
        %vm1362 = vmand %vm980, %vm1355
        %vm1363 = vmand %vm981, %vm1356
        %vm1364 = vmand %vm982, %vm1357
        %vm1365 = vmand %vm983, %vm1358
        %vm1366 = vmand %vm984, %vm1359
        %vm1367 = vmand %vm1360, %vm1237
        %vm1368 = vmand %vm1361, %vm1238
        %vm1369 = vmand %vm1362, %vm1239
        %vm1370 = vmand %vm1363, %vm1240
        %vm1371 = vmand %vm1364, %vm1241
        %vm1372 = vmand %vm1365, %vm1242
        %vm1373 = vmand %vm1366, %vm1243
        %v1374 = vsel %vm1367, %v1077, 0.0
        %v1375 = vsel %vm1368, %v1079, 0.0
        %v1376 = vsel %vm1369, %v1081, 0.0
        %v1377 = vsel %vm1370, %v1083, 0.0
        %v1378 = vsel %vm1371, %v1085, 0.0
        %v1379 = vsel %vm1372, %v1087, 0.0
        %v1380 = vsel %vm1373, %v1089, 0.0
        %1388 = vrot.lane.b32.xlu0 %v1374, 73
        %v1389 = vpop.permute.xlu0 %1388
        %1390 = vrot.lane.b32.xlu0 %v1375, 73
        %v1391 = vpop.permute.xlu0 %1390
        %1392 = vrot.lane.b32.xlu0 %v1376, 73
        %v1393 = vpop.permute.xlu0 %1392
        %1394 = vrot.lane.b32.xlu0 %v1377, 73
        %v1395 = vpop.permute.xlu0 %1394
        %1396 = vrot.lane.b32.xlu0 %v1378, 73
        %v1397 = vpop.permute.xlu0 %1396
        %1398 = vrot.lane.b32.xlu0 %v1379, 73
        %v1399 = vpop.permute.xlu0 %1398
        %1400 = vrot.lane.b32.xlu0 %v1380, 73
        %v1401 = vpop.permute.xlu0 %1400
        %v1402 = vsel %vm1125, %v1389, 0
        %v1404 = vsel %vm1125, %v1391, 0
        %v1406 = vsel %vm1125, %v1393, 0
        %v1408 = vsel %vm1125, %v1395, 0
        %v1410 = vsel %vm1125, %v1397, 0
        %v1412 = vsel %vm1125, %v1399, 0
        %v1414 = vsel %vm1125, %v1401, 0
        %1416 = vmatpush.msra.mxu0 0.0
        %1417 = vmatpush.msra.mxu0 0.0
        %1418 = vmatpush.msra.mxu0 0.0
        %1419 = vmatpush.msra.mxu0 0.0
        %1420 = vmatpush.msra.mxu0 0.0
        %1421 = vmatpush.msra.mxu0 0.0
        %1422 = vmatpush.msra.mxu0 0.0
        %1423 = vmatpush.msra.mxu0 0.0
        %1424 = vmatpush.msra.mxu0 0.0
        %1425 = vmatpush.msra.mxu0 %v201
        %1426 = vmatpush.msra.mxu0 %v200
        %1427 = vmatpush.msra.mxu0 %v199
        %1428 = vmatpush.msra.mxu0 %v198
        %1429 = vmatpush.msra.mxu0 %v197
        %1430 = vmatpush.msra.mxu0 %v196
        %1431 = vmatpush.msra.mxu0 %v195
        %1432 = vmatmul.f32.gmra.mxu0 %v1402
        %v1433 = vpop.f32.mrf.mxu0
        %v1434 = vadd.f32 0.0, %v1433
        %1435 = vmatmul.f32.gmra.mxu0 %v1404
        %v1436 = vpop.f32.mrf.mxu0
        %v1437 = vadd.f32 0.0, %v1436
        %1438 = vmatmul.f32.gmra.mxu0 %v1406
        %v1439 = vpop.f32.mrf.mxu0
        %v1440 = vadd.f32 0.0, %v1439
        %1441 = vmatmul.f32.gmra.mxu0 %v1408
        %v1442 = vpop.f32.mrf.mxu0
        %v1443 = vadd.f32 0.0, %v1442
        %1444 = vmatmul.f32.gmra.mxu0 %v1410
        %v1445 = vpop.f32.mrf.mxu0
        %v1446 = vadd.f32 0.0, %v1445
        %1447 = vmatmul.f32.gmra.mxu0 %v1412
        %v1448 = vpop.f32.mrf.mxu0
        %v1449 = vadd.f32 0.0, %v1448
        %1450 = vmatmul.f32.gmra.mxu0 %v1414
        %v1451 = vpop.f32.mrf.mxu0
        %v1452 = vadd.f32 0.0, %v1451
        %1453 = vdwg.mxu0
        %1454 = vmatpush.msra.mxu0 0.0
        %1455 = vmatpush.msra.mxu0 0.0
        %1456 = vmatpush.msra.mxu0 0.0
        %1457 = vmatpush.msra.mxu0 0.0
        %1458 = vmatpush.msra.mxu0 0.0
        %1459 = vmatpush.msra.mxu0 0.0
        %1460 = vmatpush.msra.mxu0 0.0
        %1461 = vmatpush.msra.mxu0 0.0
        %1462 = vmatpush.msra.mxu0 0.0
        %1463 = vmatpush.msra.mxu0 %v1452
        %1464 = vmatpush.msra.mxu0 %v1449
        %1465 = vmatpush.msra.mxu0 %v1446
        %1466 = vmatpush.msra.mxu0 %v1443
        %1467 = vmatpush.msra.mxu0 %v1440
        %1468 = vmatpush.msra.mxu0 %v1437
        %1469 = vmatpush.msra.mxu0 %v1434
        %1470 = vmatmul.f32.gmra.mxu0 %v1179
        %v1471 = vpop.f32.mrf.mxu0
        %v1472 = vadd.f32 0.0, %v1471
        %1473 = vdwg.mxu0
        %v1474 = vmul.f32 %v1472, %v1472
        %v1475 = vadd.f32 %v1352, %v1474
        %vm1476 = vmxor %vm992, 1
        %vm1477 = vmxor %vm993, 1
        %vm1478 = vmxor %vm994, 1
        %vm1479 = vmxor %vm995, 1
        %vm1480 = vmxor %vm996, 1
        %vm1481 = vmxor %vm997, 1
        %vm1482 = vmxor %vm998, 1
        %vm1483 = vmand %vm985, %vm1476
        %vm1484 = vmand %vm986, %vm1477
        %vm1485 = vmand %vm987, %vm1478
        %vm1486 = vmand %vm988, %vm1479
        %vm1487 = vmand %vm989, %vm1480
        %vm1488 = vmand %vm990, %vm1481
        %vm1489 = vmand %vm991, %vm1482
        %vm1490 = vmand %vm1483, %vm1237
        %vm1491 = vmand %vm1484, %vm1238
        %vm1492 = vmand %vm1485, %vm1239
        %vm1493 = vmand %vm1486, %vm1240
        %vm1494 = vmand %vm1487, %vm1241
        %vm1495 = vmand %vm1488, %vm1242
        %vm1496 = vmand %vm1489, %vm1243
        %v1497 = vsel %vm1490, %v1077, 0.0
        %v1498 = vsel %vm1491, %v1079, 0.0
        %v1499 = vsel %vm1492, %v1081, 0.0
        %v1500 = vsel %vm1493, %v1083, 0.0
        %v1501 = vsel %vm1494, %v1085, 0.0
        %v1502 = vsel %vm1495, %v1087, 0.0
        %v1503 = vsel %vm1496, %v1089, 0.0
        %1511 = vrot.lane.b32.xlu0 %v1497, 73
        %v1512 = vpop.permute.xlu0 %1511
        %1513 = vrot.lane.b32.xlu0 %v1498, 73
        %v1514 = vpop.permute.xlu0 %1513
        %1515 = vrot.lane.b32.xlu0 %v1499, 73
        %v1516 = vpop.permute.xlu0 %1515
        %1517 = vrot.lane.b32.xlu0 %v1500, 73
        %v1518 = vpop.permute.xlu0 %1517
        %1519 = vrot.lane.b32.xlu0 %v1501, 73
        %v1520 = vpop.permute.xlu0 %1519
        %1521 = vrot.lane.b32.xlu0 %v1502, 73
        %v1522 = vpop.permute.xlu0 %1521
        %1523 = vrot.lane.b32.xlu0 %v1503, 73
        %v1524 = vpop.permute.xlu0 %1523
        %v1525 = vsel %vm1125, %v1512, 0
        %v1527 = vsel %vm1125, %v1514, 0
        %v1529 = vsel %vm1125, %v1516, 0
        %v1531 = vsel %vm1125, %v1518, 0
        %v1533 = vsel %vm1125, %v1520, 0
        %v1535 = vsel %vm1125, %v1522, 0
        %v1537 = vsel %vm1125, %v1524, 0
        %1539 = vmatpush.msra.mxu0 0.0
        %1540 = vmatpush.msra.mxu0 0.0
        %1541 = vmatpush.msra.mxu0 0.0
        %1542 = vmatpush.msra.mxu0 0.0
        %1543 = vmatpush.msra.mxu0 0.0
        %1544 = vmatpush.msra.mxu0 0.0
        %1545 = vmatpush.msra.mxu0 0.0
        %1546 = vmatpush.msra.mxu0 0.0
        %1547 = vmatpush.msra.mxu0 0.0
        %1548 = vmatpush.msra.mxu0 %v201
        %1549 = vmatpush.msra.mxu0 %v200
        %1550 = vmatpush.msra.mxu0 %v199
        %1551 = vmatpush.msra.mxu0 %v198
        %1552 = vmatpush.msra.mxu0 %v197
        %1553 = vmatpush.msra.mxu0 %v196
        %1554 = vmatpush.msra.mxu0 %v195
        %1555 = vmatmul.f32.gmra.mxu0 %v1525
        %v1556 = vpop.f32.mrf.mxu0
        %v1557 = vadd.f32 0.0, %v1556
        %1558 = vmatmul.f32.gmra.mxu0 %v1527
        %v1559 = vpop.f32.mrf.mxu0
        %v1560 = vadd.f32 0.0, %v1559
        %1561 = vmatmul.f32.gmra.mxu0 %v1529
        %v1562 = vpop.f32.mrf.mxu0
        %v1563 = vadd.f32 0.0, %v1562
        %1564 = vmatmul.f32.gmra.mxu0 %v1531
        %v1565 = vpop.f32.mrf.mxu0
        %v1566 = vadd.f32 0.0, %v1565
        %1567 = vmatmul.f32.gmra.mxu0 %v1533
        %v1568 = vpop.f32.mrf.mxu0
        %v1569 = vadd.f32 0.0, %v1568
        %1570 = vmatmul.f32.gmra.mxu0 %v1535
        %v1571 = vpop.f32.mrf.mxu0
        %v1572 = vadd.f32 0.0, %v1571
        %1573 = vmatmul.f32.gmra.mxu0 %v1537
        %v1574 = vpop.f32.mrf.mxu0
        %v1575 = vadd.f32 0.0, %v1574
        %1576 = vdwg.mxu0
        %1577 = vmatpush.msra.mxu0 0.0
        %1578 = vmatpush.msra.mxu0 0.0
        %1579 = vmatpush.msra.mxu0 0.0
        %1580 = vmatpush.msra.mxu0 0.0
        %1581 = vmatpush.msra.mxu0 0.0
        %1582 = vmatpush.msra.mxu0 0.0
        %1583 = vmatpush.msra.mxu0 0.0
        %1584 = vmatpush.msra.mxu0 0.0
        %1585 = vmatpush.msra.mxu0 0.0
        %1586 = vmatpush.msra.mxu0 %v1575
        %1587 = vmatpush.msra.mxu0 %v1572
        %1588 = vmatpush.msra.mxu0 %v1569
        %1589 = vmatpush.msra.mxu0 %v1566
        %1590 = vmatpush.msra.mxu0 %v1563
        %1591 = vmatpush.msra.mxu0 %v1560
        %1592 = vmatpush.msra.mxu0 %v1557
        %1593 = vmatmul.f32.gmra.mxu0 %v1179
        %v1594 = vpop.f32.mrf.mxu0
        %v1595 = vadd.f32 0.0, %v1594
        %1596 = vdwg.mxu0
        %v1597 = vmul.f32 %v1595, %v1595
        %v1598 = vadd.f32 %v1475, %v1597
        %vm1599 = vmxor %vm999, 1
        %vm1600 = vmxor %vm1000, 1
        %vm1601 = vmxor %vm1001, 1
        %vm1602 = vmxor %vm1002, 1
        %vm1603 = vmxor %vm1003, 1
        %vm1604 = vmxor %vm1004, 1
        %vm1605 = vmxor %vm1005, 1
        %vm1606 = vmand %vm992, %vm1599
        %vm1607 = vmand %vm993, %vm1600
        %vm1608 = vmand %vm994, %vm1601
        %vm1609 = vmand %vm995, %vm1602
        %vm1610 = vmand %vm996, %vm1603
        %vm1611 = vmand %vm997, %vm1604
        %vm1612 = vmand %vm998, %vm1605
        %vm1613 = vmand %vm1606, %vm1237
        %vm1614 = vmand %vm1607, %vm1238
        %vm1615 = vmand %vm1608, %vm1239
        %vm1616 = vmand %vm1609, %vm1240
        %vm1617 = vmand %vm1610, %vm1241
        %vm1618 = vmand %vm1611, %vm1242
        %vm1619 = vmand %vm1612, %vm1243
        %v1620 = vsel %vm1613, %v1077, 0.0
        %v1621 = vsel %vm1614, %v1079, 0.0
        %v1622 = vsel %vm1615, %v1081, 0.0
        %v1623 = vsel %vm1616, %v1083, 0.0
        %v1624 = vsel %vm1617, %v1085, 0.0
        %v1625 = vsel %vm1618, %v1087, 0.0
        %v1626 = vsel %vm1619, %v1089, 0.0
        %1634 = vrot.lane.b32.xlu0 %v1620, 73
        %v1635 = vpop.permute.xlu0 %1634
        %1636 = vrot.lane.b32.xlu0 %v1621, 73
        %v1637 = vpop.permute.xlu0 %1636
        %1638 = vrot.lane.b32.xlu0 %v1622, 73
        %v1639 = vpop.permute.xlu0 %1638
        %1640 = vrot.lane.b32.xlu0 %v1623, 73
        %v1641 = vpop.permute.xlu0 %1640
        %1642 = vrot.lane.b32.xlu0 %v1624, 73
        %v1643 = vpop.permute.xlu0 %1642
        %1644 = vrot.lane.b32.xlu0 %v1625, 73
        %v1645 = vpop.permute.xlu0 %1644
        %1646 = vrot.lane.b32.xlu0 %v1626, 73
        %v1647 = vpop.permute.xlu0 %1646
        %v1648 = vsel %vm1125, %v1635, 0
        %v1650 = vsel %vm1125, %v1637, 0
        %v1652 = vsel %vm1125, %v1639, 0
        %v1654 = vsel %vm1125, %v1641, 0
        %v1656 = vsel %vm1125, %v1643, 0
        %v1658 = vsel %vm1125, %v1645, 0
        %v1660 = vsel %vm1125, %v1647, 0
        %1662 = vmatpush.msra.mxu0 0.0
        %1663 = vmatpush.msra.mxu0 0.0
        %1664 = vmatpush.msra.mxu0 0.0
        %1665 = vmatpush.msra.mxu0 0.0
        %1666 = vmatpush.msra.mxu0 0.0
        %1667 = vmatpush.msra.mxu0 0.0
        %1668 = vmatpush.msra.mxu0 0.0
        %1669 = vmatpush.msra.mxu0 0.0
        %1670 = vmatpush.msra.mxu0 0.0
        %1671 = vmatpush.msra.mxu0 %v201
        %1672 = vmatpush.msra.mxu0 %v200
        %1673 = vmatpush.msra.mxu0 %v199
        %1674 = vmatpush.msra.mxu0 %v198
        %1675 = vmatpush.msra.mxu0 %v197
        %1676 = vmatpush.msra.mxu0 %v196
        %1677 = vmatpush.msra.mxu0 %v195
        %1678 = vmatmul.f32.gmra.mxu0 %v1648
        %v1679 = vpop.f32.mrf.mxu0
        %v1680 = vadd.f32 0.0, %v1679
        %1681 = vmatmul.f32.gmra.mxu0 %v1650
        %v1682 = vpop.f32.mrf.mxu0
        %v1683 = vadd.f32 0.0, %v1682
        %1684 = vmatmul.f32.gmra.mxu0 %v1652
        %v1685 = vpop.f32.mrf.mxu0
        %v1686 = vadd.f32 0.0, %v1685
        %1687 = vmatmul.f32.gmra.mxu0 %v1654
        %v1688 = vpop.f32.mrf.mxu0
        %v1689 = vadd.f32 0.0, %v1688
        %1690 = vmatmul.f32.gmra.mxu0 %v1656
        %v1691 = vpop.f32.mrf.mxu0
        %v1692 = vadd.f32 0.0, %v1691
        %1693 = vmatmul.f32.gmra.mxu0 %v1658
        %v1694 = vpop.f32.mrf.mxu0
        %v1695 = vadd.f32 0.0, %v1694
        %1696 = vmatmul.f32.gmra.mxu0 %v1660
        %v1697 = vpop.f32.mrf.mxu0
        %v1698 = vadd.f32 0.0, %v1697
        %1699 = vdwg.mxu0
        %1700 = vmatpush.msra.mxu0 0.0
        %1701 = vmatpush.msra.mxu0 0.0
        %1702 = vmatpush.msra.mxu0 0.0
        %1703 = vmatpush.msra.mxu0 0.0
        %1704 = vmatpush.msra.mxu0 0.0
        %1705 = vmatpush.msra.mxu0 0.0
        %1706 = vmatpush.msra.mxu0 0.0
        %1707 = vmatpush.msra.mxu0 0.0
        %1708 = vmatpush.msra.mxu0 0.0
        %1709 = vmatpush.msra.mxu0 %v1698
        %1710 = vmatpush.msra.mxu0 %v1695
        %1711 = vmatpush.msra.mxu0 %v1692
        %1712 = vmatpush.msra.mxu0 %v1689
        %1713 = vmatpush.msra.mxu0 %v1686
        %1714 = vmatpush.msra.mxu0 %v1683
        %1715 = vmatpush.msra.mxu0 %v1680
        %1716 = vmatmul.f32.gmra.mxu0 %v1179
        %v1717 = vpop.f32.mrf.mxu0
        %v1718 = vadd.f32 0.0, %v1717
        %1719 = vdwg.mxu0
        %v1720 = vmul.f32 %v1718, %v1718
        %v1721 = vadd.f32 %v1598, %v1720
        %vm1722 = vmxor %vm1006, 1
        %vm1723 = vmxor %vm1007, 1
        %vm1724 = vmxor %vm1008, 1
        %vm1725 = vmxor %vm1009, 1
        %vm1726 = vmxor %vm1010, 1
        %vm1727 = vmxor %vm1011, 1
        %vm1728 = vmxor %vm1012, 1
        %vm1729 = vmand %vm999, %vm1722
        %vm1730 = vmand %vm1000, %vm1723
        %vm1731 = vmand %vm1001, %vm1724
        %vm1732 = vmand %vm1002, %vm1725
        %vm1733 = vmand %vm1003, %vm1726
        %vm1734 = vmand %vm1004, %vm1727
        %vm1735 = vmand %vm1005, %vm1728
        %vm1736 = vmand %vm1729, %vm1237
        %vm1737 = vmand %vm1730, %vm1238
        %vm1738 = vmand %vm1731, %vm1239
        %vm1739 = vmand %vm1732, %vm1240
        %vm1740 = vmand %vm1733, %vm1241
        %vm1741 = vmand %vm1734, %vm1242
        %vm1742 = vmand %vm1735, %vm1243
        %v1743 = vsel %vm1736, %v1077, 0.0
        %v1744 = vsel %vm1737, %v1079, 0.0
        %v1745 = vsel %vm1738, %v1081, 0.0
        %v1746 = vsel %vm1739, %v1083, 0.0
        %v1747 = vsel %vm1740, %v1085, 0.0
        %v1748 = vsel %vm1741, %v1087, 0.0
        %v1749 = vsel %vm1742, %v1089, 0.0
        %1757 = vrot.lane.b32.xlu0 %v1743, 73
        %v1758 = vpop.permute.xlu0 %1757
        %1759 = vrot.lane.b32.xlu0 %v1744, 73
        %v1760 = vpop.permute.xlu0 %1759
        %1761 = vrot.lane.b32.xlu0 %v1745, 73
        %v1762 = vpop.permute.xlu0 %1761
        %1763 = vrot.lane.b32.xlu0 %v1746, 73
        %v1764 = vpop.permute.xlu0 %1763
        %1765 = vrot.lane.b32.xlu0 %v1747, 73
        %v1766 = vpop.permute.xlu0 %1765
        %1767 = vrot.lane.b32.xlu0 %v1748, 73
        %v1768 = vpop.permute.xlu0 %1767
        %1769 = vrot.lane.b32.xlu0 %v1749, 73
        %v1770 = vpop.permute.xlu0 %1769
        %v1771 = vsel %vm1125, %v1758, 0
        %v1773 = vsel %vm1125, %v1760, 0
        %v1775 = vsel %vm1125, %v1762, 0
        %v1777 = vsel %vm1125, %v1764, 0
        %v1779 = vsel %vm1125, %v1766, 0
        %v1781 = vsel %vm1125, %v1768, 0
        %v1783 = vsel %vm1125, %v1770, 0
        %1785 = vmatpush.msra.mxu0 0.0
        %1786 = vmatpush.msra.mxu0 0.0
        %1787 = vmatpush.msra.mxu0 0.0
        %1788 = vmatpush.msra.mxu0 0.0
        %1789 = vmatpush.msra.mxu0 0.0
        %1790 = vmatpush.msra.mxu0 0.0
        %1791 = vmatpush.msra.mxu0 0.0
        %1792 = vmatpush.msra.mxu0 0.0
        %1793 = vmatpush.msra.mxu0 0.0
        %1794 = vmatpush.msra.mxu0 %v201
        %1795 = vmatpush.msra.mxu0 %v200
        %1796 = vmatpush.msra.mxu0 %v199
        %1797 = vmatpush.msra.mxu0 %v198
        %1798 = vmatpush.msra.mxu0 %v197
        %1799 = vmatpush.msra.mxu0 %v196
        %1800 = vmatpush.msra.mxu0 %v195
        %1801 = vmatmul.f32.gmra.mxu0 %v1771
        %v1802 = vpop.f32.mrf.mxu0
        %v1803 = vadd.f32 0.0, %v1802
        %1804 = vmatmul.f32.gmra.mxu0 %v1773
        %v1805 = vpop.f32.mrf.mxu0
        %v1806 = vadd.f32 0.0, %v1805
        %1807 = vmatmul.f32.gmra.mxu0 %v1775
        %v1808 = vpop.f32.mrf.mxu0
        %v1809 = vadd.f32 0.0, %v1808
        %1810 = vmatmul.f32.gmra.mxu0 %v1777
        %v1811 = vpop.f32.mrf.mxu0
        %v1812 = vadd.f32 0.0, %v1811
        %1813 = vmatmul.f32.gmra.mxu0 %v1779
        %v1814 = vpop.f32.mrf.mxu0
        %v1815 = vadd.f32 0.0, %v1814
        %1816 = vmatmul.f32.gmra.mxu0 %v1781
        %v1817 = vpop.f32.mrf.mxu0
        %v1818 = vadd.f32 0.0, %v1817
        %1819 = vmatmul.f32.gmra.mxu0 %v1783
        %v1820 = vpop.f32.mrf.mxu0
        %v1821 = vadd.f32 0.0, %v1820
        %1822 = vdwg.mxu0
        %1823 = vmatpush.msra.mxu0 0.0
        %1824 = vmatpush.msra.mxu0 0.0
        %1825 = vmatpush.msra.mxu0 0.0
        %1826 = vmatpush.msra.mxu0 0.0
        %1827 = vmatpush.msra.mxu0 0.0
        %1828 = vmatpush.msra.mxu0 0.0
        %1829 = vmatpush.msra.mxu0 0.0
        %1830 = vmatpush.msra.mxu0 0.0
        %1831 = vmatpush.msra.mxu0 0.0
        %1832 = vmatpush.msra.mxu0 %v1821
        %1833 = vmatpush.msra.mxu0 %v1818
        %1834 = vmatpush.msra.mxu0 %v1815
        %1835 = vmatpush.msra.mxu0 %v1812
        %1836 = vmatpush.msra.mxu0 %v1809
        %1837 = vmatpush.msra.mxu0 %v1806
        %1838 = vmatpush.msra.mxu0 %v1803
        %1839 = vmatmul.f32.gmra.mxu0 %v1179
        %v1840 = vpop.f32.mrf.mxu0
        %v1841 = vadd.f32 0.0, %v1840
        %1842 = vdwg.mxu0
        %v1843 = vmul.f32 %v1841, %v1841
        %v1844 = vadd.f32 %v1721, %v1843
        %vm1845 = vmxor %vm1013, 1
        %vm1846 = vmxor %vm1014, 1
        %vm1847 = vmxor %vm1015, 1
        %vm1848 = vmxor %vm1016, 1
        %vm1849 = vmxor %vm1017, 1
        %vm1850 = vmxor %vm1018, 1
        %vm1851 = vmxor %vm1019, 1
        %vm1852 = vmand %vm1006, %vm1845
        %vm1853 = vmand %vm1007, %vm1846
        %vm1854 = vmand %vm1008, %vm1847
        %vm1855 = vmand %vm1009, %vm1848
        %vm1856 = vmand %vm1010, %vm1849
        %vm1857 = vmand %vm1011, %vm1850
        %vm1858 = vmand %vm1012, %vm1851
        %vm1859 = vmand %vm1852, %vm1237
        %vm1860 = vmand %vm1853, %vm1238
        %vm1861 = vmand %vm1854, %vm1239
        %vm1862 = vmand %vm1855, %vm1240
        %vm1863 = vmand %vm1856, %vm1241
        %vm1864 = vmand %vm1857, %vm1242
        %vm1865 = vmand %vm1858, %vm1243
        %v1866 = vsel %vm1859, %v1077, 0.0
        %v1867 = vsel %vm1860, %v1079, 0.0
        %v1868 = vsel %vm1861, %v1081, 0.0
        %v1869 = vsel %vm1862, %v1083, 0.0
        %v1870 = vsel %vm1863, %v1085, 0.0
        %v1871 = vsel %vm1864, %v1087, 0.0
        %v1872 = vsel %vm1865, %v1089, 0.0
        %1880 = vrot.lane.b32.xlu0 %v1866, 73
        %v1881 = vpop.permute.xlu0 %1880
        %1882 = vrot.lane.b32.xlu0 %v1867, 73
        %v1883 = vpop.permute.xlu0 %1882
        %1884 = vrot.lane.b32.xlu0 %v1868, 73
        %v1885 = vpop.permute.xlu0 %1884
        %1886 = vrot.lane.b32.xlu0 %v1869, 73
        %v1887 = vpop.permute.xlu0 %1886
        %1888 = vrot.lane.b32.xlu0 %v1870, 73
        %v1889 = vpop.permute.xlu0 %1888
        %1890 = vrot.lane.b32.xlu0 %v1871, 73
        %v1891 = vpop.permute.xlu0 %1890
        %1892 = vrot.lane.b32.xlu0 %v1872, 73
        %v1893 = vpop.permute.xlu0 %1892
        %v1894 = vsel %vm1125, %v1881, 0
        %v1896 = vsel %vm1125, %v1883, 0
        %v1898 = vsel %vm1125, %v1885, 0
        %v1900 = vsel %vm1125, %v1887, 0
        %v1902 = vsel %vm1125, %v1889, 0
        %v1904 = vsel %vm1125, %v1891, 0
        %v1906 = vsel %vm1125, %v1893, 0
        %1908 = vmatpush.msra.mxu0 0.0
        %1909 = vmatpush.msra.mxu0 0.0
        %1910 = vmatpush.msra.mxu0 0.0
        %1911 = vmatpush.msra.mxu0 0.0
        %1912 = vmatpush.msra.mxu0 0.0
        %1913 = vmatpush.msra.mxu0 0.0
        %1914 = vmatpush.msra.mxu0 0.0
        %1915 = vmatpush.msra.mxu0 0.0
        %1916 = vmatpush.msra.mxu0 0.0
        %1917 = vmatpush.msra.mxu0 %v201
        %1918 = vmatpush.msra.mxu0 %v200
        %1919 = vmatpush.msra.mxu0 %v199
        %1920 = vmatpush.msra.mxu0 %v198
        %1921 = vmatpush.msra.mxu0 %v197
        %1922 = vmatpush.msra.mxu0 %v196
        %1923 = vmatpush.msra.mxu0 %v195
        %1924 = vmatmul.f32.gmra.mxu0 %v1894
        %v1925 = vpop.f32.mrf.mxu0
        %v1926 = vadd.f32 0.0, %v1925
        %1927 = vmatmul.f32.gmra.mxu0 %v1896
        %v1928 = vpop.f32.mrf.mxu0
        %v1929 = vadd.f32 0.0, %v1928
        %1930 = vmatmul.f32.gmra.mxu0 %v1898
        %v1931 = vpop.f32.mrf.mxu0
        %v1932 = vadd.f32 0.0, %v1931
        %1933 = vmatmul.f32.gmra.mxu0 %v1900
        %v1934 = vpop.f32.mrf.mxu0
        %v1935 = vadd.f32 0.0, %v1934
        %1936 = vmatmul.f32.gmra.mxu0 %v1902
        %v1937 = vpop.f32.mrf.mxu0
        %v1938 = vadd.f32 0.0, %v1937
        %1939 = vmatmul.f32.gmra.mxu0 %v1904
        %v1940 = vpop.f32.mrf.mxu0
        %v1941 = vadd.f32 0.0, %v1940
        %1942 = vmatmul.f32.gmra.mxu0 %v1906
        %v1943 = vpop.f32.mrf.mxu0
        %v1944 = vadd.f32 0.0, %v1943
        %1945 = vdwg.mxu0
        %1946 = vmatpush.msra.mxu0 0.0
        %1947 = vmatpush.msra.mxu0 0.0
        %1948 = vmatpush.msra.mxu0 0.0
        %1949 = vmatpush.msra.mxu0 0.0
        %1950 = vmatpush.msra.mxu0 0.0
        %1951 = vmatpush.msra.mxu0 0.0
        %1952 = vmatpush.msra.mxu0 0.0
        %1953 = vmatpush.msra.mxu0 0.0
        %1954 = vmatpush.msra.mxu0 0.0
        %1955 = vmatpush.msra.mxu0 %v1944
        %1956 = vmatpush.msra.mxu0 %v1941
        %1957 = vmatpush.msra.mxu0 %v1938
        %1958 = vmatpush.msra.mxu0 %v1935
        %1959 = vmatpush.msra.mxu0 %v1932
        %1960 = vmatpush.msra.mxu0 %v1929
        %1961 = vmatpush.msra.mxu0 %v1926
        %1962 = vmatmul.f32.gmra.mxu0 %v1179
        %v1963 = vpop.f32.mrf.mxu0
        %v1964 = vadd.f32 0.0, %v1963
        %1965 = vdwg.mxu0
        %v1966 = vmul.f32 %v1964, %v1964
        %v1967 = vadd.f32 %v1844, %v1966
        %vm1968 = vmxor %vm1020, 1
        %vm1969 = vmxor %vm1021, 1
        %vm1970 = vmxor %vm1022, 1
        %vm1971 = vmxor %vm1023, 1
        %vm1972 = vmxor %vm1024, 1
        %vm1973 = vmxor %vm1025, 1
        %vm1974 = vmxor %vm1026, 1
        %vm1975 = vmand %vm1013, %vm1968
        %vm1976 = vmand %vm1014, %vm1969
        %vm1977 = vmand %vm1015, %vm1970
        %vm1978 = vmand %vm1016, %vm1971
        %vm1979 = vmand %vm1017, %vm1972
        %vm1980 = vmand %vm1018, %vm1973
        %vm1981 = vmand %vm1019, %vm1974
        %vm1982 = vmand %vm1975, %vm1237
        %vm1983 = vmand %vm1976, %vm1238
        %vm1984 = vmand %vm1977, %vm1239
        %vm1985 = vmand %vm1978, %vm1240
        %vm1986 = vmand %vm1979, %vm1241
        %vm1987 = vmand %vm1980, %vm1242
        %vm1988 = vmand %vm1981, %vm1243
        %v1989 = vsel %vm1982, %v1077, 0.0
        %v1990 = vsel %vm1983, %v1079, 0.0
        %v1991 = vsel %vm1984, %v1081, 0.0
        %v1992 = vsel %vm1985, %v1083, 0.0
        %v1993 = vsel %vm1986, %v1085, 0.0
        %v1994 = vsel %vm1987, %v1087, 0.0
        %v1995 = vsel %vm1988, %v1089, 0.0
        %2003 = vrot.lane.b32.xlu0 %v1989, 73
        %v2004 = vpop.permute.xlu0 %2003
        %2005 = vrot.lane.b32.xlu0 %v1990, 73
        %v2006 = vpop.permute.xlu0 %2005
        %2007 = vrot.lane.b32.xlu0 %v1991, 73
        %v2008 = vpop.permute.xlu0 %2007
        %2009 = vrot.lane.b32.xlu0 %v1992, 73
        %v2010 = vpop.permute.xlu0 %2009
        %2011 = vrot.lane.b32.xlu0 %v1993, 73
        %v2012 = vpop.permute.xlu0 %2011
        %2013 = vrot.lane.b32.xlu0 %v1994, 73
        %v2014 = vpop.permute.xlu0 %2013
        %2015 = vrot.lane.b32.xlu0 %v1995, 73
        %v2016 = vpop.permute.xlu0 %2015
        %v2017 = vsel %vm1125, %v2004, 0
        %v2019 = vsel %vm1125, %v2006, 0
        %v2021 = vsel %vm1125, %v2008, 0
        %v2023 = vsel %vm1125, %v2010, 0
        %v2025 = vsel %vm1125, %v2012, 0
        %v2027 = vsel %vm1125, %v2014, 0
        %v2029 = vsel %vm1125, %v2016, 0
        %2031 = vmatpush.msra.mxu0 0.0
        %2032 = vmatpush.msra.mxu0 0.0
        %2033 = vmatpush.msra.mxu0 0.0
        %2034 = vmatpush.msra.mxu0 0.0
        %2035 = vmatpush.msra.mxu0 0.0
        %2036 = vmatpush.msra.mxu0 0.0
        %2037 = vmatpush.msra.mxu0 0.0
        %2038 = vmatpush.msra.mxu0 0.0
        %2039 = vmatpush.msra.mxu0 0.0
        %2040 = vmatpush.msra.mxu0 %v201
        %2041 = vmatpush.msra.mxu0 %v200
        %2042 = vmatpush.msra.mxu0 %v199
        %2043 = vmatpush.msra.mxu0 %v198
        %2044 = vmatpush.msra.mxu0 %v197
        %2045 = vmatpush.msra.mxu0 %v196
        %2046 = vmatpush.msra.mxu0 %v195
        %2047 = vmatmul.f32.gmra.mxu0 %v2017
        %v2048 = vpop.f32.mrf.mxu0
        %v2049 = vadd.f32 0.0, %v2048
        %2050 = vmatmul.f32.gmra.mxu0 %v2019
        %v2051 = vpop.f32.mrf.mxu0
        %v2052 = vadd.f32 0.0, %v2051
        %2053 = vmatmul.f32.gmra.mxu0 %v2021
        %v2054 = vpop.f32.mrf.mxu0
        %v2055 = vadd.f32 0.0, %v2054
        %2056 = vmatmul.f32.gmra.mxu0 %v2023
        %v2057 = vpop.f32.mrf.mxu0
        %v2058 = vadd.f32 0.0, %v2057
        %2059 = vmatmul.f32.gmra.mxu0 %v2025
        %v2060 = vpop.f32.mrf.mxu0
        %v2061 = vadd.f32 0.0, %v2060
        %2062 = vmatmul.f32.gmra.mxu0 %v2027
        %v2063 = vpop.f32.mrf.mxu0
        %v2064 = vadd.f32 0.0, %v2063
        %2065 = vmatmul.f32.gmra.mxu0 %v2029
        %v2066 = vpop.f32.mrf.mxu0
        %v2067 = vadd.f32 0.0, %v2066
        %2068 = vdwg.mxu0
        %2069 = vmatpush.msra.mxu0 0.0
        %2070 = vmatpush.msra.mxu0 0.0
        %2071 = vmatpush.msra.mxu0 0.0
        %2072 = vmatpush.msra.mxu0 0.0
        %2073 = vmatpush.msra.mxu0 0.0
        %2074 = vmatpush.msra.mxu0 0.0
        %2075 = vmatpush.msra.mxu0 0.0
        %2076 = vmatpush.msra.mxu0 0.0
        %2077 = vmatpush.msra.mxu0 0.0
        %2078 = vmatpush.msra.mxu0 %v2067
        %2079 = vmatpush.msra.mxu0 %v2064
        %2080 = vmatpush.msra.mxu0 %v2061
        %2081 = vmatpush.msra.mxu0 %v2058
        %2082 = vmatpush.msra.mxu0 %v2055
        %2083 = vmatpush.msra.mxu0 %v2052
        %2084 = vmatpush.msra.mxu0 %v2049
        %2085 = vmatmul.f32.gmra.mxu0 %v1179
        %v2086 = vpop.f32.mrf.mxu0
        %v2087 = vadd.f32 0.0, %v2086
        %2088 = vdwg.mxu0
        %v2089 = vmul.f32 %v2087, %v2087
        %v2090 = vadd.f32 %v1967, %v2089
        %vm2091 = vmand %vm1020, %vm1237
        %vm2092 = vmand %vm1021, %vm1238
        %vm2093 = vmand %vm1022, %vm1239
        %vm2094 = vmand %vm1023, %vm1240
        %vm2095 = vmand %vm1024, %vm1241
        %vm2096 = vmand %vm1025, %vm1242
        %vm2097 = vmand %vm1026, %vm1243
        %v2098 = vsel %vm2091, %v1077, 0.0
        %v2099 = vsel %vm2092, %v1079, 0.0
        %v2100 = vsel %vm2093, %v1081, 0.0
        %v2101 = vsel %vm2094, %v1083, 0.0
        %v2102 = vsel %vm2095, %v1085, 0.0
        %v2103 = vsel %vm2096, %v1087, 0.0
        %v2104 = vsel %vm2097, %v1089, 0.0
        %2112 = vrot.lane.b32.xlu0 %v2098, 73
        %v2113 = vpop.permute.xlu0 %2112
        %2114 = vrot.lane.b32.xlu0 %v2099, 73
        %v2115 = vpop.permute.xlu0 %2114
        %2116 = vrot.lane.b32.xlu0 %v2100, 73
        %v2117 = vpop.permute.xlu0 %2116
        %2118 = vrot.lane.b32.xlu0 %v2101, 73
        %v2119 = vpop.permute.xlu0 %2118
        %2120 = vrot.lane.b32.xlu0 %v2102, 73
        %v2121 = vpop.permute.xlu0 %2120
        %2122 = vrot.lane.b32.xlu0 %v2103, 73
        %v2123 = vpop.permute.xlu0 %2122
        %2124 = vrot.lane.b32.xlu0 %v2104, 73
        %v2125 = vpop.permute.xlu0 %2124
        %v2126 = vsel %vm1125, %v2113, 0
        %v2128 = vsel %vm1125, %v2115, 0
        %v2130 = vsel %vm1125, %v2117, 0
        %v2132 = vsel %vm1125, %v2119, 0
        %v2134 = vsel %vm1125, %v2121, 0
        %v2136 = vsel %vm1125, %v2123, 0
        %v2138 = vsel %vm1125, %v2125, 0
        %2140 = vmatpush.msra.mxu0 0.0
        %2141 = vmatpush.msra.mxu0 0.0
        %2142 = vmatpush.msra.mxu0 0.0
        %2143 = vmatpush.msra.mxu0 0.0
        %2144 = vmatpush.msra.mxu0 0.0
        %2145 = vmatpush.msra.mxu0 0.0
        %2146 = vmatpush.msra.mxu0 0.0
        %2147 = vmatpush.msra.mxu0 0.0
        %2148 = vmatpush.msra.mxu0 0.0
        %2149 = vmatpush.msra.mxu0 %v201
        %2150 = vmatpush.msra.mxu0 %v200
        %2151 = vmatpush.msra.mxu0 %v199
        %2152 = vmatpush.msra.mxu0 %v198
        %2153 = vmatpush.msra.mxu0 %v197
        %2154 = vmatpush.msra.mxu0 %v196
        %2155 = vmatpush.msra.mxu0 %v195
        %2156 = vmatmul.f32.gmra.mxu0 %v2126
        %v2157 = vpop.f32.mrf.mxu0
        %v2158 = vadd.f32 0.0, %v2157
        %2159 = vmatmul.f32.gmra.mxu0 %v2128
        %v2160 = vpop.f32.mrf.mxu0
        %v2161 = vadd.f32 0.0, %v2160
        %2162 = vmatmul.f32.gmra.mxu0 %v2130
        %v2163 = vpop.f32.mrf.mxu0
        %v2164 = vadd.f32 0.0, %v2163
        %2165 = vmatmul.f32.gmra.mxu0 %v2132
        %v2166 = vpop.f32.mrf.mxu0
        %v2167 = vadd.f32 0.0, %v2166
        %2168 = vmatmul.f32.gmra.mxu0 %v2134
        %v2169 = vpop.f32.mrf.mxu0
        %v2170 = vadd.f32 0.0, %v2169
        %2171 = vmatmul.f32.gmra.mxu0 %v2136
        %v2172 = vpop.f32.mrf.mxu0
        %v2173 = vadd.f32 0.0, %v2172
        %2174 = vmatmul.f32.gmra.mxu0 %v2138
        %v2175 = vpop.f32.mrf.mxu0
        %v2176 = vadd.f32 0.0, %v2175
        %2177 = vdwg.mxu0
        %2178 = vmatpush.msra.mxu0 0.0
        %2179 = vmatpush.msra.mxu0 0.0
        %2180 = vmatpush.msra.mxu0 0.0
        %2181 = vmatpush.msra.mxu0 0.0
        %2182 = vmatpush.msra.mxu0 0.0
        %2183 = vmatpush.msra.mxu0 0.0
        %2184 = vmatpush.msra.mxu0 0.0
        %2185 = vmatpush.msra.mxu0 0.0
        %2186 = vmatpush.msra.mxu0 0.0
        %2187 = vmatpush.msra.mxu0 %v2176
        %2188 = vmatpush.msra.mxu0 %v2173
        %2189 = vmatpush.msra.mxu0 %v2170
        %2190 = vmatpush.msra.mxu0 %v2167
        %2191 = vmatpush.msra.mxu0 %v2164
        %2192 = vmatpush.msra.mxu0 %v2161
        %2193 = vmatpush.msra.mxu0 %v2158
        %2194 = vmatmul.f32.gmra.mxu0 %v1179
        %v2195 = vpop.f32.mrf.mxu0
        %v2196 = vadd.f32 0.0, %v2195
        %2197 = vdwg.mxu0
        %v2198 = vmul.f32 %v2196, %v2196
        %v2199 = vadd.f32 %v2090, %v2198
        %v2200 = vrsqrt.pop %v2199
        %v2201 = vmul.f32 %v2200, %v2199
        %v2202 = vmul.f32 %v2201, %v2200
        %v2203 = vmul.f32 0.5, %v2202
        %v2204 = vsub.f32 1.5, %v2203
        %v2205 = vmul.f32 %v2200, %v2204
        %vm2206 = vweird.f32 %v2199
        %vm2207 = vweird.f32 %v2200
        %vm2208 = vmor %vm2206, %vm2207
        %v2209 = vsel %vm2208, %v2200, %v2205
        %v2210 = vmin.f32 %v2209, 1e+12
        %v2211 = vmul.f32 %v1199, %v2210
        %v2212 = vmul.f32 %v1349, %v2210
        %v2213 = vmul.f32 %v1472, %v2210
        %v2214 = vmul.f32 %v1595, %v2210
        %v2215 = vmul.f32 %v1718, %v2210
        %v2216 = vmul.f32 %v1841, %v2210
        %v2217 = vmul.f32 %v1964, %v2210
        %v2218 = vmul.f32 %v2087, %v2210
        %v2219 = vmul.f32 %v2196, %v2210
        %vm2220 = vcmask 64512
        %2221 = vst.msk [vmem:[%s194] sm:$0xff] %vm2220, %v2211
        %2222 = vst.msk [vmem:[%s194 + $0x8] sm:$0xff] %vm2220, %v2212
        %2223 = vst.msk [vmem:[%s194 + $0x10] sm:$0xff] %vm2220, %v2213
        %2224 = vst.msk [vmem:[%s194 + $0x18] sm:$0xff] %vm2220, %v2214
        %2225 = vst.msk [vmem:[%s194 + $0x20] sm:$0xff] %vm2220, %v2215
        %2226 = vst.msk [vmem:[%s194 + $0x28] sm:$0xff] %vm2220, %v2216
        %2227 = vst.msk [vmem:[%s194 + $0x30] sm:$0xff] %vm2220, %v2217
        %2228 = vst.msk [vmem:[%s194 + $0x38] sm:$0xff] %vm2220, %v2218
        %2229 = vst.msk [vmem:[%s194 + $0x40] sm:$0xff] %vm2220, %v2219
        %s2230 = scalar_lea.vmem %s165, 56 [#allocation2]
        %v2231 = vld [vmem:[%s2230] sm:$0xff]
        %v2232 = vld [vmem:[%s2230 + $0x8] sm:$0xff]
        %v2233 = vld [vmem:[%s2230 + $0x10] sm:$0xff]
        %v2234 = vld [vmem:[%s2230 + $0x18] sm:$0xff]
        %v2235 = vld [vmem:[%s2230 + $0x20] sm:$0xff]
        %v2236 = vld [vmem:[%s2230 + $0x28] sm:$0xff]
        %v2237 = vld [vmem:[%s2230 + $0x30] sm:$0xff]
        %2238 = vrot.lane.b32.xlu0 %v2231, 56
        %v2239 = vpop.permute.xlu0 %2238
        %v2240 = vsel %vm244, %v2239, %v2231
        %2241 = vrot.lane.b32.xlu0 %v2232, 56
        %v2242 = vpop.permute.xlu0 %2241
        %v2243 = vsel %vm244, %v2242, %v2232
        %2244 = vrot.lane.b32.xlu0 %v2233, 56
        %v2245 = vpop.permute.xlu0 %2244
        %v2246 = vsel %vm244, %v2245, %v2233
        %2247 = vrot.lane.b32.xlu0 %v2234, 56
        %v2248 = vpop.permute.xlu0 %2247
        %v2249 = vsel %vm244, %v2248, %v2234
        %2250 = vrot.lane.b32.xlu0 %v2235, 56
        %v2251 = vpop.permute.xlu0 %2250
        %v2252 = vsel %vm244, %v2251, %v2235
        %2253 = vrot.lane.b32.xlu0 %v2236, 56
        %v2254 = vpop.permute.xlu0 %2253
        %v2255 = vsel %vm244, %v2254, %v2236
        %2256 = vrot.lane.b32.xlu0 %v2237, 56
        %v2257 = vpop.permute.xlu0 %2256
        %v2258 = vsel %vm244, %v2257, %v2237
        %2259 = vrot.lane.b32.xlu0 %v2240, 56
        %v2260 = vpop.permute.xlu0 %2259
        %2261 = vrot.lane.b32.xlu0 %v2243, 56
        %v2262 = vpop.permute.xlu0 %2261
        %2263 = vrot.lane.b32.xlu0 %v2246, 56
        %v2264 = vpop.permute.xlu0 %2263
        %2265 = vrot.lane.b32.xlu0 %v2249, 56
        %v2266 = vpop.permute.xlu0 %2265
        %2267 = vrot.lane.b32.xlu0 %v2252, 56
        %v2268 = vpop.permute.xlu0 %2267
        %2269 = vrot.lane.b32.xlu0 %v2255, 56
        %v2270 = vpop.permute.xlu0 %2269
        %2271 = vrot.lane.b32.xlu0 %v2258, 56
        %v2272 = vpop.permute.xlu0 %2271
        %v2273 = vsel %vm244, %v2260, %v2231
        %v2274 = vsel %vm244, %v2262, %v2232
        %v2275 = vsel %vm244, %v2264, %v2233
        %v2276 = vsel %vm244, %v2266, %v2234
        %v2277 = vsel %vm244, %v2268, %v2235
        %v2278 = vsel %vm244, %v2270, %v2236
        %v2279 = vsel %vm244, %v2272, %v2237
        %2287 = vrot.lane.b32.xlu0 %v2273, 54
        %v2288 = vpop.permute.xlu0 %2287
        %2289 = vrot.lane.b32.xlu0 %v2274, 54
        %v2290 = vpop.permute.xlu0 %2289
        %2291 = vrot.lane.b32.xlu0 %v2275, 54
        %v2292 = vpop.permute.xlu0 %2291
        %2293 = vrot.lane.b32.xlu0 %v2276, 54
        %v2294 = vpop.permute.xlu0 %2293
        %2295 = vrot.lane.b32.xlu0 %v2277, 54
        %v2296 = vpop.permute.xlu0 %2295
        %2297 = vrot.lane.b32.xlu0 %v2278, 54
        %v2298 = vpop.permute.xlu0 %2297
        %2299 = vrot.lane.b32.xlu0 %v2279, 54
        %v2300 = vpop.permute.xlu0 %2299
        %v2308 = vsub.f32 %v2273, %v2288
        %v2309 = vsub.f32 %v2274, %v2290
        %v2310 = vsub.f32 %v2275, %v2292
        %v2311 = vsub.f32 %v2276, %v2294
        %v2312 = vsub.f32 %v2277, %v2296
        %v2313 = vsub.f32 %v2278, %v2298
        %v2314 = vsub.f32 %v2279, %v2300
        %2322 = vrot.lane.b32.xlu0 %v2308, 73
        %v2323 = vpop.permute.xlu0 %2322
        %2324 = vrot.lane.b32.xlu0 %v2309, 73
        %v2325 = vpop.permute.xlu0 %2324
        %2326 = vrot.lane.b32.xlu0 %v2310, 73
        %v2327 = vpop.permute.xlu0 %2326
        %2328 = vrot.lane.b32.xlu0 %v2311, 73
        %v2329 = vpop.permute.xlu0 %2328
        %2330 = vrot.lane.b32.xlu0 %v2312, 73
        %v2331 = vpop.permute.xlu0 %2330
        %2332 = vrot.lane.b32.xlu0 %v2313, 73
        %v2333 = vpop.permute.xlu0 %2332
        %2334 = vrot.lane.b32.xlu0 %v2314, 73
        %v2335 = vpop.permute.xlu0 %2334
        %v2343 = vsel %vm236, 0.0, %v2323
        %v2344 = vsel %vm236, 0.0, %v2325
        %v2345 = vsel %vm236, 0.0, %v2327
        %v2346 = vsel %vm236, 0.0, %v2329
        %v2347 = vsel %vm236, 0.0, %v2331
        %v2348 = vsel %vm236, 0.0, %v2333
        %v2349 = vsel %vm236, 0.0, %v2335
        %v2350 = vrot.slane %v2231, 7
        %v2351 = vrot.slane %v2232, 7
        %v2352 = vrot.slane %v2233, 7
        %v2353 = vrot.slane %v2234, 7
        %v2354 = vrot.slane %v2235, 7
        %v2355 = vrot.slane %v2236, 7
        %v2356 = vrot.slane %v2237, 7
        %v2357 = vsel %vm364, %v2355, %v2356
        %v2358 = vsel %vm364, %v2354, %v2355
        %v2359 = vsel %vm364, %v2353, %v2354
        %v2360 = vsel %vm364, %v2352, %v2353
        %v2361 = vsel %vm364, %v2351, %v2352
        %v2362 = vsel %vm364, %v2350, %v2351
        %v2363 = vsel %vm364, %v2356, %v2350
        %v2364 = vrot.slane %v2231, 1
        %v2365 = vrot.slane %v2232, 1
        %v2366 = vrot.slane %v2233, 1
        %v2367 = vrot.slane %v2234, 1
        %v2368 = vrot.slane %v2235, 1
        %v2369 = vrot.slane %v2236, 1
        %v2370 = vrot.slane %v2237, 1
        %v2371 = vsel %vm379, %v2369, %v2370
        %v2372 = vsel %vm379, %v2368, %v2369
        %v2373 = vsel %vm379, %v2367, %v2368
        %v2374 = vsel %vm379, %v2366, %v2367
        %v2375 = vsel %vm379, %v2365, %v2366
        %v2376 = vsel %vm379, %v2364, %v2365
        %v2377 = vsel %vm379, %v2370, %v2364
        %v2378 = vsub.f32 %v2363, %v2376
        %v2379 = vsub.f32 %v2362, %v2375
        %v2380 = vsub.f32 %v2361, %v2374
        %v2381 = vsub.f32 %v2360, %v2373
        %v2382 = vsub.f32 %v2359, %v2372
        %v2383 = vsub.f32 %v2358, %v2371
        %v2384 = vsub.f32 %v2357, %v2377
        %v2385 = vsel %vm229, 0.0, %v2378
        %v2386 = vsel %vm230, 0.0, %v2379
        %v2387 = vsel %vm231, 0.0, %v2380
        %v2388 = vsel %vm232, 0.0, %v2381
        %v2389 = vsel %vm233, 0.0, %v2382
        %v2390 = vsel %vm234, 0.0, %v2383
        %v2391 = vsel %vm235, 0.0, %v2384
        %v2392 = vrot.slane %v2343, 7
        %v2393 = vrot.slane %v2344, 7
        %v2394 = vrot.slane %v2345, 7
        %v2395 = vrot.slane %v2346, 7
        %v2396 = vrot.slane %v2347, 7
        %v2397 = vrot.slane %v2348, 7
        %v2398 = vrot.slane %v2349, 7
        %v2399 = vsel %vm364, %v2397, %v2398
        %v2400 = vsel %vm364, %v2396, %v2397
        %v2401 = vsel %vm364, %v2395, %v2396
        %v2402 = vsel %vm364, %v2394, %v2395
        %v2403 = vsel %vm364, %v2393, %v2394
        %v2404 = vsel %vm364, %v2392, %v2393
        %v2405 = vsel %vm364, %v2398, %v2392
        %v2406 = vmul.f32 %v2343, 2.0
        %v2407 = vmul.f32 %v2344, 2.0
        %v2408 = vmul.f32 %v2345, 2.0
        %v2409 = vmul.f32 %v2346, 2.0
        %v2410 = vmul.f32 %v2347, 2.0
        %v2411 = vmul.f32 %v2348, 2.0
        %v2412 = vmul.f32 %v2349, 2.0
        %v2413 = vadd.f32 %v2405, %v2406
        %v2414 = vadd.f32 %v2404, %v2407
        %v2415 = vadd.f32 %v2403, %v2408
        %v2416 = vadd.f32 %v2402, %v2409
        %v2417 = vadd.f32 %v2401, %v2410
        %v2418 = vadd.f32 %v2400, %v2411
        %v2419 = vadd.f32 %v2399, %v2412
        %v2420 = vrot.slane %v2343, 1
        %v2421 = vrot.slane %v2344, 1
        %v2422 = vrot.slane %v2345, 1
        %v2423 = vrot.slane %v2346, 1
        %v2424 = vrot.slane %v2347, 1
        %v2425 = vrot.slane %v2348, 1
        %v2426 = vrot.slane %v2349, 1
        %v2427 = vsel %vm379, %v2425, %v2426
        %v2428 = vsel %vm379, %v2424, %v2425
        %v2429 = vsel %vm379, %v2423, %v2424
        %v2430 = vsel %vm379, %v2422, %v2423
        %v2431 = vsel %vm379, %v2421, %v2422
        %v2432 = vsel %vm379, %v2420, %v2421
        %v2433 = vsel %vm379, %v2426, %v2420
        %v2434 = vadd.f32 %v2413, %v2432
        %v2435 = vadd.f32 %v2414, %v2431
        %v2436 = vadd.f32 %v2415, %v2430
        %v2437 = vadd.f32 %v2416, %v2429
        %v2438 = vadd.f32 %v2417, %v2428
        %v2439 = vadd.f32 %v2418, %v2427
        %v2440 = vadd.f32 %v2419, %v2433
        %v2442 = vrot.slane %v2349, 6
        %v2444 = vsub.f32 %v2343, %v2442
        %v2446 = vrot.slane %v2343, 2
        %v2448 = vsub.f32 %v2349, %v2446
        %v2449 = vperm.slane %v2448, 6
        %v2450 = vsel %vm220, %v2449, 0.0
        %v2451 = vsel %vm221, %v2449, 0.0
        %v2452 = vsel %vm222, %v2449, 0.0
        %v2453 = vsel %vm223, %v2449, 0.0
        %v2454 = vsel %vm224, %v2449, 0.0
        %v2455 = vsel %vm225, %v2449, 0.0
        %v2456 = vsel %vm226, %v2449, 0.0
        %v2457 = vperm.slane %v2444, 1
        %v2458 = vsel %vm213, %v2457, %v2450
        %v2459 = vsel %vm214, %v2457, %v2451
        %v2460 = vsel %vm215, %v2457, %v2452
        %v2461 = vsel %vm216, %v2457, %v2453
        %v2462 = vsel %vm217, %v2457, %v2454
        %v2463 = vsel %vm218, %v2457, %v2455
        %v2464 = vsel %vm219, %v2457, %v2456
        %v2465 = vadd.f32 %v2434, %v2458
        %v2466 = vadd.f32 %v2435, %v2459
        %v2467 = vadd.f32 %v2436, %v2460
        %v2468 = vadd.f32 %v2437, %v2461
        %v2469 = vadd.f32 %v2438, %v2462
        %v2470 = vadd.f32 %v2439, %v2463
        %v2471 = vadd.f32 %v2440, %v2464
        %2472 = vrot.lane.b32.xlu0 %v2385, 56
        %v2473 = vpop.permute.xlu0 %2472
        %v2474 = vsel %vm244, %v2473, %v2385
        %2475 = vrot.lane.b32.xlu0 %v2386, 56
        %v2476 = vpop.permute.xlu0 %2475
        %v2477 = vsel %vm244, %v2476, %v2386
        %2478 = vrot.lane.b32.xlu0 %v2387, 56
        %v2479 = vpop.permute.xlu0 %2478
        %v2480 = vsel %vm244, %v2479, %v2387
        %2481 = vrot.lane.b32.xlu0 %v2388, 56
        %v2482 = vpop.permute.xlu0 %2481
        %v2483 = vsel %vm244, %v2482, %v2388
        %2484 = vrot.lane.b32.xlu0 %v2389, 56
        %v2485 = vpop.permute.xlu0 %2484
        %v2486 = vsel %vm244, %v2485, %v2389
        %2487 = vrot.lane.b32.xlu0 %v2390, 56
        %v2488 = vpop.permute.xlu0 %2487
        %v2489 = vsel %vm244, %v2488, %v2390
        %2490 = vrot.lane.b32.xlu0 %v2391, 56
        %v2491 = vpop.permute.xlu0 %2490
        %v2492 = vsel %vm244, %v2491, %v2391
        %2493 = vrot.lane.b32.xlu0 %v2474, 56
        %v2494 = vpop.permute.xlu0 %2493
        %2495 = vrot.lane.b32.xlu0 %v2477, 56
        %v2496 = vpop.permute.xlu0 %2495
        %2497 = vrot.lane.b32.xlu0 %v2480, 56
        %v2498 = vpop.permute.xlu0 %2497
        %2499 = vrot.lane.b32.xlu0 %v2483, 56
        %v2500 = vpop.permute.xlu0 %2499
        %2501 = vrot.lane.b32.xlu0 %v2486, 56
        %v2502 = vpop.permute.xlu0 %2501
        %2503 = vrot.lane.b32.xlu0 %v2489, 56
        %v2504 = vpop.permute.xlu0 %2503
        %2505 = vrot.lane.b32.xlu0 %v2492, 56
        %v2506 = vpop.permute.xlu0 %2505
        %v2507 = vsel %vm244, %v2494, %v2385
        %v2508 = vsel %vm244, %v2496, %v2386
        %v2509 = vsel %vm244, %v2498, %v2387
        %v2510 = vsel %vm244, %v2500, %v2388
        %v2511 = vsel %vm244, %v2502, %v2389
        %v2512 = vsel %vm244, %v2504, %v2390
        %v2513 = vsel %vm244, %v2506, %v2391
        %v2514 = vmul.f32 %v2385, 2.0
        %v2515 = vmul.f32 %v2386, 2.0
        %v2516 = vmul.f32 %v2387, 2.0
        %v2517 = vmul.f32 %v2388, 2.0
        %v2518 = vmul.f32 %v2389, 2.0
        %v2519 = vmul.f32 %v2390, 2.0
        %v2520 = vmul.f32 %v2391, 2.0
        %2528 = vrot.lane.b32.xlu0 %v2514, 55
        %v2529 = vpop.permute.xlu0 %2528
        %2530 = vrot.lane.b32.xlu0 %v2515, 55
        %v2531 = vpop.permute.xlu0 %2530
        %2532 = vrot.lane.b32.xlu0 %v2516, 55
        %v2533 = vpop.permute.xlu0 %2532
        %2534 = vrot.lane.b32.xlu0 %v2517, 55
        %v2535 = vpop.permute.xlu0 %2534
        %2536 = vrot.lane.b32.xlu0 %v2518, 55
        %v2537 = vpop.permute.xlu0 %2536
        %2538 = vrot.lane.b32.xlu0 %v2519, 55
        %v2539 = vpop.permute.xlu0 %2538
        %2540 = vrot.lane.b32.xlu0 %v2520, 55
        %v2541 = vpop.permute.xlu0 %2540
        %v2549 = vadd.f32 %v2507, %v2529
        %v2550 = vadd.f32 %v2508, %v2531
        %v2551 = vadd.f32 %v2509, %v2533
        %v2552 = vadd.f32 %v2510, %v2535
        %v2553 = vadd.f32 %v2511, %v2537
        %v2554 = vadd.f32 %v2512, %v2539
        %v2555 = vadd.f32 %v2513, %v2541
        %2563 = vrot.lane.b32.xlu0 %v2507, 54
        %v2564 = vpop.permute.xlu0 %2563
        %2565 = vrot.lane.b32.xlu0 %v2508, 54
        %v2566 = vpop.permute.xlu0 %2565
        %2567 = vrot.lane.b32.xlu0 %v2509, 54
        %v2568 = vpop.permute.xlu0 %2567
        %2569 = vrot.lane.b32.xlu0 %v2510, 54
        %v2570 = vpop.permute.xlu0 %2569
        %2571 = vrot.lane.b32.xlu0 %v2511, 54
        %v2572 = vpop.permute.xlu0 %2571
        %2573 = vrot.lane.b32.xlu0 %v2512, 54
        %v2574 = vpop.permute.xlu0 %2573
        %2575 = vrot.lane.b32.xlu0 %v2513, 54
        %v2576 = vpop.permute.xlu0 %2575
        %v2584 = vadd.f32 %v2549, %v2564
        %v2585 = vadd.f32 %v2550, %v2566
        %v2586 = vadd.f32 %v2551, %v2568
        %v2587 = vadd.f32 %v2552, %v2570
        %v2588 = vadd.f32 %v2553, %v2572
        %v2589 = vadd.f32 %v2554, %v2574
        %v2590 = vadd.f32 %v2555, %v2576
        %2598 = vrot.lane.b32.xlu0 %v2385, 74
        %v2599 = vpop.permute.xlu0 %2598
        %2600 = vrot.lane.b32.xlu0 %v2386, 74
        %v2601 = vpop.permute.xlu0 %2600
        %2602 = vrot.lane.b32.xlu0 %v2387, 74
        %v2603 = vpop.permute.xlu0 %2602
        %2604 = vrot.lane.b32.xlu0 %v2388, 74
        %v2605 = vpop.permute.xlu0 %2604
        %2606 = vrot.lane.b32.xlu0 %v2389, 74
        %v2607 = vpop.permute.xlu0 %2606
        %2608 = vrot.lane.b32.xlu0 %v2390, 74
        %v2609 = vpop.permute.xlu0 %2608
        %2610 = vrot.lane.b32.xlu0 %v2391, 74
        %v2611 = vpop.permute.xlu0 %2610
        %v2619 = vsub.f32 %v2385, %v2599
        %v2620 = vsub.f32 %v2386, %v2601
        %v2621 = vsub.f32 %v2387, %v2603
        %v2622 = vsub.f32 %v2388, %v2605
        %v2623 = vsub.f32 %v2389, %v2607
        %v2624 = vsub.f32 %v2390, %v2609
        %v2625 = vsub.f32 %v2391, %v2611
        %2626 = vrot.lane.b32.xlu0 %v2385, 54
        %v2627 = vpop.permute.xlu0 %2626
        %2628 = vrot.lane.b32.xlu0 %v2386, 54
        %v2629 = vpop.permute.xlu0 %2628
        %2630 = vrot.lane.b32.xlu0 %v2387, 54
        %v2631 = vpop.permute.xlu0 %2630
        %2632 = vrot.lane.b32.xlu0 %v2388, 54
        %v2633 = vpop.permute.xlu0 %2632
        %2634 = vrot.lane.b32.xlu0 %v2389, 54
        %v2635 = vpop.permute.xlu0 %2634
        %2636 = vrot.lane.b32.xlu0 %v2390, 54
        %v2637 = vpop.permute.xlu0 %2636
        %2638 = vrot.lane.b32.xlu0 %v2391, 54
        %v2639 = vpop.permute.xlu0 %2638
        %v2647 = vsub.f32 %v2385, %v2627
        %v2648 = vsub.f32 %v2386, %v2629
        %v2649 = vsub.f32 %v2387, %v2631
        %v2650 = vsub.f32 %v2388, %v2633
        %v2651 = vsub.f32 %v2389, %v2635
        %v2652 = vsub.f32 %v2390, %v2637
        %v2653 = vsub.f32 %v2391, %v2639
        %2655 = vset.pattern.permute.xlu0 54
        %2656 = vperm.xlu0 %2655, %v2647
        %v2657 = vpop.permute.xlu0 %2656
        %2660 = vset.pattern.permute.xlu0 54
        %2661 = vperm.xlu0 %2660, %v2648
        %v2662 = vpop.permute.xlu0 %2661
        %2665 = vset.pattern.permute.xlu0 54
        %2666 = vperm.xlu0 %2665, %v2649
        %v2667 = vpop.permute.xlu0 %2666
        %2670 = vset.pattern.permute.xlu0 54
        %2671 = vperm.xlu0 %2670, %v2650
        %v2672 = vpop.permute.xlu0 %2671
        %2675 = vset.pattern.permute.xlu0 54
        %2676 = vperm.xlu0 %2675, %v2651
        %v2677 = vpop.permute.xlu0 %2676
        %2680 = vset.pattern.permute.xlu0 54
        %2681 = vperm.xlu0 %2680, %v2652
        %v2682 = vpop.permute.xlu0 %2681
        %2685 = vset.pattern.permute.xlu0 54
        %2686 = vperm.xlu0 %2685, %v2653
        %v2687 = vpop.permute.xlu0 %2686
        %v2689 = vsel %vm228, %v2657, 0.0
        %v2690 = vsel %vm228, %v2662, 0.0
        %v2691 = vsel %vm228, %v2667, 0.0
        %v2692 = vsel %vm228, %v2672, 0.0
        %v2693 = vsel %vm228, %v2677, 0.0
        %v2694 = vsel %vm228, %v2682, 0.0
        %v2695 = vsel %vm228, %v2687, 0.0
        %2697 = vset.pattern.permute.xlu0 1
        %2698 = vperm.xlu0 %2697, %v2619
        %v2699 = vpop.permute.xlu0 %2698
        %2702 = vset.pattern.permute.xlu0 1
        %2703 = vperm.xlu0 %2702, %v2620
        %v2704 = vpop.permute.xlu0 %2703
        %2707 = vset.pattern.permute.xlu0 1
        %2708 = vperm.xlu0 %2707, %v2621
        %v2709 = vpop.permute.xlu0 %2708
        %2712 = vset.pattern.permute.xlu0 1
        %2713 = vperm.xlu0 %2712, %v2622
        %v2714 = vpop.permute.xlu0 %2713
        %2717 = vset.pattern.permute.xlu0 1
        %2718 = vperm.xlu0 %2717, %v2623
        %v2719 = vpop.permute.xlu0 %2718
        %2722 = vset.pattern.permute.xlu0 1
        %2723 = vperm.xlu0 %2722, %v2624
        %v2724 = vpop.permute.xlu0 %2723
        %2727 = vset.pattern.permute.xlu0 1
        %2728 = vperm.xlu0 %2727, %v2625
        %v2729 = vpop.permute.xlu0 %2728
        %v2731 = vsel %vm227, %v2699, %v2689
        %v2732 = vsel %vm227, %v2704, %v2690
        %v2733 = vsel %vm227, %v2709, %v2691
        %v2734 = vsel %vm227, %v2714, %v2692
        %v2735 = vsel %vm227, %v2719, %v2693
        %v2736 = vsel %vm227, %v2724, %v2694
        %v2737 = vsel %vm227, %v2729, %v2695
        %2745 = vrot.lane.b32.xlu0 %v2731, 55
        %v2746 = vpop.permute.xlu0 %2745
        %2747 = vrot.lane.b32.xlu0 %v2732, 55
        %v2748 = vpop.permute.xlu0 %2747
        %2749 = vrot.lane.b32.xlu0 %v2733, 55
        %v2750 = vpop.permute.xlu0 %2749
        %2751 = vrot.lane.b32.xlu0 %v2734, 55
        %v2752 = vpop.permute.xlu0 %2751
        %2753 = vrot.lane.b32.xlu0 %v2735, 55
        %v2754 = vpop.permute.xlu0 %2753
        %2755 = vrot.lane.b32.xlu0 %v2736, 55
        %v2756 = vpop.permute.xlu0 %2755
        %2757 = vrot.lane.b32.xlu0 %v2737, 55
        %v2758 = vpop.permute.xlu0 %2757
        %v2766 = vadd.f32 %v2584, %v2746
        %v2767 = vadd.f32 %v2585, %v2748
        %v2768 = vadd.f32 %v2586, %v2750
        %v2769 = vadd.f32 %v2587, %v2752
        %v2770 = vadd.f32 %v2588, %v2754
        %v2771 = vadd.f32 %v2589, %v2756
        %v2772 = vadd.f32 %v2590, %v2758
        %v2773 = vmul.f32 %v2465, %v2465
        %v2774 = vmul.f32 %v2466, %v2466
        %v2775 = vmul.f32 %v2467, %v2467
        %v2776 = vmul.f32 %v2468, %v2468
        %v2777 = vmul.f32 %v2469, %v2469
        %v2778 = vmul.f32 %v2470, %v2470
        %v2779 = vmul.f32 %v2471, %v2471
        %v2780 = vmul.f32 %v2766, %v2766
        %v2781 = vmul.f32 %v2767, %v2767
        %v2782 = vmul.f32 %v2768, %v2768
        %v2783 = vmul.f32 %v2769, %v2769
        %v2784 = vmul.f32 %v2770, %v2770
        %v2785 = vmul.f32 %v2771, %v2771
        %v2786 = vmul.f32 %v2772, %v2772
        %2794 = vrot.lane.b32.xlu0 %v2780, 73
        %v2795 = vpop.permute.xlu0 %2794
        %2796 = vrot.lane.b32.xlu0 %v2781, 73
        %v2797 = vpop.permute.xlu0 %2796
        %2798 = vrot.lane.b32.xlu0 %v2782, 73
        %v2799 = vpop.permute.xlu0 %2798
        %2800 = vrot.lane.b32.xlu0 %v2783, 73
        %v2801 = vpop.permute.xlu0 %2800
        %2802 = vrot.lane.b32.xlu0 %v2784, 73
        %v2803 = vpop.permute.xlu0 %2802
        %2804 = vrot.lane.b32.xlu0 %v2785, 73
        %v2805 = vpop.permute.xlu0 %2804
        %2806 = vrot.lane.b32.xlu0 %v2786, 73
        %v2807 = vpop.permute.xlu0 %2806
        %v2815 = vadd.f32 %v2773, %v2795
        %v2816 = vadd.f32 %v2774, %v2797
        %v2817 = vadd.f32 %v2775, %v2799
        %v2818 = vadd.f32 %v2776, %v2801
        %v2819 = vadd.f32 %v2777, %v2803
        %v2820 = vadd.f32 %v2778, %v2805
        %v2821 = vadd.f32 %v2779, %v2807
        %v2822 = vrsqrt.pop %v2815
        %v2823 = vmul.f32 %v2822, %v2815
        %v2824 = vmul.f32 %v2823, %v2822
        %v2825 = vmul.f32 0.5, %v2824
        %v2826 = vsub.f32 1.5, %v2825
        %v2827 = vmul.f32 %v2822, %v2826
        %v2828 = vmul.f32 %v2815, %v2827
        %vm2829 = vcmp.eq.f32.partialorder %v2815, inf
        %v2830 = vsel %vm2829, %v2815, %v2828
        %vm2831 = vcmp.eq.f32.partialorder %v2815, 0.0
        %v2832 = vand.u32 %v2815, 2147483648
        %v2833 = vsel %vm2831, %v2832, %v2830
        %v2834 = vrsqrt.pop %v2816
        %v2835 = vmul.f32 %v2834, %v2816
        %v2836 = vmul.f32 %v2835, %v2834
        %v2837 = vmul.f32 0.5, %v2836
        %v2838 = vsub.f32 1.5, %v2837
        %v2839 = vmul.f32 %v2834, %v2838
        %v2840 = vmul.f32 %v2816, %v2839
        %vm2841 = vcmp.eq.f32.partialorder %v2816, inf
        %v2842 = vsel %vm2841, %v2816, %v2840
        %vm2843 = vcmp.eq.f32.partialorder %v2816, 0.0
        %v2844 = vand.u32 %v2816, 2147483648
        %v2845 = vsel %vm2843, %v2844, %v2842
        %v2846 = vrsqrt.pop %v2817
        %v2847 = vmul.f32 %v2846, %v2817
        %v2848 = vmul.f32 %v2847, %v2846
        %v2849 = vmul.f32 0.5, %v2848
        %v2850 = vsub.f32 1.5, %v2849
        %v2851 = vmul.f32 %v2846, %v2850
        %v2852 = vmul.f32 %v2817, %v2851
        %vm2853 = vcmp.eq.f32.partialorder %v2817, inf
        %v2854 = vsel %vm2853, %v2817, %v2852
        %vm2855 = vcmp.eq.f32.partialorder %v2817, 0.0
        %v2856 = vand.u32 %v2817, 2147483648
        %v2857 = vsel %vm2855, %v2856, %v2854
        %v2858 = vrsqrt.pop %v2818
        %v2859 = vmul.f32 %v2858, %v2818
        %v2860 = vmul.f32 %v2859, %v2858
        %v2861 = vmul.f32 0.5, %v2860
        %v2862 = vsub.f32 1.5, %v2861
        %v2863 = vmul.f32 %v2858, %v2862
        %v2864 = vmul.f32 %v2818, %v2863
        %vm2865 = vcmp.eq.f32.partialorder %v2818, inf
        %v2866 = vsel %vm2865, %v2818, %v2864
        %vm2867 = vcmp.eq.f32.partialorder %v2818, 0.0
        %v2868 = vand.u32 %v2818, 2147483648
        %v2869 = vsel %vm2867, %v2868, %v2866
        %v2870 = vrsqrt.pop %v2819
        %v2871 = vmul.f32 %v2870, %v2819
        %v2872 = vmul.f32 %v2871, %v2870
        %v2873 = vmul.f32 0.5, %v2872
        %v2874 = vsub.f32 1.5, %v2873
        %v2875 = vmul.f32 %v2870, %v2874
        %v2876 = vmul.f32 %v2819, %v2875
        %vm2877 = vcmp.eq.f32.partialorder %v2819, inf
        %v2878 = vsel %vm2877, %v2819, %v2876
        %vm2879 = vcmp.eq.f32.partialorder %v2819, 0.0
        %v2880 = vand.u32 %v2819, 2147483648
        %v2881 = vsel %vm2879, %v2880, %v2878
        %v2882 = vrsqrt.pop %v2820
        %v2883 = vmul.f32 %v2882, %v2820
        %v2884 = vmul.f32 %v2883, %v2882
        %v2885 = vmul.f32 0.5, %v2884
        %v2886 = vsub.f32 1.5, %v2885
        %v2887 = vmul.f32 %v2882, %v2886
        %v2888 = vmul.f32 %v2820, %v2887
        %vm2889 = vcmp.eq.f32.partialorder %v2820, inf
        %v2890 = vsel %vm2889, %v2820, %v2888
        %vm2891 = vcmp.eq.f32.partialorder %v2820, 0.0
        %v2892 = vand.u32 %v2820, 2147483648
        %v2893 = vsel %vm2891, %v2892, %v2890
        %v2894 = vrsqrt.pop %v2821
        %v2895 = vmul.f32 %v2894, %v2821
        %v2896 = vmul.f32 %v2895, %v2894
        %v2897 = vmul.f32 0.5, %v2896
        %v2898 = vsub.f32 1.5, %v2897
        %v2899 = vmul.f32 %v2894, %v2898
        %v2900 = vmul.f32 %v2821, %v2899
        %vm2901 = vcmp.eq.f32.partialorder %v2821, inf
        %v2902 = vsel %vm2901, %v2821, %v2900
        %vm2903 = vcmp.eq.f32.partialorder %v2821, 0.0
        %v2904 = vand.u32 %v2821, 2147483648
        %v2905 = vsel %vm2903, %v2904, %v2902
        %v2906 = vrcp.pop %v2465
        %v2907 = vrcp.pop %v2466
        %v2908 = vrcp.pop %v2467
        %v2909 = vrcp.pop %v2468
        %v2910 = vrcp.pop %v2469
        %v2911 = vrcp.pop %v2470
        %v2912 = vrcp.pop %v2471
        %2920 = vrot.lane.b32.xlu0 %v2906, 55
        %v2921 = vpop.permute.xlu0 %2920
        %2922 = vrot.lane.b32.xlu0 %v2907, 55
        %v2923 = vpop.permute.xlu0 %2922
        %2924 = vrot.lane.b32.xlu0 %v2908, 55
        %v2925 = vpop.permute.xlu0 %2924
        %2926 = vrot.lane.b32.xlu0 %v2909, 55
        %v2927 = vpop.permute.xlu0 %2926
        %2928 = vrot.lane.b32.xlu0 %v2910, 55
        %v2929 = vpop.permute.xlu0 %2928
        %2930 = vrot.lane.b32.xlu0 %v2911, 55
        %v2931 = vpop.permute.xlu0 %2930
        %2932 = vrot.lane.b32.xlu0 %v2912, 55
        %v2933 = vpop.permute.xlu0 %2932
        %v2941 = vmul.f32 %v2766, %v2921
        %v2942 = vmul.f32 %v2767, %v2923
        %v2943 = vmul.f32 %v2768, %v2925
        %v2944 = vmul.f32 %v2769, %v2927
        %v2945 = vmul.f32 %v2770, %v2929
        %v2946 = vmul.f32 %v2771, %v2931
        %v2947 = vmul.f32 %v2772, %v2933
        %vm2948 = vcmp.eq.f32.partialorder %v2465, 0.0
        %vm2949 = vcmp.eq.f32.partialorder %v2466, 0.0
        %vm2950 = vcmp.eq.f32.partialorder %v2467, 0.0
        %vm2951 = vcmp.eq.f32.partialorder %v2468, 0.0
        %vm2952 = vcmp.eq.f32.partialorder %v2469, 0.0
        %vm2953 = vcmp.eq.f32.partialorder %v2470, 0.0
        %vm2954 = vcmp.eq.f32.partialorder %v2471, 0.0
        %vm2955 = vmxor %vm2948, 1
        %vm2956 = vmxor %vm2949, 1
        %vm2957 = vmxor %vm2950, 1
        %vm2958 = vmxor %vm2951, 1
        %vm2959 = vmxor %vm2952, 1
        %vm2960 = vmxor %vm2953, 1
        %vm2961 = vmxor %vm2954, 1
        %vm2962 = vcmp.le.f32.partialorder %v2941, 2.7474775
        %vm2963 = vcmp.le.f32.partialorder %v2942, 2.7474775
        %vm2964 = vcmp.le.f32.partialorder %v2943, 2.7474775
        %vm2965 = vcmp.le.f32.partialorder %v2944, 2.7474775
        %vm2966 = vcmp.le.f32.partialorder %v2945, 2.7474775
        %vm2967 = vcmp.le.f32.partialorder %v2946, 2.7474775
        %vm2968 = vcmp.le.f32.partialorder %v2947, 2.7474775
        %vm2969 = vcmp.le.f32.partialorder %v2941, 1.1917536
        %vm2970 = vcmp.le.f32.partialorder %v2942, 1.1917536
        %vm2971 = vcmp.le.f32.partialorder %v2943, 1.1917536
        %vm2972 = vcmp.le.f32.partialorder %v2944, 1.1917536
        %vm2973 = vcmp.le.f32.partialorder %v2945, 1.1917536
        %vm2974 = vcmp.le.f32.partialorder %v2946, 1.1917536
        %vm2975 = vcmp.le.f32.partialorder %v2947, 1.1917536
        %vm2976 = vcmp.le.f32.partialorder %v2941, 0.57735026
        %vm2977 = vcmp.le.f32.partialorder %v2942, 0.57735026
        %vm2978 = vcmp.le.f32.partialorder %v2943, 0.57735026
        %vm2979 = vcmp.le.f32.partialorder %v2944, 0.57735026
        %vm2980 = vcmp.le.f32.partialorder %v2945, 0.57735026
        %vm2981 = vcmp.le.f32.partialorder %v2946, 0.57735026
        %vm2982 = vcmp.le.f32.partialorder %v2947, 0.57735026
        %vm2983 = vcmp.le.f32.partialorder %v2941, 0.17632698
        %vm2984 = vcmp.le.f32.partialorder %v2942, 0.17632698
        %vm2985 = vcmp.le.f32.partialorder %v2943, 0.17632698
        %vm2986 = vcmp.le.f32.partialorder %v2944, 0.17632698
        %vm2987 = vcmp.le.f32.partialorder %v2945, 0.17632698
        %vm2988 = vcmp.le.f32.partialorder %v2946, 0.17632698
        %vm2989 = vcmp.le.f32.partialorder %v2947, 0.17632698
        %vm2990 = vcmp.le.f32.partialorder %v2941, -0.17632698
        %vm2991 = vcmp.le.f32.partialorder %v2942, -0.17632698
        %vm2992 = vcmp.le.f32.partialorder %v2943, -0.17632698
        %vm2993 = vcmp.le.f32.partialorder %v2944, -0.17632698
        %vm2994 = vcmp.le.f32.partialorder %v2945, -0.17632698
        %vm2995 = vcmp.le.f32.partialorder %v2946, -0.17632698
        %vm2996 = vcmp.le.f32.partialorder %v2947, -0.17632698
        %vm2997 = vcmp.le.f32.partialorder %v2941, -0.57735026
        %vm2998 = vcmp.le.f32.partialorder %v2942, -0.57735026
        %vm2999 = vcmp.le.f32.partialorder %v2943, -0.57735026
        %vm3000 = vcmp.le.f32.partialorder %v2944, -0.57735026
        %vm3001 = vcmp.le.f32.partialorder %v2945, -0.57735026
        %vm3002 = vcmp.le.f32.partialorder %v2946, -0.57735026
        %vm3003 = vcmp.le.f32.partialorder %v2947, -0.57735026
        %vm3004 = vcmp.le.f32.partialorder %v2941, -1.1917536
        %vm3005 = vcmp.le.f32.partialorder %v2942, -1.1917536
        %vm3006 = vcmp.le.f32.partialorder %v2943, -1.1917536
        %vm3007 = vcmp.le.f32.partialorder %v2944, -1.1917536
        %vm3008 = vcmp.le.f32.partialorder %v2945, -1.1917536
        %vm3009 = vcmp.le.f32.partialorder %v2946, -1.1917536
        %vm3010 = vcmp.le.f32.partialorder %v2947, -1.1917536
        %vm3011 = vcmp.le.f32.partialorder %v2941, -2.7474775
        %vm3012 = vcmp.le.f32.partialorder %v2942, -2.7474775
        %vm3013 = vcmp.le.f32.partialorder %v2943, -2.7474775
        %vm3014 = vcmp.le.f32.partialorder %v2944, -2.7474775
        %vm3015 = vcmp.le.f32.partialorder %v2945, -2.7474775
        %vm3016 = vcmp.le.f32.partialorder %v2946, -2.7474775
        %vm3017 = vcmp.le.f32.partialorder %v2947, -2.7474775
        %vm3018 = vmxor %vm2962, 1
        %vm3019 = vmxor %vm2963, 1
        %vm3020 = vmxor %vm2964, 1
        %vm3021 = vmxor %vm2965, 1
        %vm3022 = vmxor %vm2966, 1
        %vm3023 = vmxor %vm2967, 1
        %vm3024 = vmxor %vm2968, 1
        %v3025 = vsel %vm2948, 1, 0
        %v3026 = vsel %vm2949, 1, 0
        %v3027 = vsel %vm2950, 1, 0
        %v3028 = vsel %vm2951, 1, 0
        %v3029 = vsel %vm2952, 1, 0
        %v3030 = vsel %vm2953, 1, 0
        %v3031 = vsel %vm2954, 1, 0
        %3032 = vrot.lane.b32.xlu0 %v3025, 55
        %v3033 = vpop.permute.xlu0 %3032
        %3034 = vrot.lane.b32.xlu0 %v3026, 55
        %v3035 = vpop.permute.xlu0 %3034
        %3036 = vrot.lane.b32.xlu0 %v3027, 55
        %v3037 = vpop.permute.xlu0 %3036
        %3038 = vrot.lane.b32.xlu0 %v3028, 55
        %v3039 = vpop.permute.xlu0 %3038
        %3040 = vrot.lane.b32.xlu0 %v3029, 55
        %v3041 = vpop.permute.xlu0 %3040
        %3042 = vrot.lane.b32.xlu0 %v3030, 55
        %v3043 = vpop.permute.xlu0 %3042
        %3044 = vrot.lane.b32.xlu0 %v3031, 55
        %v3045 = vpop.permute.xlu0 %3044
        %vm3046 = vcmp.ne.s32.totalorder %v3033, 0
        %vm3047 = vcmp.ne.s32.totalorder %v3035, 0
        %vm3048 = vcmp.ne.s32.totalorder %v3037, 0
        %vm3049 = vcmp.ne.s32.totalorder %v3039, 0
        %vm3050 = vcmp.ne.s32.totalorder %v3041, 0
        %vm3051 = vcmp.ne.s32.totalorder %v3043, 0
        %vm3052 = vcmp.ne.s32.totalorder %v3045, 0
        %vm3053 = vmor %vm3018, %vm3046
        %vm3054 = vmor %vm3019, %vm3047
        %vm3055 = vmor %vm3020, %vm3048
        %vm3056 = vmor %vm3021, %vm3049
        %vm3057 = vmor %vm3022, %vm3050
        %vm3058 = vmor %vm3023, %vm3051
        %vm3059 = vmor %vm3024, %vm3052
        %3067 = vrot.lane.b32.xlu0 %v2833, 55
        %v3068 = vpop.permute.xlu0 %3067
        %3069 = vrot.lane.b32.xlu0 %v2845, 55
        %v3070 = vpop.permute.xlu0 %3069
        %3071 = vrot.lane.b32.xlu0 %v2857, 55
        %v3072 = vpop.permute.xlu0 %3071
        %3073 = vrot.lane.b32.xlu0 %v2869, 55
        %v3074 = vpop.permute.xlu0 %3073
        %3075 = vrot.lane.b32.xlu0 %v2881, 55
        %v3076 = vpop.permute.xlu0 %3075
        %3077 = vrot.lane.b32.xlu0 %v2893, 55
        %v3078 = vpop.permute.xlu0 %3077
        %3079 = vrot.lane.b32.xlu0 %v2905, 55
        %v3080 = vpop.permute.xlu0 %3079
        %v3088 = vsel %vm3053, %v3068, 0.0
        %v3089 = vsel %vm3054, %v3070, 0.0
        %v3090 = vsel %vm3055, %v3072, 0.0
        %v3091 = vsel %vm3056, %v3074, 0.0
        %v3092 = vsel %vm3057, %v3076, 0.0
        %v3093 = vsel %vm3058, %v3078, 0.0
        %v3094 = vsel %vm3059, %v3080, 0.0
        %3102 = vrot.lane.b32.xlu0 %v3088, 73
        %v3103 = vpop.permute.xlu0 %3102
        %3104 = vrot.lane.b32.xlu0 %v3089, 73
        %v3105 = vpop.permute.xlu0 %3104
        %3106 = vrot.lane.b32.xlu0 %v3090, 73
        %v3107 = vpop.permute.xlu0 %3106
        %3108 = vrot.lane.b32.xlu0 %v3091, 73
        %v3109 = vpop.permute.xlu0 %3108
        %3110 = vrot.lane.b32.xlu0 %v3092, 73
        %v3111 = vpop.permute.xlu0 %3110
        %3112 = vrot.lane.b32.xlu0 %v3093, 73
        %v3113 = vpop.permute.xlu0 %3112
        %3114 = vrot.lane.b32.xlu0 %v3094, 73
        %v3115 = vpop.permute.xlu0 %3114
        %v3116 = vsel %vm1125, %v3103, 0
        %v3118 = vsel %vm1125, %v3105, 0
        %v3120 = vsel %vm1125, %v3107, 0
        %v3122 = vsel %vm1125, %v3109, 0
        %v3124 = vsel %vm1125, %v3111, 0
        %v3126 = vsel %vm1125, %v3113, 0
        %v3128 = vsel %vm1125, %v3115, 0
        %3130 = vmatpush.msra.mxu0 0.0
        %3131 = vmatpush.msra.mxu0 0.0
        %3132 = vmatpush.msra.mxu0 0.0
        %3133 = vmatpush.msra.mxu0 0.0
        %3134 = vmatpush.msra.mxu0 0.0
        %3135 = vmatpush.msra.mxu0 0.0
        %3136 = vmatpush.msra.mxu0 0.0
        %3137 = vmatpush.msra.mxu0 0.0
        %3138 = vmatpush.msra.mxu0 0.0
        %3139 = vmatpush.msra.mxu0 %v201
        %3140 = vmatpush.msra.mxu0 %v200
        %3141 = vmatpush.msra.mxu0 %v199
        %3142 = vmatpush.msra.mxu0 %v198
        %3143 = vmatpush.msra.mxu0 %v197
        %3144 = vmatpush.msra.mxu0 %v196
        %3145 = vmatpush.msra.mxu0 %v195
        %3146 = vmatmul.f32.gmra.mxu0 %v3116
        %v3147 = vpop.f32.mrf.mxu0
        %v3148 = vadd.f32 0.0, %v3147
        %3149 = vmatmul.f32.gmra.mxu0 %v3118
        %v3150 = vpop.f32.mrf.mxu0
        %v3151 = vadd.f32 0.0, %v3150
        %3152 = vmatmul.f32.gmra.mxu0 %v3120
        %v3153 = vpop.f32.mrf.mxu0
        %v3154 = vadd.f32 0.0, %v3153
        %3155 = vmatmul.f32.gmra.mxu0 %v3122
        %v3156 = vpop.f32.mrf.mxu0
        %v3157 = vadd.f32 0.0, %v3156
        %3158 = vmatmul.f32.gmra.mxu0 %v3124
        %v3159 = vpop.f32.mrf.mxu0
        %v3160 = vadd.f32 0.0, %v3159
        %3161 = vmatmul.f32.gmra.mxu0 %v3126
        %v3162 = vpop.f32.mrf.mxu0
        %v3163 = vadd.f32 0.0, %v3162
        %3164 = vmatmul.f32.gmra.mxu0 %v3128
        %v3165 = vpop.f32.mrf.mxu0
        %v3166 = vadd.f32 0.0, %v3165
        %3167 = vdwg.mxu0
        %3168 = vmatpush.msra.mxu0 0.0
        %3169 = vmatpush.msra.mxu0 0.0
        %3170 = vmatpush.msra.mxu0 0.0
        %3171 = vmatpush.msra.mxu0 0.0
        %3172 = vmatpush.msra.mxu0 0.0
        %3173 = vmatpush.msra.mxu0 0.0
        %3174 = vmatpush.msra.mxu0 0.0
        %3175 = vmatpush.msra.mxu0 0.0
        %3176 = vmatpush.msra.mxu0 0.0
        %3177 = vmatpush.msra.mxu0 %v3166
        %3178 = vmatpush.msra.mxu0 %v3163
        %3179 = vmatpush.msra.mxu0 %v3160
        %3180 = vmatpush.msra.mxu0 %v3157
        %3181 = vmatpush.msra.mxu0 %v3154
        %3182 = vmatpush.msra.mxu0 %v3151
        %3183 = vmatpush.msra.mxu0 %v3148
        %3184 = vmatmul.f32.gmra.mxu0 %v1179
        %v3185 = vpop.f32.mrf.mxu0
        %v3186 = vadd.f32 0.0, %v3185
        %3187 = vdwg.mxu0
        %v3188 = vmul.f32 %v3186, %v3186
        %vm3189 = vmxor %vm2969, 1
        %vm3190 = vmxor %vm2970, 1
        %vm3191 = vmxor %vm2971, 1
        %vm3192 = vmxor %vm2972, 1
        %vm3193 = vmxor %vm2973, 1
        %vm3194 = vmxor %vm2974, 1
        %vm3195 = vmxor %vm2975, 1
        %vm3196 = vmand %vm2962, %vm3189
        %vm3197 = vmand %vm2963, %vm3190
        %vm3198 = vmand %vm2964, %vm3191
        %vm3199 = vmand %vm2965, %vm3192
        %vm3200 = vmand %vm2966, %vm3193
        %vm3201 = vmand %vm2967, %vm3194
        %vm3202 = vmand %vm2968, %vm3195
        %v3203 = vsel %vm2955, 1, 0
        %v3204 = vsel %vm2956, 1, 0
        %v3205 = vsel %vm2957, 1, 0
        %v3206 = vsel %vm2958, 1, 0
        %v3207 = vsel %vm2959, 1, 0
        %v3208 = vsel %vm2960, 1, 0
        %v3209 = vsel %vm2961, 1, 0
        %3210 = vrot.lane.b32.xlu0 %v3203, 55
        %v3211 = vpop.permute.xlu0 %3210
        %3212 = vrot.lane.b32.xlu0 %v3204, 55
        %v3213 = vpop.permute.xlu0 %3212
        %3214 = vrot.lane.b32.xlu0 %v3205, 55
        %v3215 = vpop.permute.xlu0 %3214
        %3216 = vrot.lane.b32.xlu0 %v3206, 55
        %v3217 = vpop.permute.xlu0 %3216
        %3218 = vrot.lane.b32.xlu0 %v3207, 55
        %v3219 = vpop.permute.xlu0 %3218
        %3220 = vrot.lane.b32.xlu0 %v3208, 55
        %v3221 = vpop.permute.xlu0 %3220
        %3222 = vrot.lane.b32.xlu0 %v3209, 55
        %v3223 = vpop.permute.xlu0 %3222
        %vm3224 = vcmp.ne.s32.totalorder %v3211, 0
        %vm3225 = vcmp.ne.s32.totalorder %v3213, 0
        %vm3226 = vcmp.ne.s32.totalorder %v3215, 0
        %vm3227 = vcmp.ne.s32.totalorder %v3217, 0
        %vm3228 = vcmp.ne.s32.totalorder %v3219, 0
        %vm3229 = vcmp.ne.s32.totalorder %v3221, 0
        %vm3230 = vcmp.ne.s32.totalorder %v3223, 0
        %vm3231 = vmand %vm3196, %vm3224
        %vm3232 = vmand %vm3197, %vm3225
        %vm3233 = vmand %vm3198, %vm3226
        %vm3234 = vmand %vm3199, %vm3227
        %vm3235 = vmand %vm3200, %vm3228
        %vm3236 = vmand %vm3201, %vm3229
        %vm3237 = vmand %vm3202, %vm3230
        %v3238 = vsel %vm3231, %v3068, 0.0
        %v3239 = vsel %vm3232, %v3070, 0.0
        %v3240 = vsel %vm3233, %v3072, 0.0
        %v3241 = vsel %vm3234, %v3074, 0.0
        %v3242 = vsel %vm3235, %v3076, 0.0
        %v3243 = vsel %vm3236, %v3078, 0.0
        %v3244 = vsel %vm3237, %v3080, 0.0
        %3252 = vrot.lane.b32.xlu0 %v3238, 73
        %v3253 = vpop.permute.xlu0 %3252
        %3254 = vrot.lane.b32.xlu0 %v3239, 73
        %v3255 = vpop.permute.xlu0 %3254
        %3256 = vrot.lane.b32.xlu0 %v3240, 73
        %v3257 = vpop.permute.xlu0 %3256
        %3258 = vrot.lane.b32.xlu0 %v3241, 73
        %v3259 = vpop.permute.xlu0 %3258
        %3260 = vrot.lane.b32.xlu0 %v3242, 73
        %v3261 = vpop.permute.xlu0 %3260
        %3262 = vrot.lane.b32.xlu0 %v3243, 73
        %v3263 = vpop.permute.xlu0 %3262
        %3264 = vrot.lane.b32.xlu0 %v3244, 73
        %v3265 = vpop.permute.xlu0 %3264
        %v3266 = vsel %vm1125, %v3253, 0
        %v3268 = vsel %vm1125, %v3255, 0
        %v3270 = vsel %vm1125, %v3257, 0
        %v3272 = vsel %vm1125, %v3259, 0
        %v3274 = vsel %vm1125, %v3261, 0
        %v3276 = vsel %vm1125, %v3263, 0
        %v3278 = vsel %vm1125, %v3265, 0
        %3280 = vmatpush.msra.mxu0 0.0
        %3281 = vmatpush.msra.mxu0 0.0
        %3282 = vmatpush.msra.mxu0 0.0
        %3283 = vmatpush.msra.mxu0 0.0
        %3284 = vmatpush.msra.mxu0 0.0
        %3285 = vmatpush.msra.mxu0 0.0
        %3286 = vmatpush.msra.mxu0 0.0
        %3287 = vmatpush.msra.mxu0 0.0
        %3288 = vmatpush.msra.mxu0 0.0
        %3289 = vmatpush.msra.mxu0 %v201
        %3290 = vmatpush.msra.mxu0 %v200
        %3291 = vmatpush.msra.mxu0 %v199
        %3292 = vmatpush.msra.mxu0 %v198
        %3293 = vmatpush.msra.mxu0 %v197
        %3294 = vmatpush.msra.mxu0 %v196
        %3295 = vmatpush.msra.mxu0 %v195
        %3296 = vmatmul.f32.gmra.mxu0 %v3266
        %v3297 = vpop.f32.mrf.mxu0
        %v3298 = vadd.f32 0.0, %v3297
        %3299 = vmatmul.f32.gmra.mxu0 %v3268
        %v3300 = vpop.f32.mrf.mxu0
        %v3301 = vadd.f32 0.0, %v3300
        %3302 = vmatmul.f32.gmra.mxu0 %v3270
        %v3303 = vpop.f32.mrf.mxu0
        %v3304 = vadd.f32 0.0, %v3303
        %3305 = vmatmul.f32.gmra.mxu0 %v3272
        %v3306 = vpop.f32.mrf.mxu0
        %v3307 = vadd.f32 0.0, %v3306
        %3308 = vmatmul.f32.gmra.mxu0 %v3274
        %v3309 = vpop.f32.mrf.mxu0
        %v3310 = vadd.f32 0.0, %v3309
        %3311 = vmatmul.f32.gmra.mxu0 %v3276
        %v3312 = vpop.f32.mrf.mxu0
        %v3313 = vadd.f32 0.0, %v3312
        %3314 = vmatmul.f32.gmra.mxu0 %v3278
        %v3315 = vpop.f32.mrf.mxu0
        %v3316 = vadd.f32 0.0, %v3315
        %3317 = vdwg.mxu0
        %3318 = vmatpush.msra.mxu0 0.0
        %3319 = vmatpush.msra.mxu0 0.0
        %3320 = vmatpush.msra.mxu0 0.0
        %3321 = vmatpush.msra.mxu0 0.0
        %3322 = vmatpush.msra.mxu0 0.0
        %3323 = vmatpush.msra.mxu0 0.0
        %3324 = vmatpush.msra.mxu0 0.0
        %3325 = vmatpush.msra.mxu0 0.0
        %3326 = vmatpush.msra.mxu0 0.0
        %3327 = vmatpush.msra.mxu0 %v3316
        %3328 = vmatpush.msra.mxu0 %v3313
        %3329 = vmatpush.msra.mxu0 %v3310
        %3330 = vmatpush.msra.mxu0 %v3307
        %3331 = vmatpush.msra.mxu0 %v3304
        %3332 = vmatpush.msra.mxu0 %v3301
        %3333 = vmatpush.msra.mxu0 %v3298
        %3334 = vmatmul.f32.gmra.mxu0 %v1179
        %v3335 = vpop.f32.mrf.mxu0
        %v3336 = vadd.f32 0.0, %v3335
        %3337 = vdwg.mxu0
        %v3338 = vmul.f32 %v3336, %v3336
        %v3339 = vadd.f32 %v3188, %v3338
        %vm3340 = vmxor %vm2976, 1
        %vm3341 = vmxor %vm2977, 1
        %vm3342 = vmxor %vm2978, 1
        %vm3343 = vmxor %vm2979, 1
        %vm3344 = vmxor %vm2980, 1
        %vm3345 = vmxor %vm2981, 1
        %vm3346 = vmxor %vm2982, 1
        %vm3347 = vmand %vm2969, %vm3340
        %vm3348 = vmand %vm2970, %vm3341
        %vm3349 = vmand %vm2971, %vm3342
        %vm3350 = vmand %vm2972, %vm3343
        %vm3351 = vmand %vm2973, %vm3344
        %vm3352 = vmand %vm2974, %vm3345
        %vm3353 = vmand %vm2975, %vm3346
        %vm3354 = vmand %vm3347, %vm3224
        %vm3355 = vmand %vm3348, %vm3225
        %vm3356 = vmand %vm3349, %vm3226
        %vm3357 = vmand %vm3350, %vm3227
        %vm3358 = vmand %vm3351, %vm3228
        %vm3359 = vmand %vm3352, %vm3229
        %vm3360 = vmand %vm3353, %vm3230
        %v3361 = vsel %vm3354, %v3068, 0.0
        %v3362 = vsel %vm3355, %v3070, 0.0
        %v3363 = vsel %vm3356, %v3072, 0.0
        %v3364 = vsel %vm3357, %v3074, 0.0
        %v3365 = vsel %vm3358, %v3076, 0.0
        %v3366 = vsel %vm3359, %v3078, 0.0
        %v3367 = vsel %vm3360, %v3080, 0.0
        %3375 = vrot.lane.b32.xlu0 %v3361, 73
        %v3376 = vpop.permute.xlu0 %3375
        %3377 = vrot.lane.b32.xlu0 %v3362, 73
        %v3378 = vpop.permute.xlu0 %3377
        %3379 = vrot.lane.b32.xlu0 %v3363, 73
        %v3380 = vpop.permute.xlu0 %3379
        %3381 = vrot.lane.b32.xlu0 %v3364, 73
        %v3382 = vpop.permute.xlu0 %3381
        %3383 = vrot.lane.b32.xlu0 %v3365, 73
        %v3384 = vpop.permute.xlu0 %3383
        %3385 = vrot.lane.b32.xlu0 %v3366, 73
        %v3386 = vpop.permute.xlu0 %3385
        %3387 = vrot.lane.b32.xlu0 %v3367, 73
        %v3388 = vpop.permute.xlu0 %3387
        %v3389 = vsel %vm1125, %v3376, 0
        %v3391 = vsel %vm1125, %v3378, 0
        %v3393 = vsel %vm1125, %v3380, 0
        %v3395 = vsel %vm1125, %v3382, 0
        %v3397 = vsel %vm1125, %v3384, 0
        %v3399 = vsel %vm1125, %v3386, 0
        %v3401 = vsel %vm1125, %v3388, 0
        %3403 = vmatpush.msra.mxu0 0.0
        %3404 = vmatpush.msra.mxu0 0.0
        %3405 = vmatpush.msra.mxu0 0.0
        %3406 = vmatpush.msra.mxu0 0.0
        %3407 = vmatpush.msra.mxu0 0.0
        %3408 = vmatpush.msra.mxu0 0.0
        %3409 = vmatpush.msra.mxu0 0.0
        %3410 = vmatpush.msra.mxu0 0.0
        %3411 = vmatpush.msra.mxu0 0.0
        %3412 = vmatpush.msra.mxu0 %v201
        %3413 = vmatpush.msra.mxu0 %v200
        %3414 = vmatpush.msra.mxu0 %v199
        %3415 = vmatpush.msra.mxu0 %v198
        %3416 = vmatpush.msra.mxu0 %v197
        %3417 = vmatpush.msra.mxu0 %v196
        %3418 = vmatpush.msra.mxu0 %v195
        %3419 = vmatmul.f32.gmra.mxu0 %v3389
        %v3420 = vpop.f32.mrf.mxu0
        %v3421 = vadd.f32 0.0, %v3420
        %3422 = vmatmul.f32.gmra.mxu0 %v3391
        %v3423 = vpop.f32.mrf.mxu0
        %v3424 = vadd.f32 0.0, %v3423
        %3425 = vmatmul.f32.gmra.mxu0 %v3393
        %v3426 = vpop.f32.mrf.mxu0
        %v3427 = vadd.f32 0.0, %v3426
        %3428 = vmatmul.f32.gmra.mxu0 %v3395
        %v3429 = vpop.f32.mrf.mxu0
        %v3430 = vadd.f32 0.0, %v3429
        %3431 = vmatmul.f32.gmra.mxu0 %v3397
        %v3432 = vpop.f32.mrf.mxu0
        %v3433 = vadd.f32 0.0, %v3432
        %3434 = vmatmul.f32.gmra.mxu0 %v3399
        %v3435 = vpop.f32.mrf.mxu0
        %v3436 = vadd.f32 0.0, %v3435
        %3437 = vmatmul.f32.gmra.mxu0 %v3401
        %v3438 = vpop.f32.mrf.mxu0
        %v3439 = vadd.f32 0.0, %v3438
        %3440 = vdwg.mxu0
        %3441 = vmatpush.msra.mxu0 0.0
        %3442 = vmatpush.msra.mxu0 0.0
        %3443 = vmatpush.msra.mxu0 0.0
        %3444 = vmatpush.msra.mxu0 0.0
        %3445 = vmatpush.msra.mxu0 0.0
        %3446 = vmatpush.msra.mxu0 0.0
        %3447 = vmatpush.msra.mxu0 0.0
        %3448 = vmatpush.msra.mxu0 0.0
        %3449 = vmatpush.msra.mxu0 0.0
        %3450 = vmatpush.msra.mxu0 %v3439
        %3451 = vmatpush.msra.mxu0 %v3436
        %3452 = vmatpush.msra.mxu0 %v3433
        %3453 = vmatpush.msra.mxu0 %v3430
        %3454 = vmatpush.msra.mxu0 %v3427
        %3455 = vmatpush.msra.mxu0 %v3424
        %3456 = vmatpush.msra.mxu0 %v3421
        %3457 = vmatmul.f32.gmra.mxu0 %v1179
        %v3458 = vpop.f32.mrf.mxu0
        %v3459 = vadd.f32 0.0, %v3458
        %3460 = vdwg.mxu0
        %v3461 = vmul.f32 %v3459, %v3459
        %v3462 = vadd.f32 %v3339, %v3461
        %vm3463 = vmxor %vm2983, 1
        %vm3464 = vmxor %vm2984, 1
        %vm3465 = vmxor %vm2985, 1
        %vm3466 = vmxor %vm2986, 1
        %vm3467 = vmxor %vm2987, 1
        %vm3468 = vmxor %vm2988, 1
        %vm3469 = vmxor %vm2989, 1
        %vm3470 = vmand %vm2976, %vm3463
        %vm3471 = vmand %vm2977, %vm3464
        %vm3472 = vmand %vm2978, %vm3465
        %vm3473 = vmand %vm2979, %vm3466
        %vm3474 = vmand %vm2980, %vm3467
        %vm3475 = vmand %vm2981, %vm3468
        %vm3476 = vmand %vm2982, %vm3469
        %vm3477 = vmand %vm3470, %vm3224
        %vm3478 = vmand %vm3471, %vm3225
        %vm3479 = vmand %vm3472, %vm3226
        %vm3480 = vmand %vm3473, %vm3227
        %vm3481 = vmand %vm3474, %vm3228
        %vm3482 = vmand %vm3475, %vm3229
        %vm3483 = vmand %vm3476, %vm3230
        %v3484 = vsel %vm3477, %v3068, 0.0
        %v3485 = vsel %vm3478, %v3070, 0.0
        %v3486 = vsel %vm3479, %v3072, 0.0
        %v3487 = vsel %vm3480, %v3074, 0.0
        %v3488 = vsel %vm3481, %v3076, 0.0
        %v3489 = vsel %vm3482, %v3078, 0.0
        %v3490 = vsel %vm3483, %v3080, 0.0
        %3498 = vrot.lane.b32.xlu0 %v3484, 73
        %v3499 = vpop.permute.xlu0 %3498
        %3500 = vrot.lane.b32.xlu0 %v3485, 73
        %v3501 = vpop.permute.xlu0 %3500
        %3502 = vrot.lane.b32.xlu0 %v3486, 73
        %v3503 = vpop.permute.xlu0 %3502
        %3504 = vrot.lane.b32.xlu0 %v3487, 73
        %v3505 = vpop.permute.xlu0 %3504
        %3506 = vrot.lane.b32.xlu0 %v3488, 73
        %v3507 = vpop.permute.xlu0 %3506
        %3508 = vrot.lane.b32.xlu0 %v3489, 73
        %v3509 = vpop.permute.xlu0 %3508
        %3510 = vrot.lane.b32.xlu0 %v3490, 73
        %v3511 = vpop.permute.xlu0 %3510
        %v3512 = vsel %vm1125, %v3499, 0
        %v3514 = vsel %vm1125, %v3501, 0
        %v3516 = vsel %vm1125, %v3503, 0
        %v3518 = vsel %vm1125, %v3505, 0
        %v3520 = vsel %vm1125, %v3507, 0
        %v3522 = vsel %vm1125, %v3509, 0
        %v3524 = vsel %vm1125, %v3511, 0
        %3526 = vmatpush.msra.mxu0 0.0
        %3527 = vmatpush.msra.mxu0 0.0
        %3528 = vmatpush.msra.mxu0 0.0
        %3529 = vmatpush.msra.mxu0 0.0
        %3530 = vmatpush.msra.mxu0 0.0
        %3531 = vmatpush.msra.mxu0 0.0
        %3532 = vmatpush.msra.mxu0 0.0
        %3533 = vmatpush.msra.mxu0 0.0
        %3534 = vmatpush.msra.mxu0 0.0
        %3535 = vmatpush.msra.mxu0 %v201
        %3536 = vmatpush.msra.mxu0 %v200
        %3537 = vmatpush.msra.mxu0 %v199
        %3538 = vmatpush.msra.mxu0 %v198
        %3539 = vmatpush.msra.mxu0 %v197
        %3540 = vmatpush.msra.mxu0 %v196
        %3541 = vmatpush.msra.mxu0 %v195
        %3542 = vmatmul.f32.gmra.mxu0 %v3512
        %v3543 = vpop.f32.mrf.mxu0
        %v3544 = vadd.f32 0.0, %v3543
        %3545 = vmatmul.f32.gmra.mxu0 %v3514
        %v3546 = vpop.f32.mrf.mxu0
        %v3547 = vadd.f32 0.0, %v3546
        %3548 = vmatmul.f32.gmra.mxu0 %v3516
        %v3549 = vpop.f32.mrf.mxu0
        %v3550 = vadd.f32 0.0, %v3549
        %3551 = vmatmul.f32.gmra.mxu0 %v3518
        %v3552 = vpop.f32.mrf.mxu0
        %v3553 = vadd.f32 0.0, %v3552
        %3554 = vmatmul.f32.gmra.mxu0 %v3520
        %v3555 = vpop.f32.mrf.mxu0
        %v3556 = vadd.f32 0.0, %v3555
        %3557 = vmatmul.f32.gmra.mxu0 %v3522
        %v3558 = vpop.f32.mrf.mxu0
        %v3559 = vadd.f32 0.0, %v3558
        %3560 = vmatmul.f32.gmra.mxu0 %v3524
        %v3561 = vpop.f32.mrf.mxu0
        %v3562 = vadd.f32 0.0, %v3561
        %3563 = vdwg.mxu0
        %3564 = vmatpush.msra.mxu0 0.0
        %3565 = vmatpush.msra.mxu0 0.0
        %3566 = vmatpush.msra.mxu0 0.0
        %3567 = vmatpush.msra.mxu0 0.0
        %3568 = vmatpush.msra.mxu0 0.0
        %3569 = vmatpush.msra.mxu0 0.0
        %3570 = vmatpush.msra.mxu0 0.0
        %3571 = vmatpush.msra.mxu0 0.0
        %3572 = vmatpush.msra.mxu0 0.0
        %3573 = vmatpush.msra.mxu0 %v3562
        %3574 = vmatpush.msra.mxu0 %v3559
        %3575 = vmatpush.msra.mxu0 %v3556
        %3576 = vmatpush.msra.mxu0 %v3553
        %3577 = vmatpush.msra.mxu0 %v3550
        %3578 = vmatpush.msra.mxu0 %v3547
        %3579 = vmatpush.msra.mxu0 %v3544
        %3580 = vmatmul.f32.gmra.mxu0 %v1179
        %v3581 = vpop.f32.mrf.mxu0
        %v3582 = vadd.f32 0.0, %v3581
        %3583 = vdwg.mxu0
        %v3584 = vmul.f32 %v3582, %v3582
        %v3585 = vadd.f32 %v3462, %v3584
        %vm3586 = vmxor %vm2990, 1
        %vm3587 = vmxor %vm2991, 1
        %vm3588 = vmxor %vm2992, 1
        %vm3589 = vmxor %vm2993, 1
        %vm3590 = vmxor %vm2994, 1
        %vm3591 = vmxor %vm2995, 1
        %vm3592 = vmxor %vm2996, 1
        %vm3593 = vmand %vm2983, %vm3586
        %vm3594 = vmand %vm2984, %vm3587
        %vm3595 = vmand %vm2985, %vm3588
        %vm3596 = vmand %vm2986, %vm3589
        %vm3597 = vmand %vm2987, %vm3590
        %vm3598 = vmand %vm2988, %vm3591
        %vm3599 = vmand %vm2989, %vm3592
        %vm3600 = vmand %vm3593, %vm3224
        %vm3601 = vmand %vm3594, %vm3225
        %vm3602 = vmand %vm3595, %vm3226
        %vm3603 = vmand %vm3596, %vm3227
        %vm3604 = vmand %vm3597, %vm3228
        %vm3605 = vmand %vm3598, %vm3229
        %vm3606 = vmand %vm3599, %vm3230
        %v3607 = vsel %vm3600, %v3068, 0.0
        %v3608 = vsel %vm3601, %v3070, 0.0
        %v3609 = vsel %vm3602, %v3072, 0.0
        %v3610 = vsel %vm3603, %v3074, 0.0
        %v3611 = vsel %vm3604, %v3076, 0.0
        %v3612 = vsel %vm3605, %v3078, 0.0
        %v3613 = vsel %vm3606, %v3080, 0.0
        %3621 = vrot.lane.b32.xlu0 %v3607, 73
        %v3622 = vpop.permute.xlu0 %3621
        %3623 = vrot.lane.b32.xlu0 %v3608, 73
        %v3624 = vpop.permute.xlu0 %3623
        %3625 = vrot.lane.b32.xlu0 %v3609, 73
        %v3626 = vpop.permute.xlu0 %3625
        %3627 = vrot.lane.b32.xlu0 %v3610, 73
        %v3628 = vpop.permute.xlu0 %3627
        %3629 = vrot.lane.b32.xlu0 %v3611, 73
        %v3630 = vpop.permute.xlu0 %3629
        %3631 = vrot.lane.b32.xlu0 %v3612, 73
        %v3632 = vpop.permute.xlu0 %3631
        %3633 = vrot.lane.b32.xlu0 %v3613, 73
        %v3634 = vpop.permute.xlu0 %3633
        %v3635 = vsel %vm1125, %v3622, 0
        %v3637 = vsel %vm1125, %v3624, 0
        %v3639 = vsel %vm1125, %v3626, 0
        %v3641 = vsel %vm1125, %v3628, 0
        %v3643 = vsel %vm1125, %v3630, 0
        %v3645 = vsel %vm1125, %v3632, 0
        %v3647 = vsel %vm1125, %v3634, 0
        %3649 = vmatpush.msra.mxu0 0.0
        %3650 = vmatpush.msra.mxu0 0.0
        %3651 = vmatpush.msra.mxu0 0.0
        %3652 = vmatpush.msra.mxu0 0.0
        %3653 = vmatpush.msra.mxu0 0.0
        %3654 = vmatpush.msra.mxu0 0.0
        %3655 = vmatpush.msra.mxu0 0.0
        %3656 = vmatpush.msra.mxu0 0.0
        %3657 = vmatpush.msra.mxu0 0.0
        %3658 = vmatpush.msra.mxu0 %v201
        %3659 = vmatpush.msra.mxu0 %v200
        %3660 = vmatpush.msra.mxu0 %v199
        %3661 = vmatpush.msra.mxu0 %v198
        %3662 = vmatpush.msra.mxu0 %v197
        %3663 = vmatpush.msra.mxu0 %v196
        %3664 = vmatpush.msra.mxu0 %v195
        %3665 = vmatmul.f32.gmra.mxu0 %v3635
        %v3666 = vpop.f32.mrf.mxu0
        %v3667 = vadd.f32 0.0, %v3666
        %3668 = vmatmul.f32.gmra.mxu0 %v3637
        %v3669 = vpop.f32.mrf.mxu0
        %v3670 = vadd.f32 0.0, %v3669
        %3671 = vmatmul.f32.gmra.mxu0 %v3639
        %v3672 = vpop.f32.mrf.mxu0
        %v3673 = vadd.f32 0.0, %v3672
        %3674 = vmatmul.f32.gmra.mxu0 %v3641
        %v3675 = vpop.f32.mrf.mxu0
        %v3676 = vadd.f32 0.0, %v3675
        %3677 = vmatmul.f32.gmra.mxu0 %v3643
        %v3678 = vpop.f32.mrf.mxu0
        %v3679 = vadd.f32 0.0, %v3678
        %3680 = vmatmul.f32.gmra.mxu0 %v3645
        %v3681 = vpop.f32.mrf.mxu0
        %v3682 = vadd.f32 0.0, %v3681
        %3683 = vmatmul.f32.gmra.mxu0 %v3647
        %v3684 = vpop.f32.mrf.mxu0
        %v3685 = vadd.f32 0.0, %v3684
        %3686 = vdwg.mxu0
        %3687 = vmatpush.msra.mxu0 0.0
        %3688 = vmatpush.msra.mxu0 0.0
        %3689 = vmatpush.msra.mxu0 0.0
        %3690 = vmatpush.msra.mxu0 0.0
        %3691 = vmatpush.msra.mxu0 0.0
        %3692 = vmatpush.msra.mxu0 0.0
        %3693 = vmatpush.msra.mxu0 0.0
        %3694 = vmatpush.msra.mxu0 0.0
        %3695 = vmatpush.msra.mxu0 0.0
        %3696 = vmatpush.msra.mxu0 %v3685
        %3697 = vmatpush.msra.mxu0 %v3682
        %3698 = vmatpush.msra.mxu0 %v3679
        %3699 = vmatpush.msra.mxu0 %v3676
        %3700 = vmatpush.msra.mxu0 %v3673
        %3701 = vmatpush.msra.mxu0 %v3670
        %3702 = vmatpush.msra.mxu0 %v3667
        %3703 = vmatmul.f32.gmra.mxu0 %v1179
        %v3704 = vpop.f32.mrf.mxu0
        %v3705 = vadd.f32 0.0, %v3704
        %3706 = vdwg.mxu0
        %v3707 = vmul.f32 %v3705, %v3705
        %v3708 = vadd.f32 %v3585, %v3707
        %vm3709 = vmxor %vm2997, 1
        %vm3710 = vmxor %vm2998, 1
        %vm3711 = vmxor %vm2999, 1
        %vm3712 = vmxor %vm3000, 1
        %vm3713 = vmxor %vm3001, 1
        %vm3714 = vmxor %vm3002, 1
        %vm3715 = vmxor %vm3003, 1
        %vm3716 = vmand %vm2990, %vm3709
        %vm3717 = vmand %vm2991, %vm3710
        %vm3718 = vmand %vm2992, %vm3711
        %vm3719 = vmand %vm2993, %vm3712
        %vm3720 = vmand %vm2994, %vm3713
        %vm3721 = vmand %vm2995, %vm3714
        %vm3722 = vmand %vm2996, %vm3715
        %vm3723 = vmand %vm3716, %vm3224
        %vm3724 = vmand %vm3717, %vm3225
        %vm3725 = vmand %vm3718, %vm3226
        %vm3726 = vmand %vm3719, %vm3227
        %vm3727 = vmand %vm3720, %vm3228
        %vm3728 = vmand %vm3721, %vm3229
        %vm3729 = vmand %vm3722, %vm3230
        %v3730 = vsel %vm3723, %v3068, 0.0
        %v3731 = vsel %vm3724, %v3070, 0.0
        %v3732 = vsel %vm3725, %v3072, 0.0
        %v3733 = vsel %vm3726, %v3074, 0.0
        %v3734 = vsel %vm3727, %v3076, 0.0
        %v3735 = vsel %vm3728, %v3078, 0.0
        %v3736 = vsel %vm3729, %v3080, 0.0
        %3744 = vrot.lane.b32.xlu0 %v3730, 73
        %v3745 = vpop.permute.xlu0 %3744
        %3746 = vrot.lane.b32.xlu0 %v3731, 73
        %v3747 = vpop.permute.xlu0 %3746
        %3748 = vrot.lane.b32.xlu0 %v3732, 73
        %v3749 = vpop.permute.xlu0 %3748
        %3750 = vrot.lane.b32.xlu0 %v3733, 73
        %v3751 = vpop.permute.xlu0 %3750
        %3752 = vrot.lane.b32.xlu0 %v3734, 73
        %v3753 = vpop.permute.xlu0 %3752
        %3754 = vrot.lane.b32.xlu0 %v3735, 73
        %v3755 = vpop.permute.xlu0 %3754
        %3756 = vrot.lane.b32.xlu0 %v3736, 73
        %v3757 = vpop.permute.xlu0 %3756
        %v3758 = vsel %vm1125, %v3745, 0
        %v3760 = vsel %vm1125, %v3747, 0
        %v3762 = vsel %vm1125, %v3749, 0
        %v3764 = vsel %vm1125, %v3751, 0
        %v3766 = vsel %vm1125, %v3753, 0
        %v3768 = vsel %vm1125, %v3755, 0
        %v3770 = vsel %vm1125, %v3757, 0
        %3772 = vmatpush.msra.mxu0 0.0
        %3773 = vmatpush.msra.mxu0 0.0
        %3774 = vmatpush.msra.mxu0 0.0
        %3775 = vmatpush.msra.mxu0 0.0
        %3776 = vmatpush.msra.mxu0 0.0
        %3777 = vmatpush.msra.mxu0 0.0
        %3778 = vmatpush.msra.mxu0 0.0
        %3779 = vmatpush.msra.mxu0 0.0
        %3780 = vmatpush.msra.mxu0 0.0
        %3781 = vmatpush.msra.mxu0 %v201
        %3782 = vmatpush.msra.mxu0 %v200
        %3783 = vmatpush.msra.mxu0 %v199
        %3784 = vmatpush.msra.mxu0 %v198
        %3785 = vmatpush.msra.mxu0 %v197
        %3786 = vmatpush.msra.mxu0 %v196
        %3787 = vmatpush.msra.mxu0 %v195
        %3788 = vmatmul.f32.gmra.mxu0 %v3758
        %v3789 = vpop.f32.mrf.mxu0
        %v3790 = vadd.f32 0.0, %v3789
        %3791 = vmatmul.f32.gmra.mxu0 %v3760
        %v3792 = vpop.f32.mrf.mxu0
        %v3793 = vadd.f32 0.0, %v3792
        %3794 = vmatmul.f32.gmra.mxu0 %v3762
        %v3795 = vpop.f32.mrf.mxu0
        %v3796 = vadd.f32 0.0, %v3795
        %3797 = vmatmul.f32.gmra.mxu0 %v3764
        %v3798 = vpop.f32.mrf.mxu0
        %v3799 = vadd.f32 0.0, %v3798
        %3800 = vmatmul.f32.gmra.mxu0 %v3766
        %v3801 = vpop.f32.mrf.mxu0
        %v3802 = vadd.f32 0.0, %v3801
        %3803 = vmatmul.f32.gmra.mxu0 %v3768
        %v3804 = vpop.f32.mrf.mxu0
        %v3805 = vadd.f32 0.0, %v3804
        %3806 = vmatmul.f32.gmra.mxu0 %v3770
        %v3807 = vpop.f32.mrf.mxu0
        %v3808 = vadd.f32 0.0, %v3807
        %3809 = vdwg.mxu0
        %3810 = vmatpush.msra.mxu0 0.0
        %3811 = vmatpush.msra.mxu0 0.0
        %3812 = vmatpush.msra.mxu0 0.0
        %3813 = vmatpush.msra.mxu0 0.0
        %3814 = vmatpush.msra.mxu0 0.0
        %3815 = vmatpush.msra.mxu0 0.0
        %3816 = vmatpush.msra.mxu0 0.0
        %3817 = vmatpush.msra.mxu0 0.0
        %3818 = vmatpush.msra.mxu0 0.0
        %3819 = vmatpush.msra.mxu0 %v3808
        %3820 = vmatpush.msra.mxu0 %v3805
        %3821 = vmatpush.msra.mxu0 %v3802
        %3822 = vmatpush.msra.mxu0 %v3799
        %3823 = vmatpush.msra.mxu0 %v3796
        %3824 = vmatpush.msra.mxu0 %v3793
        %3825 = vmatpush.msra.mxu0 %v3790
        %3826 = vmatmul.f32.gmra.mxu0 %v1179
        %v3827 = vpop.f32.mrf.mxu0
        %v3828 = vadd.f32 0.0, %v3827
        %3829 = vdwg.mxu0
        %v3830 = vmul.f32 %v3828, %v3828
        %v3831 = vadd.f32 %v3708, %v3830
        %vm3832 = vmxor %vm3004, 1
        %vm3833 = vmxor %vm3005, 1
        %vm3834 = vmxor %vm3006, 1
        %vm3835 = vmxor %vm3007, 1
        %vm3836 = vmxor %vm3008, 1
        %vm3837 = vmxor %vm3009, 1
        %vm3838 = vmxor %vm3010, 1
        %vm3839 = vmand %vm2997, %vm3832
        %vm3840 = vmand %vm2998, %vm3833
        %vm3841 = vmand %vm2999, %vm3834
        %vm3842 = vmand %vm3000, %vm3835
        %vm3843 = vmand %vm3001, %vm3836
        %vm3844 = vmand %vm3002, %vm3837
        %vm3845 = vmand %vm3003, %vm3838
        %vm3846 = vmand %vm3839, %vm3224
        %vm3847 = vmand %vm3840, %vm3225
        %vm3848 = vmand %vm3841, %vm3226
        %vm3849 = vmand %vm3842, %vm3227
        %vm3850 = vmand %vm3843, %vm3228
        %vm3851 = vmand %vm3844, %vm3229
        %vm3852 = vmand %vm3845, %vm3230
        %v3853 = vsel %vm3846, %v3068, 0.0
        %v3854 = vsel %vm3847, %v3070, 0.0
        %v3855 = vsel %vm3848, %v3072, 0.0
        %v3856 = vsel %vm3849, %v3074, 0.0
        %v3857 = vsel %vm3850, %v3076, 0.0
        %v3858 = vsel %vm3851, %v3078, 0.0
        %v3859 = vsel %vm3852, %v3080, 0.0
        %3867 = vrot.lane.b32.xlu0 %v3853, 73
        %v3868 = vpop.permute.xlu0 %3867
        %3869 = vrot.lane.b32.xlu0 %v3854, 73
        %v3870 = vpop.permute.xlu0 %3869
        %3871 = vrot.lane.b32.xlu0 %v3855, 73
        %v3872 = vpop.permute.xlu0 %3871
        %3873 = vrot.lane.b32.xlu0 %v3856, 73
        %v3874 = vpop.permute.xlu0 %3873
        %3875 = vrot.lane.b32.xlu0 %v3857, 73
        %v3876 = vpop.permute.xlu0 %3875
        %3877 = vrot.lane.b32.xlu0 %v3858, 73
        %v3878 = vpop.permute.xlu0 %3877
        %3879 = vrot.lane.b32.xlu0 %v3859, 73
        %v3880 = vpop.permute.xlu0 %3879
        %v3881 = vsel %vm1125, %v3868, 0
        %v3883 = vsel %vm1125, %v3870, 0
        %v3885 = vsel %vm1125, %v3872, 0
        %v3887 = vsel %vm1125, %v3874, 0
        %v3889 = vsel %vm1125, %v3876, 0
        %v3891 = vsel %vm1125, %v3878, 0
        %v3893 = vsel %vm1125, %v3880, 0
        %3895 = vmatpush.msra.mxu0 0.0
        %3896 = vmatpush.msra.mxu0 0.0
        %3897 = vmatpush.msra.mxu0 0.0
        %3898 = vmatpush.msra.mxu0 0.0
        %3899 = vmatpush.msra.mxu0 0.0
        %3900 = vmatpush.msra.mxu0 0.0
        %3901 = vmatpush.msra.mxu0 0.0
        %3902 = vmatpush.msra.mxu0 0.0
        %3903 = vmatpush.msra.mxu0 0.0
        %3904 = vmatpush.msra.mxu0 %v201
        %3905 = vmatpush.msra.mxu0 %v200
        %3906 = vmatpush.msra.mxu0 %v199
        %3907 = vmatpush.msra.mxu0 %v198
        %3908 = vmatpush.msra.mxu0 %v197
        %3909 = vmatpush.msra.mxu0 %v196
        %3910 = vmatpush.msra.mxu0 %v195
        %3911 = vmatmul.f32.gmra.mxu0 %v3881
        %v3912 = vpop.f32.mrf.mxu0
        %v3913 = vadd.f32 0.0, %v3912
        %3914 = vmatmul.f32.gmra.mxu0 %v3883
        %v3915 = vpop.f32.mrf.mxu0
        %v3916 = vadd.f32 0.0, %v3915
        %3917 = vmatmul.f32.gmra.mxu0 %v3885
        %v3918 = vpop.f32.mrf.mxu0
        %v3919 = vadd.f32 0.0, %v3918
        %3920 = vmatmul.f32.gmra.mxu0 %v3887
        %v3921 = vpop.f32.mrf.mxu0
        %v3922 = vadd.f32 0.0, %v3921
        %3923 = vmatmul.f32.gmra.mxu0 %v3889
        %v3924 = vpop.f32.mrf.mxu0
        %v3925 = vadd.f32 0.0, %v3924
        %3926 = vmatmul.f32.gmra.mxu0 %v3891
        %v3927 = vpop.f32.mrf.mxu0
        %v3928 = vadd.f32 0.0, %v3927
        %3929 = vmatmul.f32.gmra.mxu0 %v3893
        %v3930 = vpop.f32.mrf.mxu0
        %v3931 = vadd.f32 0.0, %v3930
        %3932 = vdwg.mxu0
        %3933 = vmatpush.msra.mxu0 0.0
        %3934 = vmatpush.msra.mxu0 0.0
        %3935 = vmatpush.msra.mxu0 0.0
        %3936 = vmatpush.msra.mxu0 0.0
        %3937 = vmatpush.msra.mxu0 0.0
        %3938 = vmatpush.msra.mxu0 0.0
        %3939 = vmatpush.msra.mxu0 0.0
        %3940 = vmatpush.msra.mxu0 0.0
        %3941 = vmatpush.msra.mxu0 0.0
        %3942 = vmatpush.msra.mxu0 %v3931
        %3943 = vmatpush.msra.mxu0 %v3928
        %3944 = vmatpush.msra.mxu0 %v3925
        %3945 = vmatpush.msra.mxu0 %v3922
        %3946 = vmatpush.msra.mxu0 %v3919
        %3947 = vmatpush.msra.mxu0 %v3916
        %3948 = vmatpush.msra.mxu0 %v3913
        %3949 = vmatmul.f32.gmra.mxu0 %v1179
        %v3950 = vpop.f32.mrf.mxu0
        %v3951 = vadd.f32 0.0, %v3950
        %3952 = vdwg.mxu0
        %v3953 = vmul.f32 %v3951, %v3951
        %v3954 = vadd.f32 %v3831, %v3953
        %vm3955 = vmxor %vm3011, 1
        %vm3956 = vmxor %vm3012, 1
        %vm3957 = vmxor %vm3013, 1
        %vm3958 = vmxor %vm3014, 1
        %vm3959 = vmxor %vm3015, 1
        %vm3960 = vmxor %vm3016, 1
        %vm3961 = vmxor %vm3017, 1
        %vm3962 = vmand %vm3004, %vm3955
        %vm3963 = vmand %vm3005, %vm3956
        %vm3964 = vmand %vm3006, %vm3957
        %vm3965 = vmand %vm3007, %vm3958
        %vm3966 = vmand %vm3008, %vm3959
        %vm3967 = vmand %vm3009, %vm3960
        %vm3968 = vmand %vm3010, %vm3961
        %vm3969 = vmand %vm3962, %vm3224
        %vm3970 = vmand %vm3963, %vm3225
        %vm3971 = vmand %vm3964, %vm3226
        %vm3972 = vmand %vm3965, %vm3227
        %vm3973 = vmand %vm3966, %vm3228
        %vm3974 = vmand %vm3967, %vm3229
        %vm3975 = vmand %vm3968, %vm3230
        %v3976 = vsel %vm3969, %v3068, 0.0
        %v3977 = vsel %vm3970, %v3070, 0.0
        %v3978 = vsel %vm3971, %v3072, 0.0
        %v3979 = vsel %vm3972, %v3074, 0.0
        %v3980 = vsel %vm3973, %v3076, 0.0
        %v3981 = vsel %vm3974, %v3078, 0.0
        %v3982 = vsel %vm3975, %v3080, 0.0
        %3990 = vrot.lane.b32.xlu0 %v3976, 73
        %v3991 = vpop.permute.xlu0 %3990
        %3992 = vrot.lane.b32.xlu0 %v3977, 73
        %v3993 = vpop.permute.xlu0 %3992
        %3994 = vrot.lane.b32.xlu0 %v3978, 73
        %v3995 = vpop.permute.xlu0 %3994
        %3996 = vrot.lane.b32.xlu0 %v3979, 73
        %v3997 = vpop.permute.xlu0 %3996
        %3998 = vrot.lane.b32.xlu0 %v3980, 73
        %v3999 = vpop.permute.xlu0 %3998
        %4000 = vrot.lane.b32.xlu0 %v3981, 73
        %v4001 = vpop.permute.xlu0 %4000
        %4002 = vrot.lane.b32.xlu0 %v3982, 73
        %v4003 = vpop.permute.xlu0 %4002
        %v4004 = vsel %vm1125, %v3991, 0
        %v4006 = vsel %vm1125, %v3993, 0
        %v4008 = vsel %vm1125, %v3995, 0
        %v4010 = vsel %vm1125, %v3997, 0
        %v4012 = vsel %vm1125, %v3999, 0
        %v4014 = vsel %vm1125, %v4001, 0
        %v4016 = vsel %vm1125, %v4003, 0
        %4018 = vmatpush.msra.mxu0 0.0
        %4019 = vmatpush.msra.mxu0 0.0
        %4020 = vmatpush.msra.mxu0 0.0
        %4021 = vmatpush.msra.mxu0 0.0
        %4022 = vmatpush.msra.mxu0 0.0
        %4023 = vmatpush.msra.mxu0 0.0
        %4024 = vmatpush.msra.mxu0 0.0
        %4025 = vmatpush.msra.mxu0 0.0
        %4026 = vmatpush.msra.mxu0 0.0
        %4027 = vmatpush.msra.mxu0 %v201
        %4028 = vmatpush.msra.mxu0 %v200
        %4029 = vmatpush.msra.mxu0 %v199
        %4030 = vmatpush.msra.mxu0 %v198
        %4031 = vmatpush.msra.mxu0 %v197
        %4032 = vmatpush.msra.mxu0 %v196
        %4033 = vmatpush.msra.mxu0 %v195
        %4034 = vmatmul.f32.gmra.mxu0 %v4004
        %v4035 = vpop.f32.mrf.mxu0
        %v4036 = vadd.f32 0.0, %v4035
        %4037 = vmatmul.f32.gmra.mxu0 %v4006
        %v4038 = vpop.f32.mrf.mxu0
        %v4039 = vadd.f32 0.0, %v4038
        %4040 = vmatmul.f32.gmra.mxu0 %v4008
        %v4041 = vpop.f32.mrf.mxu0
        %v4042 = vadd.f32 0.0, %v4041
        %4043 = vmatmul.f32.gmra.mxu0 %v4010
        %v4044 = vpop.f32.mrf.mxu0
        %v4045 = vadd.f32 0.0, %v4044
        %4046 = vmatmul.f32.gmra.mxu0 %v4012
        %v4047 = vpop.f32.mrf.mxu0
        %v4048 = vadd.f32 0.0, %v4047
        %4049 = vmatmul.f32.gmra.mxu0 %v4014
        %v4050 = vpop.f32.mrf.mxu0
        %v4051 = vadd.f32 0.0, %v4050
        %4052 = vmatmul.f32.gmra.mxu0 %v4016
        %v4053 = vpop.f32.mrf.mxu0
        %v4054 = vadd.f32 0.0, %v4053
        %4055 = vdwg.mxu0
        %4056 = vmatpush.msra.mxu0 0.0
        %4057 = vmatpush.msra.mxu0 0.0
        %4058 = vmatpush.msra.mxu0 0.0
        %4059 = vmatpush.msra.mxu0 0.0
        %4060 = vmatpush.msra.mxu0 0.0
        %4061 = vmatpush.msra.mxu0 0.0
        %4062 = vmatpush.msra.mxu0 0.0
        %4063 = vmatpush.msra.mxu0 0.0
        %4064 = vmatpush.msra.mxu0 0.0
        %4065 = vmatpush.msra.mxu0 %v4054
        %4066 = vmatpush.msra.mxu0 %v4051
        %4067 = vmatpush.msra.mxu0 %v4048
        %4068 = vmatpush.msra.mxu0 %v4045
        %4069 = vmatpush.msra.mxu0 %v4042
        %4070 = vmatpush.msra.mxu0 %v4039
        %4071 = vmatpush.msra.mxu0 %v4036
        %4072 = vmatmul.f32.gmra.mxu0 %v1179
        %v4073 = vpop.f32.mrf.mxu0
        %v4074 = vadd.f32 0.0, %v4073
        %4075 = vdwg.mxu0
        %v4076 = vmul.f32 %v4074, %v4074
        %v4077 = vadd.f32 %v3954, %v4076
        %vm4078 = vmand %vm3011, %vm3224
        %vm4079 = vmand %vm3012, %vm3225
        %vm4080 = vmand %vm3013, %vm3226
        %vm4081 = vmand %vm3014, %vm3227
        %vm4082 = vmand %vm3015, %vm3228
        %vm4083 = vmand %vm3016, %vm3229
        %vm4084 = vmand %vm3017, %vm3230
        %v4085 = vsel %vm4078, %v3068, 0.0
        %v4086 = vsel %vm4079, %v3070, 0.0
        %v4087 = vsel %vm4080, %v3072, 0.0
        %v4088 = vsel %vm4081, %v3074, 0.0
        %v4089 = vsel %vm4082, %v3076, 0.0
        %v4090 = vsel %vm4083, %v3078, 0.0
        %v4091 = vsel %vm4084, %v3080, 0.0
        %4099 = vrot.lane.b32.xlu0 %v4085, 73
        %v4100 = vpop.permute.xlu0 %4099
        %4101 = vrot.lane.b32.xlu0 %v4086, 73
        %v4102 = vpop.permute.xlu0 %4101
        %4103 = vrot.lane.b32.xlu0 %v4087, 73
        %v4104 = vpop.permute.xlu0 %4103
        %4105 = vrot.lane.b32.xlu0 %v4088, 73
        %v4106 = vpop.permute.xlu0 %4105
        %4107 = vrot.lane.b32.xlu0 %v4089, 73
        %v4108 = vpop.permute.xlu0 %4107
        %4109 = vrot.lane.b32.xlu0 %v4090, 73
        %v4110 = vpop.permute.xlu0 %4109
        %4111 = vrot.lane.b32.xlu0 %v4091, 73
        %v4112 = vpop.permute.xlu0 %4111
        %v4113 = vsel %vm1125, %v4100, 0
        %v4115 = vsel %vm1125, %v4102, 0
        %v4117 = vsel %vm1125, %v4104, 0
        %v4119 = vsel %vm1125, %v4106, 0
        %v4121 = vsel %vm1125, %v4108, 0
        %v4123 = vsel %vm1125, %v4110, 0
        %v4125 = vsel %vm1125, %v4112, 0
        %4127 = vmatpush.msra.mxu0 0.0
        %4128 = vmatpush.msra.mxu0 0.0
        %4129 = vmatpush.msra.mxu0 0.0
        %4130 = vmatpush.msra.mxu0 0.0
        %4131 = vmatpush.msra.mxu0 0.0
        %4132 = vmatpush.msra.mxu0 0.0
        %4133 = vmatpush.msra.mxu0 0.0
        %4134 = vmatpush.msra.mxu0 0.0
        %4135 = vmatpush.msra.mxu0 0.0
        %4136 = vmatpush.msra.mxu0 %v201
        %4137 = vmatpush.msra.mxu0 %v200
        %4138 = vmatpush.msra.mxu0 %v199
        %4139 = vmatpush.msra.mxu0 %v198
        %4140 = vmatpush.msra.mxu0 %v197
        %4141 = vmatpush.msra.mxu0 %v196
        %4142 = vmatpush.msra.mxu0 %v195
        %4143 = vmatmul.f32.gmra.mxu0 %v4113
        %v4144 = vpop.f32.mrf.mxu0
        %v4145 = vadd.f32 0.0, %v4144
        %4146 = vmatmul.f32.gmra.mxu0 %v4115
        %v4147 = vpop.f32.mrf.mxu0
        %v4148 = vadd.f32 0.0, %v4147
        %4149 = vmatmul.f32.gmra.mxu0 %v4117
        %v4150 = vpop.f32.mrf.mxu0
        %v4151 = vadd.f32 0.0, %v4150
        %4152 = vmatmul.f32.gmra.mxu0 %v4119
        %v4153 = vpop.f32.mrf.mxu0
        %v4154 = vadd.f32 0.0, %v4153
        %4155 = vmatmul.f32.gmra.mxu0 %v4121
        %v4156 = vpop.f32.mrf.mxu0
        %v4157 = vadd.f32 0.0, %v4156
        %4158 = vmatmul.f32.gmra.mxu0 %v4123
        %v4159 = vpop.f32.mrf.mxu0
        %v4160 = vadd.f32 0.0, %v4159
        %4161 = vmatmul.f32.gmra.mxu0 %v4125
        %v4162 = vpop.f32.mrf.mxu0
        %v4163 = vadd.f32 0.0, %v4162
        %4164 = vdwg.mxu0
        %4165 = vmatpush.msra.mxu0 0.0
        %4166 = vmatpush.msra.mxu0 0.0
        %4167 = vmatpush.msra.mxu0 0.0
        %4168 = vmatpush.msra.mxu0 0.0
        %4169 = vmatpush.msra.mxu0 0.0
        %4170 = vmatpush.msra.mxu0 0.0
        %4171 = vmatpush.msra.mxu0 0.0
        %4172 = vmatpush.msra.mxu0 0.0
        %4173 = vmatpush.msra.mxu0 0.0
        %4174 = vmatpush.msra.mxu0 %v4163
        %4175 = vmatpush.msra.mxu0 %v4160
        %4176 = vmatpush.msra.mxu0 %v4157
        %4177 = vmatpush.msra.mxu0 %v4154
        %4178 = vmatpush.msra.mxu0 %v4151
        %4179 = vmatpush.msra.mxu0 %v4148
        %4180 = vmatpush.msra.mxu0 %v4145
        %4181 = vmatmul.f32.gmra.mxu0 %v1179
        %v4182 = vpop.f32.mrf.mxu0
        %v4183 = vadd.f32 0.0, %v4182
        %4184 = vdwg.mxu0
        %v4185 = vmul.f32 %v4183, %v4183
        %v4186 = vadd.f32 %v4077, %v4185
        %v4187 = vrsqrt.pop %v4186
        %v4188 = vmul.f32 %v4187, %v4186
        %v4189 = vmul.f32 %v4188, %v4187
        %v4190 = vmul.f32 0.5, %v4189
        %v4191 = vsub.f32 1.5, %v4190
        %v4192 = vmul.f32 %v4187, %v4191
        %vm4193 = vweird.f32 %v4186
        %vm4194 = vweird.f32 %v4187
        %vm4195 = vmor %vm4193, %vm4194
        %v4196 = vsel %vm4195, %v4187, %v4192
        %v4197 = vmin.f32 %v4196, 1e+12
        %v4198 = vmul.f32 %v3186, %v4197
        %v4199 = vmul.f32 %v3336, %v4197
        %v4200 = vmul.f32 %v3459, %v4197
        %v4201 = vmul.f32 %v3582, %v4197
        %v4202 = vmul.f32 %v3705, %v4197
        %v4203 = vmul.f32 %v3828, %v4197
        %v4204 = vmul.f32 %v3951, %v4197
        %v4205 = vmul.f32 %v4074, %v4197
        %v4206 = vmul.f32 %v4183, %v4197
        %4216 = vrot.lane.b32.xlu0 %v4198, 8
        %v4217 = vpop.permute.xlu0 %4216
        %4218 = vrot.lane.b32.xlu0 %v4199, 8
        %v4219 = vpop.permute.xlu0 %4218
        %4220 = vrot.lane.b32.xlu0 %v4200, 8
        %v4221 = vpop.permute.xlu0 %4220
        %4222 = vrot.lane.b32.xlu0 %v4201, 8
        %v4223 = vpop.permute.xlu0 %4222
        %4224 = vrot.lane.b32.xlu0 %v4202, 8
        %v4225 = vpop.permute.xlu0 %4224
        %4226 = vrot.lane.b32.xlu0 %v4203, 8
        %v4227 = vpop.permute.xlu0 %4226
        %4228 = vrot.lane.b32.xlu0 %v4204, 8
        %v4229 = vpop.permute.xlu0 %4228
        %4230 = vrot.lane.b32.xlu0 %v4205, 8
        %v4231 = vpop.permute.xlu0 %4230
        %4232 = vrot.lane.b32.xlu0 %v4206, 8
        %v4233 = vpop.permute.xlu0 %4232
        %vm4243 = vcmask 130112
        %4244 = vst.msk [vmem:[%s194] sm:$0xff] %vm4243, %v4217
        %4245 = vst.msk [vmem:[%s194 + $0x8] sm:$0xff] %vm4243, %v4219
        %4246 = vst.msk [vmem:[%s194 + $0x10] sm:$0xff] %vm4243, %v4221
        %4247 = vst.msk [vmem:[%s194 + $0x18] sm:$0xff] %vm4243, %v4223
        %4248 = vst.msk [vmem:[%s194 + $0x20] sm:$0xff] %vm4243, %v4225
        %4249 = vst.msk [vmem:[%s194 + $0x28] sm:$0xff] %vm4243, %v4227
        %4250 = vst.msk [vmem:[%s194 + $0x30] sm:$0xff] %vm4243, %v4229
        %4251 = vst.msk [vmem:[%s194 + $0x38] sm:$0xff] %vm4243, %v4231
        %4252 = vst.msk [vmem:[%s194 + $0x40] sm:$0xff] %vm4243, %v4233
        %s4253 = scalar_lea.vmem %s165, 112 [#allocation2]
        %v4254 = vld [vmem:[%s4253] sm:$0xff]
        %v4255 = vld [vmem:[%s4253 + $0x8] sm:$0xff]
        %v4256 = vld [vmem:[%s4253 + $0x10] sm:$0xff]
        %v4257 = vld [vmem:[%s4253 + $0x18] sm:$0xff]
        %v4258 = vld [vmem:[%s4253 + $0x20] sm:$0xff]
        %v4259 = vld [vmem:[%s4253 + $0x28] sm:$0xff]
        %v4260 = vld [vmem:[%s4253 + $0x30] sm:$0xff]
        %4261 = vrot.lane.b32.xlu0 %v4254, 56
        %v4262 = vpop.permute.xlu0 %4261
        %v4263 = vsel %vm244, %v4262, %v4254
        %4264 = vrot.lane.b32.xlu0 %v4255, 56
        %v4265 = vpop.permute.xlu0 %4264
        %v4266 = vsel %vm244, %v4265, %v4255
        %4267 = vrot.lane.b32.xlu0 %v4256, 56
        %v4268 = vpop.permute.xlu0 %4267
        %v4269 = vsel %vm244, %v4268, %v4256
        %4270 = vrot.lane.b32.xlu0 %v4257, 56
        %v4271 = vpop.permute.xlu0 %4270
        %v4272 = vsel %vm244, %v4271, %v4257
        %4273 = vrot.lane.b32.xlu0 %v4258, 56
        %v4274 = vpop.permute.xlu0 %4273
        %v4275 = vsel %vm244, %v4274, %v4258
        %4276 = vrot.lane.b32.xlu0 %v4259, 56
        %v4277 = vpop.permute.xlu0 %4276
        %v4278 = vsel %vm244, %v4277, %v4259
        %4279 = vrot.lane.b32.xlu0 %v4260, 56
        %v4280 = vpop.permute.xlu0 %4279
        %v4281 = vsel %vm244, %v4280, %v4260
        %4282 = vrot.lane.b32.xlu0 %v4263, 56
        %v4283 = vpop.permute.xlu0 %4282
        %4284 = vrot.lane.b32.xlu0 %v4266, 56
        %v4285 = vpop.permute.xlu0 %4284
        %4286 = vrot.lane.b32.xlu0 %v4269, 56
        %v4287 = vpop.permute.xlu0 %4286
        %4288 = vrot.lane.b32.xlu0 %v4272, 56
        %v4289 = vpop.permute.xlu0 %4288
        %4290 = vrot.lane.b32.xlu0 %v4275, 56
        %v4291 = vpop.permute.xlu0 %4290
        %4292 = vrot.lane.b32.xlu0 %v4278, 56
        %v4293 = vpop.permute.xlu0 %4292
        %4294 = vrot.lane.b32.xlu0 %v4281, 56
        %v4295 = vpop.permute.xlu0 %4294
        %v4296 = vsel %vm244, %v4283, %v4254
        %v4297 = vsel %vm244, %v4285, %v4255
        %v4298 = vsel %vm244, %v4287, %v4256
        %v4299 = vsel %vm244, %v4289, %v4257
        %v4300 = vsel %vm244, %v4291, %v4258
        %v4301 = vsel %vm244, %v4293, %v4259
        %v4302 = vsel %vm244, %v4295, %v4260
        %4310 = vrot.lane.b32.xlu0 %v4296, 54
        %v4311 = vpop.permute.xlu0 %4310
        %4312 = vrot.lane.b32.xlu0 %v4297, 54
        %v4313 = vpop.permute.xlu0 %4312
        %4314 = vrot.lane.b32.xlu0 %v4298, 54
        %v4315 = vpop.permute.xlu0 %4314
        %4316 = vrot.lane.b32.xlu0 %v4299, 54
        %v4317 = vpop.permute.xlu0 %4316
        %4318 = vrot.lane.b32.xlu0 %v4300, 54
        %v4319 = vpop.permute.xlu0 %4318
        %4320 = vrot.lane.b32.xlu0 %v4301, 54
        %v4321 = vpop.permute.xlu0 %4320
        %4322 = vrot.lane.b32.xlu0 %v4302, 54
        %v4323 = vpop.permute.xlu0 %4322
        %v4331 = vsub.f32 %v4296, %v4311
        %v4332 = vsub.f32 %v4297, %v4313
        %v4333 = vsub.f32 %v4298, %v4315
        %v4334 = vsub.f32 %v4299, %v4317
        %v4335 = vsub.f32 %v4300, %v4319
        %v4336 = vsub.f32 %v4301, %v4321
        %v4337 = vsub.f32 %v4302, %v4323
        %4345 = vrot.lane.b32.xlu0 %v4331, 73
        %v4346 = vpop.permute.xlu0 %4345
        %4347 = vrot.lane.b32.xlu0 %v4332, 73
        %v4348 = vpop.permute.xlu0 %4347
        %4349 = vrot.lane.b32.xlu0 %v4333, 73
        %v4350 = vpop.permute.xlu0 %4349
        %4351 = vrot.lane.b32.xlu0 %v4334, 73
        %v4352 = vpop.permute.xlu0 %4351
        %4353 = vrot.lane.b32.xlu0 %v4335, 73
        %v4354 = vpop.permute.xlu0 %4353
        %4355 = vrot.lane.b32.xlu0 %v4336, 73
        %v4356 = vpop.permute.xlu0 %4355
        %4357 = vrot.lane.b32.xlu0 %v4337, 73
        %v4358 = vpop.permute.xlu0 %4357
        %v4366 = vsel %vm236, 0.0, %v4346
        %v4367 = vsel %vm236, 0.0, %v4348
        %v4368 = vsel %vm236, 0.0, %v4350
        %v4369 = vsel %vm236, 0.0, %v4352
        %v4370 = vsel %vm236, 0.0, %v4354
        %v4371 = vsel %vm236, 0.0, %v4356
        %v4372 = vsel %vm236, 0.0, %v4358
        %v4373 = vrot.slane %v4254, 7
        %v4374 = vrot.slane %v4255, 7
        %v4375 = vrot.slane %v4256, 7
        %v4376 = vrot.slane %v4257, 7
        %v4377 = vrot.slane %v4258, 7
        %v4378 = vrot.slane %v4259, 7
        %v4379 = vrot.slane %v4260, 7
        %v4380 = vsel %vm364, %v4378, %v4379
        %v4381 = vsel %vm364, %v4377, %v4378
        %v4382 = vsel %vm364, %v4376, %v4377
        %v4383 = vsel %vm364, %v4375, %v4376
        %v4384 = vsel %vm364, %v4374, %v4375
        %v4385 = vsel %vm364, %v4373, %v4374
        %v4386 = vsel %vm364, %v4379, %v4373
        %v4387 = vrot.slane %v4254, 1
        %v4388 = vrot.slane %v4255, 1
        %v4389 = vrot.slane %v4256, 1
        %v4390 = vrot.slane %v4257, 1
        %v4391 = vrot.slane %v4258, 1
        %v4392 = vrot.slane %v4259, 1
        %v4393 = vrot.slane %v4260, 1
        %v4394 = vsel %vm379, %v4392, %v4393
        %v4395 = vsel %vm379, %v4391, %v4392
        %v4396 = vsel %vm379, %v4390, %v4391
        %v4397 = vsel %vm379, %v4389, %v4390
        %v4398 = vsel %vm379, %v4388, %v4389
        %v4399 = vsel %vm379, %v4387, %v4388
        %v4400 = vsel %vm379, %v4393, %v4387
        %v4401 = vsub.f32 %v4386, %v4399
        %v4402 = vsub.f32 %v4385, %v4398
        %v4403 = vsub.f32 %v4384, %v4397
        %v4404 = vsub.f32 %v4383, %v4396
        %v4405 = vsub.f32 %v4382, %v4395
        %v4406 = vsub.f32 %v4381, %v4394
        %v4407 = vsub.f32 %v4380, %v4400
        %v4408 = vsel %vm229, 0.0, %v4401
        %v4409 = vsel %vm230, 0.0, %v4402
        %v4410 = vsel %vm231, 0.0, %v4403
        %v4411 = vsel %vm232, 0.0, %v4404
        %v4412 = vsel %vm233, 0.0, %v4405
        %v4413 = vsel %vm234, 0.0, %v4406
        %v4414 = vsel %vm235, 0.0, %v4407
        %v4415 = vrot.slane %v4366, 7
        %v4416 = vrot.slane %v4367, 7
        %v4417 = vrot.slane %v4368, 7
        %v4418 = vrot.slane %v4369, 7
        %v4419 = vrot.slane %v4370, 7
        %v4420 = vrot.slane %v4371, 7
        %v4421 = vrot.slane %v4372, 7
        %v4422 = vsel %vm364, %v4420, %v4421
        %v4423 = vsel %vm364, %v4419, %v4420
        %v4424 = vsel %vm364, %v4418, %v4419
        %v4425 = vsel %vm364, %v4417, %v4418
        %v4426 = vsel %vm364, %v4416, %v4417
        %v4427 = vsel %vm364, %v4415, %v4416
        %v4428 = vsel %vm364, %v4421, %v4415
        %v4429 = vmul.f32 %v4366, 2.0
        %v4430 = vmul.f32 %v4367, 2.0
        %v4431 = vmul.f32 %v4368, 2.0
        %v4432 = vmul.f32 %v4369, 2.0
        %v4433 = vmul.f32 %v4370, 2.0
        %v4434 = vmul.f32 %v4371, 2.0
        %v4435 = vmul.f32 %v4372, 2.0
        %v4436 = vadd.f32 %v4428, %v4429
        %v4437 = vadd.f32 %v4427, %v4430
        %v4438 = vadd.f32 %v4426, %v4431
        %v4439 = vadd.f32 %v4425, %v4432
        %v4440 = vadd.f32 %v4424, %v4433
        %v4441 = vadd.f32 %v4423, %v4434
        %v4442 = vadd.f32 %v4422, %v4435
        %v4443 = vrot.slane %v4366, 1
        %v4444 = vrot.slane %v4367, 1
        %v4445 = vrot.slane %v4368, 1
        %v4446 = vrot.slane %v4369, 1
        %v4447 = vrot.slane %v4370, 1
        %v4448 = vrot.slane %v4371, 1
        %v4449 = vrot.slane %v4372, 1
        %v4450 = vsel %vm379, %v4448, %v4449
        %v4451 = vsel %vm379, %v4447, %v4448
        %v4452 = vsel %vm379, %v4446, %v4447
        %v4453 = vsel %vm379, %v4445, %v4446
        %v4454 = vsel %vm379, %v4444, %v4445
        %v4455 = vsel %vm379, %v4443, %v4444
        %v4456 = vsel %vm379, %v4449, %v4443
        %v4457 = vadd.f32 %v4436, %v4455
        %v4458 = vadd.f32 %v4437, %v4454
        %v4459 = vadd.f32 %v4438, %v4453
        %v4460 = vadd.f32 %v4439, %v4452
        %v4461 = vadd.f32 %v4440, %v4451
        %v4462 = vadd.f32 %v4441, %v4450
        %v4463 = vadd.f32 %v4442, %v4456
        %v4465 = vrot.slane %v4372, 6
        %v4467 = vsub.f32 %v4366, %v4465
        %v4469 = vrot.slane %v4366, 2
        %v4471 = vsub.f32 %v4372, %v4469
        %v4472 = vperm.slane %v4471, 6
        %v4473 = vsel %vm220, %v4472, 0.0
        %v4474 = vsel %vm221, %v4472, 0.0
        %v4475 = vsel %vm222, %v4472, 0.0
        %v4476 = vsel %vm223, %v4472, 0.0
        %v4477 = vsel %vm224, %v4472, 0.0
        %v4478 = vsel %vm225, %v4472, 0.0
        %v4479 = vsel %vm226, %v4472, 0.0
        %v4480 = vperm.slane %v4467, 1
        %v4481 = vsel %vm213, %v4480, %v4473
        %v4482 = vsel %vm214, %v4480, %v4474
        %v4483 = vsel %vm215, %v4480, %v4475
        %v4484 = vsel %vm216, %v4480, %v4476
        %v4485 = vsel %vm217, %v4480, %v4477
        %v4486 = vsel %vm218, %v4480, %v4478
        %v4487 = vsel %vm219, %v4480, %v4479
        %v4488 = vadd.f32 %v4457, %v4481
        %v4489 = vadd.f32 %v4458, %v4482
        %v4490 = vadd.f32 %v4459, %v4483
        %v4491 = vadd.f32 %v4460, %v4484
        %v4492 = vadd.f32 %v4461, %v4485
        %v4493 = vadd.f32 %v4462, %v4486
        %v4494 = vadd.f32 %v4463, %v4487
        %4495 = vrot.lane.b32.xlu0 %v4408, 56
        %v4496 = vpop.permute.xlu0 %4495
        %v4497 = vsel %vm244, %v4496, %v4408
        %4498 = vrot.lane.b32.xlu0 %v4409, 56
        %v4499 = vpop.permute.xlu0 %4498
        %v4500 = vsel %vm244, %v4499, %v4409
        %4501 = vrot.lane.b32.xlu0 %v4410, 56
        %v4502 = vpop.permute.xlu0 %4501
        %v4503 = vsel %vm244, %v4502, %v4410
        %4504 = vrot.lane.b32.xlu0 %v4411, 56
        %v4505 = vpop.permute.xlu0 %4504
        %v4506 = vsel %vm244, %v4505, %v4411
        %4507 = vrot.lane.b32.xlu0 %v4412, 56
        %v4508 = vpop.permute.xlu0 %4507
        %v4509 = vsel %vm244, %v4508, %v4412
        %4510 = vrot.lane.b32.xlu0 %v4413, 56
        %v4511 = vpop.permute.xlu0 %4510
        %v4512 = vsel %vm244, %v4511, %v4413
        %4513 = vrot.lane.b32.xlu0 %v4414, 56
        %v4514 = vpop.permute.xlu0 %4513
        %v4515 = vsel %vm244, %v4514, %v4414
        %4516 = vrot.lane.b32.xlu0 %v4497, 56
        %v4517 = vpop.permute.xlu0 %4516
        %4518 = vrot.lane.b32.xlu0 %v4500, 56
        %v4519 = vpop.permute.xlu0 %4518
        %4520 = vrot.lane.b32.xlu0 %v4503, 56
        %v4521 = vpop.permute.xlu0 %4520
        %4522 = vrot.lane.b32.xlu0 %v4506, 56
        %v4523 = vpop.permute.xlu0 %4522
        %4524 = vrot.lane.b32.xlu0 %v4509, 56
        %v4525 = vpop.permute.xlu0 %4524
        %4526 = vrot.lane.b32.xlu0 %v4512, 56
        %v4527 = vpop.permute.xlu0 %4526
        %4528 = vrot.lane.b32.xlu0 %v4515, 56
        %v4529 = vpop.permute.xlu0 %4528
        %v4530 = vsel %vm244, %v4517, %v4408
        %v4531 = vsel %vm244, %v4519, %v4409
        %v4532 = vsel %vm244, %v4521, %v4410
        %v4533 = vsel %vm244, %v4523, %v4411
        %v4534 = vsel %vm244, %v4525, %v4412
        %v4535 = vsel %vm244, %v4527, %v4413
        %v4536 = vsel %vm244, %v4529, %v4414
        %v4537 = vmul.f32 %v4408, 2.0
        %v4538 = vmul.f32 %v4409, 2.0
        %v4539 = vmul.f32 %v4410, 2.0
        %v4540 = vmul.f32 %v4411, 2.0
        %v4541 = vmul.f32 %v4412, 2.0
        %v4542 = vmul.f32 %v4413, 2.0
        %v4543 = vmul.f32 %v4414, 2.0
        %4551 = vrot.lane.b32.xlu0 %v4537, 55
        %v4552 = vpop.permute.xlu0 %4551
        %4553 = vrot.lane.b32.xlu0 %v4538, 55
        %v4554 = vpop.permute.xlu0 %4553
        %4555 = vrot.lane.b32.xlu0 %v4539, 55
        %v4556 = vpop.permute.xlu0 %4555
        %4557 = vrot.lane.b32.xlu0 %v4540, 55
        %v4558 = vpop.permute.xlu0 %4557
        %4559 = vrot.lane.b32.xlu0 %v4541, 55
        %v4560 = vpop.permute.xlu0 %4559
        %4561 = vrot.lane.b32.xlu0 %v4542, 55
        %v4562 = vpop.permute.xlu0 %4561
        %4563 = vrot.lane.b32.xlu0 %v4543, 55
        %v4564 = vpop.permute.xlu0 %4563
        %v4572 = vadd.f32 %v4530, %v4552
        %v4573 = vadd.f32 %v4531, %v4554
        %v4574 = vadd.f32 %v4532, %v4556
        %v4575 = vadd.f32 %v4533, %v4558
        %v4576 = vadd.f32 %v4534, %v4560
        %v4577 = vadd.f32 %v4535, %v4562
        %v4578 = vadd.f32 %v4536, %v4564
        %4586 = vrot.lane.b32.xlu0 %v4530, 54
        %v4587 = vpop.permute.xlu0 %4586
        %4588 = vrot.lane.b32.xlu0 %v4531, 54
        %v4589 = vpop.permute.xlu0 %4588
        %4590 = vrot.lane.b32.xlu0 %v4532, 54
        %v4591 = vpop.permute.xlu0 %4590
        %4592 = vrot.lane.b32.xlu0 %v4533, 54
        %v4593 = vpop.permute.xlu0 %4592
        %4594 = vrot.lane.b32.xlu0 %v4534, 54
        %v4595 = vpop.permute.xlu0 %4594
        %4596 = vrot.lane.b32.xlu0 %v4535, 54
        %v4597 = vpop.permute.xlu0 %4596
        %4598 = vrot.lane.b32.xlu0 %v4536, 54
        %v4599 = vpop.permute.xlu0 %4598
        %v4607 = vadd.f32 %v4572, %v4587
        %v4608 = vadd.f32 %v4573, %v4589
        %v4609 = vadd.f32 %v4574, %v4591
        %v4610 = vadd.f32 %v4575, %v4593
        %v4611 = vadd.f32 %v4576, %v4595
        %v4612 = vadd.f32 %v4577, %v4597
        %v4613 = vadd.f32 %v4578, %v4599
        %4621 = vrot.lane.b32.xlu0 %v4408, 74
        %v4622 = vpop.permute.xlu0 %4621
        %4623 = vrot.lane.b32.xlu0 %v4409, 74
        %v4624 = vpop.permute.xlu0 %4623
        %4625 = vrot.lane.b32.xlu0 %v4410, 74
        %v4626 = vpop.permute.xlu0 %4625
        %4627 = vrot.lane.b32.xlu0 %v4411, 74
        %v4628 = vpop.permute.xlu0 %4627
        %4629 = vrot.lane.b32.xlu0 %v4412, 74
        %v4630 = vpop.permute.xlu0 %4629
        %4631 = vrot.lane.b32.xlu0 %v4413, 74
        %v4632 = vpop.permute.xlu0 %4631
        %4633 = vrot.lane.b32.xlu0 %v4414, 74
        %v4634 = vpop.permute.xlu0 %4633
        %v4642 = vsub.f32 %v4408, %v4622
        %v4643 = vsub.f32 %v4409, %v4624
        %v4644 = vsub.f32 %v4410, %v4626
        %v4645 = vsub.f32 %v4411, %v4628
        %v4646 = vsub.f32 %v4412, %v4630
        %v4647 = vsub.f32 %v4413, %v4632
        %v4648 = vsub.f32 %v4414, %v4634
        %4649 = vrot.lane.b32.xlu0 %v4408, 54
        %v4650 = vpop.permute.xlu0 %4649
        %4651 = vrot.lane.b32.xlu0 %v4409, 54
        %v4652 = vpop.permute.xlu0 %4651
        %4653 = vrot.lane.b32.xlu0 %v4410, 54
        %v4654 = vpop.permute.xlu0 %4653
        %4655 = vrot.lane.b32.xlu0 %v4411, 54
        %v4656 = vpop.permute.xlu0 %4655
        %4657 = vrot.lane.b32.xlu0 %v4412, 54
        %v4658 = vpop.permute.xlu0 %4657
        %4659 = vrot.lane.b32.xlu0 %v4413, 54
        %v4660 = vpop.permute.xlu0 %4659
        %4661 = vrot.lane.b32.xlu0 %v4414, 54
        %v4662 = vpop.permute.xlu0 %4661
        %v4670 = vsub.f32 %v4408, %v4650
        %v4671 = vsub.f32 %v4409, %v4652
        %v4672 = vsub.f32 %v4410, %v4654
        %v4673 = vsub.f32 %v4411, %v4656
        %v4674 = vsub.f32 %v4412, %v4658
        %v4675 = vsub.f32 %v4413, %v4660
        %v4676 = vsub.f32 %v4414, %v4662
        %4678 = vset.pattern.permute.xlu0 54
        %4679 = vperm.xlu0 %4678, %v4670
        %v4680 = vpop.permute.xlu0 %4679
        %4683 = vset.pattern.permute.xlu0 54
        %4684 = vperm.xlu0 %4683, %v4671
        %v4685 = vpop.permute.xlu0 %4684
        %4688 = vset.pattern.permute.xlu0 54
        %4689 = vperm.xlu0 %4688, %v4672
        %v4690 = vpop.permute.xlu0 %4689
        %4693 = vset.pattern.permute.xlu0 54
        %4694 = vperm.xlu0 %4693, %v4673
        %v4695 = vpop.permute.xlu0 %4694
        %4698 = vset.pattern.permute.xlu0 54
        %4699 = vperm.xlu0 %4698, %v4674
        %v4700 = vpop.permute.xlu0 %4699
        %4703 = vset.pattern.permute.xlu0 54
        %4704 = vperm.xlu0 %4703, %v4675
        %v4705 = vpop.permute.xlu0 %4704
        %4708 = vset.pattern.permute.xlu0 54
        %4709 = vperm.xlu0 %4708, %v4676
        %v4710 = vpop.permute.xlu0 %4709
        %v4712 = vsel %vm228, %v4680, 0.0
        %v4713 = vsel %vm228, %v4685, 0.0
        %v4714 = vsel %vm228, %v4690, 0.0
        %v4715 = vsel %vm228, %v4695, 0.0
        %v4716 = vsel %vm228, %v4700, 0.0
        %v4717 = vsel %vm228, %v4705, 0.0
        %v4718 = vsel %vm228, %v4710, 0.0
        %4720 = vset.pattern.permute.xlu0 1
        %4721 = vperm.xlu0 %4720, %v4642
        %v4722 = vpop.permute.xlu0 %4721
        %4725 = vset.pattern.permute.xlu0 1
        %4726 = vperm.xlu0 %4725, %v4643
        %v4727 = vpop.permute.xlu0 %4726
        %4730 = vset.pattern.permute.xlu0 1
        %4731 = vperm.xlu0 %4730, %v4644
        %v4732 = vpop.permute.xlu0 %4731
        %4735 = vset.pattern.permute.xlu0 1
        %4736 = vperm.xlu0 %4735, %v4645
        %v4737 = vpop.permute.xlu0 %4736
        %4740 = vset.pattern.permute.xlu0 1
        %4741 = vperm.xlu0 %4740, %v4646
        %v4742 = vpop.permute.xlu0 %4741
        %4745 = vset.pattern.permute.xlu0 1
        %4746 = vperm.xlu0 %4745, %v4647
        %v4747 = vpop.permute.xlu0 %4746
        %4750 = vset.pattern.permute.xlu0 1
        %4751 = vperm.xlu0 %4750, %v4648
        %v4752 = vpop.permute.xlu0 %4751
        %v4754 = vsel %vm227, %v4722, %v4712
        %v4755 = vsel %vm227, %v4727, %v4713
        %v4756 = vsel %vm227, %v4732, %v4714
        %v4757 = vsel %vm227, %v4737, %v4715
        %v4758 = vsel %vm227, %v4742, %v4716
        %v4759 = vsel %vm227, %v4747, %v4717
        %v4760 = vsel %vm227, %v4752, %v4718
        %4768 = vrot.lane.b32.xlu0 %v4754, 55
        %v4769 = vpop.permute.xlu0 %4768
        %4770 = vrot.lane.b32.xlu0 %v4755, 55
        %v4771 = vpop.permute.xlu0 %4770
        %4772 = vrot.lane.b32.xlu0 %v4756, 55
        %v4773 = vpop.permute.xlu0 %4772
        %4774 = vrot.lane.b32.xlu0 %v4757, 55
        %v4775 = vpop.permute.xlu0 %4774
        %4776 = vrot.lane.b32.xlu0 %v4758, 55
        %v4777 = vpop.permute.xlu0 %4776
        %4778 = vrot.lane.b32.xlu0 %v4759, 55
        %v4779 = vpop.permute.xlu0 %4778
        %4780 = vrot.lane.b32.xlu0 %v4760, 55
        %v4781 = vpop.permute.xlu0 %4780
        %v4789 = vadd.f32 %v4607, %v4769
        %v4790 = vadd.f32 %v4608, %v4771
        %v4791 = vadd.f32 %v4609, %v4773
        %v4792 = vadd.f32 %v4610, %v4775
        %v4793 = vadd.f32 %v4611, %v4777
        %v4794 = vadd.f32 %v4612, %v4779
        %v4795 = vadd.f32 %v4613, %v4781
        %v4796 = vmul.f32 %v4488, %v4488
        %v4797 = vmul.f32 %v4489, %v4489
        %v4798 = vmul.f32 %v4490, %v4490
        %v4799 = vmul.f32 %v4491, %v4491
        %v4800 = vmul.f32 %v4492, %v4492
        %v4801 = vmul.f32 %v4493, %v4493
        %v4802 = vmul.f32 %v4494, %v4494
        %v4803 = vmul.f32 %v4789, %v4789
        %v4804 = vmul.f32 %v4790, %v4790
        %v4805 = vmul.f32 %v4791, %v4791
        %v4806 = vmul.f32 %v4792, %v4792
        %v4807 = vmul.f32 %v4793, %v4793
        %v4808 = vmul.f32 %v4794, %v4794
        %v4809 = vmul.f32 %v4795, %v4795
        %4817 = vrot.lane.b32.xlu0 %v4803, 73
        %v4818 = vpop.permute.xlu0 %4817
        %4819 = vrot.lane.b32.xlu0 %v4804, 73
        %v4820 = vpop.permute.xlu0 %4819
        %4821 = vrot.lane.b32.xlu0 %v4805, 73
        %v4822 = vpop.permute.xlu0 %4821
        %4823 = vrot.lane.b32.xlu0 %v4806, 73
        %v4824 = vpop.permute.xlu0 %4823
        %4825 = vrot.lane.b32.xlu0 %v4807, 73
        %v4826 = vpop.permute.xlu0 %4825
        %4827 = vrot.lane.b32.xlu0 %v4808, 73
        %v4828 = vpop.permute.xlu0 %4827
        %4829 = vrot.lane.b32.xlu0 %v4809, 73
        %v4830 = vpop.permute.xlu0 %4829
        %v4838 = vadd.f32 %v4796, %v4818
        %v4839 = vadd.f32 %v4797, %v4820
        %v4840 = vadd.f32 %v4798, %v4822
        %v4841 = vadd.f32 %v4799, %v4824
        %v4842 = vadd.f32 %v4800, %v4826
        %v4843 = vadd.f32 %v4801, %v4828
        %v4844 = vadd.f32 %v4802, %v4830
        %v4845 = vrsqrt.pop %v4838
        %v4846 = vmul.f32 %v4845, %v4838
        %v4847 = vmul.f32 %v4846, %v4845
        %v4848 = vmul.f32 0.5, %v4847
        %v4849 = vsub.f32 1.5, %v4848
        %v4850 = vmul.f32 %v4845, %v4849
        %v4851 = vmul.f32 %v4838, %v4850
        %vm4852 = vcmp.eq.f32.partialorder %v4838, inf
        %v4853 = vsel %vm4852, %v4838, %v4851
        %vm4854 = vcmp.eq.f32.partialorder %v4838, 0.0
        %v4855 = vand.u32 %v4838, 2147483648
        %v4856 = vsel %vm4854, %v4855, %v4853
        %v4857 = vrsqrt.pop %v4839
        %v4858 = vmul.f32 %v4857, %v4839
        %v4859 = vmul.f32 %v4858, %v4857
        %v4860 = vmul.f32 0.5, %v4859
        %v4861 = vsub.f32 1.5, %v4860
        %v4862 = vmul.f32 %v4857, %v4861
        %v4863 = vmul.f32 %v4839, %v4862
        %vm4864 = vcmp.eq.f32.partialorder %v4839, inf
        %v4865 = vsel %vm4864, %v4839, %v4863
        %vm4866 = vcmp.eq.f32.partialorder %v4839, 0.0
        %v4867 = vand.u32 %v4839, 2147483648
        %v4868 = vsel %vm4866, %v4867, %v4865
        %v4869 = vrsqrt.pop %v4840
        %v4870 = vmul.f32 %v4869, %v4840
        %v4871 = vmul.f32 %v4870, %v4869
        %v4872 = vmul.f32 0.5, %v4871
        %v4873 = vsub.f32 1.5, %v4872
        %v4874 = vmul.f32 %v4869, %v4873
        %v4875 = vmul.f32 %v4840, %v4874
        %vm4876 = vcmp.eq.f32.partialorder %v4840, inf
        %v4877 = vsel %vm4876, %v4840, %v4875
        %vm4878 = vcmp.eq.f32.partialorder %v4840, 0.0
        %v4879 = vand.u32 %v4840, 2147483648
        %v4880 = vsel %vm4878, %v4879, %v4877
        %v4881 = vrsqrt.pop %v4841
        %v4882 = vmul.f32 %v4881, %v4841
        %v4883 = vmul.f32 %v4882, %v4881
        %v4884 = vmul.f32 0.5, %v4883
        %v4885 = vsub.f32 1.5, %v4884
        %v4886 = vmul.f32 %v4881, %v4885
        %v4887 = vmul.f32 %v4841, %v4886
        %vm4888 = vcmp.eq.f32.partialorder %v4841, inf
        %v4889 = vsel %vm4888, %v4841, %v4887
        %vm4890 = vcmp.eq.f32.partialorder %v4841, 0.0
        %v4891 = vand.u32 %v4841, 2147483648
        %v4892 = vsel %vm4890, %v4891, %v4889
        %v4893 = vrsqrt.pop %v4842
        %v4894 = vmul.f32 %v4893, %v4842
        %v4895 = vmul.f32 %v4894, %v4893
        %v4896 = vmul.f32 0.5, %v4895
        %v4897 = vsub.f32 1.5, %v4896
        %v4898 = vmul.f32 %v4893, %v4897
        %v4899 = vmul.f32 %v4842, %v4898
        %vm4900 = vcmp.eq.f32.partialorder %v4842, inf
        %v4901 = vsel %vm4900, %v4842, %v4899
        %vm4902 = vcmp.eq.f32.partialorder %v4842, 0.0
        %v4903 = vand.u32 %v4842, 2147483648
        %v4904 = vsel %vm4902, %v4903, %v4901
        %v4905 = vrsqrt.pop %v4843
        %v4906 = vmul.f32 %v4905, %v4843
        %v4907 = vmul.f32 %v4906, %v4905
        %v4908 = vmul.f32 0.5, %v4907
        %v4909 = vsub.f32 1.5, %v4908
        %v4910 = vmul.f32 %v4905, %v4909
        %v4911 = vmul.f32 %v4843, %v4910
        %vm4912 = vcmp.eq.f32.partialorder %v4843, inf
        %v4913 = vsel %vm4912, %v4843, %v4911
        %vm4914 = vcmp.eq.f32.partialorder %v4843, 0.0
        %v4915 = vand.u32 %v4843, 2147483648
        %v4916 = vsel %vm4914, %v4915, %v4913
        %v4917 = vrsqrt.pop %v4844
        %v4918 = vmul.f32 %v4917, %v4844
        %v4919 = vmul.f32 %v4918, %v4917
        %v4920 = vmul.f32 0.5, %v4919
        %v4921 = vsub.f32 1.5, %v4920
        %v4922 = vmul.f32 %v4917, %v4921
        %v4923 = vmul.f32 %v4844, %v4922
        %vm4924 = vcmp.eq.f32.partialorder %v4844, inf
        %v4925 = vsel %vm4924, %v4844, %v4923
        %vm4926 = vcmp.eq.f32.partialorder %v4844, 0.0
        %v4927 = vand.u32 %v4844, 2147483648
        %v4928 = vsel %vm4926, %v4927, %v4925
        %v4929 = vrcp.pop %v4488
        %v4930 = vrcp.pop %v4489
        %v4931 = vrcp.pop %v4490
        %v4932 = vrcp.pop %v4491
        %v4933 = vrcp.pop %v4492
        %v4934 = vrcp.pop %v4493
        %v4935 = vrcp.pop %v4494
        %4943 = vrot.lane.b32.xlu0 %v4929, 55
        %v4944 = vpop.permute.xlu0 %4943
        %4945 = vrot.lane.b32.xlu0 %v4930, 55
        %v4946 = vpop.permute.xlu0 %4945
        %4947 = vrot.lane.b32.xlu0 %v4931, 55
        %v4948 = vpop.permute.xlu0 %4947
        %4949 = vrot.lane.b32.xlu0 %v4932, 55
        %v4950 = vpop.permute.xlu0 %4949
        %4951 = vrot.lane.b32.xlu0 %v4933, 55
        %v4952 = vpop.permute.xlu0 %4951
        %4953 = vrot.lane.b32.xlu0 %v4934, 55
        %v4954 = vpop.permute.xlu0 %4953
        %4955 = vrot.lane.b32.xlu0 %v4935, 55
        %v4956 = vpop.permute.xlu0 %4955
        %v4964 = vmul.f32 %v4789, %v4944
        %v4965 = vmul.f32 %v4790, %v4946
        %v4966 = vmul.f32 %v4791, %v4948
        %v4967 = vmul.f32 %v4792, %v4950
        %v4968 = vmul.f32 %v4793, %v4952
        %v4969 = vmul.f32 %v4794, %v4954
        %v4970 = vmul.f32 %v4795, %v4956
        %vm4971 = vcmp.eq.f32.partialorder %v4488, 0.0
        %vm4972 = vcmp.eq.f32.partialorder %v4489, 0.0
        %vm4973 = vcmp.eq.f32.partialorder %v4490, 0.0
        %vm4974 = vcmp.eq.f32.partialorder %v4491, 0.0
        %vm4975 = vcmp.eq.f32.partialorder %v4492, 0.0
        %vm4976 = vcmp.eq.f32.partialorder %v4493, 0.0
        %vm4977 = vcmp.eq.f32.partialorder %v4494, 0.0
        %vm4978 = vmxor %vm4971, 1
        %vm4979 = vmxor %vm4972, 1
        %vm4980 = vmxor %vm4973, 1
        %vm4981 = vmxor %vm4974, 1
        %vm4982 = vmxor %vm4975, 1
        %vm4983 = vmxor %vm4976, 1
        %vm4984 = vmxor %vm4977, 1
        %vm4985 = vcmp.le.f32.partialorder %v4964, 2.7474775
        %vm4986 = vcmp.le.f32.partialorder %v4965, 2.7474775
        %vm4987 = vcmp.le.f32.partialorder %v4966, 2.7474775
        %vm4988 = vcmp.le.f32.partialorder %v4967, 2.7474775
        %vm4989 = vcmp.le.f32.partialorder %v4968, 2.7474775
        %vm4990 = vcmp.le.f32.partialorder %v4969, 2.7474775
        %vm4991 = vcmp.le.f32.partialorder %v4970, 2.7474775
        %vm4992 = vcmp.le.f32.partialorder %v4964, 1.1917536
        %vm4993 = vcmp.le.f32.partialorder %v4965, 1.1917536
        %vm4994 = vcmp.le.f32.partialorder %v4966, 1.1917536
        %vm4995 = vcmp.le.f32.partialorder %v4967, 1.1917536
        %vm4996 = vcmp.le.f32.partialorder %v4968, 1.1917536
        %vm4997 = vcmp.le.f32.partialorder %v4969, 1.1917536
        %vm4998 = vcmp.le.f32.partialorder %v4970, 1.1917536
        %vm4999 = vcmp.le.f32.partialorder %v4964, 0.57735026
        %vm5000 = vcmp.le.f32.partialorder %v4965, 0.57735026
        %vm5001 = vcmp.le.f32.partialorder %v4966, 0.57735026
        %vm5002 = vcmp.le.f32.partialorder %v4967, 0.57735026
        %vm5003 = vcmp.le.f32.partialorder %v4968, 0.57735026
        %vm5004 = vcmp.le.f32.partialorder %v4969, 0.57735026
        %vm5005 = vcmp.le.f32.partialorder %v4970, 0.57735026
        %vm5006 = vcmp.le.f32.partialorder %v4964, 0.17632698
        %vm5007 = vcmp.le.f32.partialorder %v4965, 0.17632698
        %vm5008 = vcmp.le.f32.partialorder %v4966, 0.17632698
        %vm5009 = vcmp.le.f32.partialorder %v4967, 0.17632698
        %vm5010 = vcmp.le.f32.partialorder %v4968, 0.17632698
        %vm5011 = vcmp.le.f32.partialorder %v4969, 0.17632698
        %vm5012 = vcmp.le.f32.partialorder %v4970, 0.17632698
        %vm5013 = vcmp.le.f32.partialorder %v4964, -0.17632698
        %vm5014 = vcmp.le.f32.partialorder %v4965, -0.17632698
        %vm5015 = vcmp.le.f32.partialorder %v4966, -0.17632698
        %vm5016 = vcmp.le.f32.partialorder %v4967, -0.17632698
        %vm5017 = vcmp.le.f32.partialorder %v4968, -0.17632698
        %vm5018 = vcmp.le.f32.partialorder %v4969, -0.17632698
        %vm5019 = vcmp.le.f32.partialorder %v4970, -0.17632698
        %vm5020 = vcmp.le.f32.partialorder %v4964, -0.57735026
        %vm5021 = vcmp.le.f32.partialorder %v4965, -0.57735026
        %vm5022 = vcmp.le.f32.partialorder %v4966, -0.57735026
        %vm5023 = vcmp.le.f32.partialorder %v4967, -0.57735026
        %vm5024 = vcmp.le.f32.partialorder %v4968, -0.57735026
        %vm5025 = vcmp.le.f32.partialorder %v4969, -0.57735026
        %vm5026 = vcmp.le.f32.partialorder %v4970, -0.57735026
        %vm5027 = vcmp.le.f32.partialorder %v4964, -1.1917536
        %vm5028 = vcmp.le.f32.partialorder %v4965, -1.1917536
        %vm5029 = vcmp.le.f32.partialorder %v4966, -1.1917536
        %vm5030 = vcmp.le.f32.partialorder %v4967, -1.1917536
        %vm5031 = vcmp.le.f32.partialorder %v4968, -1.1917536
        %vm5032 = vcmp.le.f32.partialorder %v4969, -1.1917536
        %vm5033 = vcmp.le.f32.partialorder %v4970, -1.1917536
        %vm5034 = vcmp.le.f32.partialorder %v4964, -2.7474775
        %vm5035 = vcmp.le.f32.partialorder %v4965, -2.7474775
        %vm5036 = vcmp.le.f32.partialorder %v4966, -2.7474775
        %vm5037 = vcmp.le.f32.partialorder %v4967, -2.7474775
        %vm5038 = vcmp.le.f32.partialorder %v4968, -2.7474775
        %vm5039 = vcmp.le.f32.partialorder %v4969, -2.7474775
        %vm5040 = vcmp.le.f32.partialorder %v4970, -2.7474775
        %vm5041 = vmxor %vm4985, 1
        %vm5042 = vmxor %vm4986, 1
        %vm5043 = vmxor %vm4987, 1
        %vm5044 = vmxor %vm4988, 1
        %vm5045 = vmxor %vm4989, 1
        %vm5046 = vmxor %vm4990, 1
        %vm5047 = vmxor %vm4991, 1
        %v5048 = vsel %vm4971, 1, 0
        %v5049 = vsel %vm4972, 1, 0
        %v5050 = vsel %vm4973, 1, 0
        %v5051 = vsel %vm4974, 1, 0
        %v5052 = vsel %vm4975, 1, 0
        %v5053 = vsel %vm4976, 1, 0
        %v5054 = vsel %vm4977, 1, 0
        %5055 = vrot.lane.b32.xlu0 %v5048, 55
        %v5056 = vpop.permute.xlu0 %5055
        %5057 = vrot.lane.b32.xlu0 %v5049, 55
        %v5058 = vpop.permute.xlu0 %5057
        %5059 = vrot.lane.b32.xlu0 %v5050, 55
        %v5060 = vpop.permute.xlu0 %5059
        %5061 = vrot.lane.b32.xlu0 %v5051, 55
        %v5062 = vpop.permute.xlu0 %5061
        %5063 = vrot.lane.b32.xlu0 %v5052, 55
        %v5064 = vpop.permute.xlu0 %5063
        %5065 = vrot.lane.b32.xlu0 %v5053, 55
        %v5066 = vpop.permute.xlu0 %5065
        %5067 = vrot.lane.b32.xlu0 %v5054, 55
        %v5068 = vpop.permute.xlu0 %5067
        %vm5069 = vcmp.ne.s32.totalorder %v5056, 0
        %vm5070 = vcmp.ne.s32.totalorder %v5058, 0
        %vm5071 = vcmp.ne.s32.totalorder %v5060, 0
        %vm5072 = vcmp.ne.s32.totalorder %v5062, 0
        %vm5073 = vcmp.ne.s32.totalorder %v5064, 0
        %vm5074 = vcmp.ne.s32.totalorder %v5066, 0
        %vm5075 = vcmp.ne.s32.totalorder %v5068, 0
        %vm5076 = vmor %vm5041, %vm5069
        %vm5077 = vmor %vm5042, %vm5070
        %vm5078 = vmor %vm5043, %vm5071
        %vm5079 = vmor %vm5044, %vm5072
        %vm5080 = vmor %vm5045, %vm5073
        %vm5081 = vmor %vm5046, %vm5074
        %vm5082 = vmor %vm5047, %vm5075
        %5090 = vrot.lane.b32.xlu0 %v4856, 55
        %v5091 = vpop.permute.xlu0 %5090
        %5092 = vrot.lane.b32.xlu0 %v4868, 55
        %v5093 = vpop.permute.xlu0 %5092
        %5094 = vrot.lane.b32.xlu0 %v4880, 55
        %v5095 = vpop.permute.xlu0 %5094
        %5096 = vrot.lane.b32.xlu0 %v4892, 55
        %v5097 = vpop.permute.xlu0 %5096
        %5098 = vrot.lane.b32.xlu0 %v4904, 55
        %v5099 = vpop.permute.xlu0 %5098
        %5100 = vrot.lane.b32.xlu0 %v4916, 55
        %v5101 = vpop.permute.xlu0 %5100
        %5102 = vrot.lane.b32.xlu0 %v4928, 55
        %v5103 = vpop.permute.xlu0 %5102
        %v5111 = vsel %vm5076, %v5091, 0.0
        %v5112 = vsel %vm5077, %v5093, 0.0
        %v5113 = vsel %vm5078, %v5095, 0.0
        %v5114 = vsel %vm5079, %v5097, 0.0
        %v5115 = vsel %vm5080, %v5099, 0.0
        %v5116 = vsel %vm5081, %v5101, 0.0
        %v5117 = vsel %vm5082, %v5103, 0.0
        %5125 = vrot.lane.b32.xlu0 %v5111, 73
        %v5126 = vpop.permute.xlu0 %5125
        %5127 = vrot.lane.b32.xlu0 %v5112, 73
        %v5128 = vpop.permute.xlu0 %5127
        %5129 = vrot.lane.b32.xlu0 %v5113, 73
        %v5130 = vpop.permute.xlu0 %5129
        %5131 = vrot.lane.b32.xlu0 %v5114, 73
        %v5132 = vpop.permute.xlu0 %5131
        %5133 = vrot.lane.b32.xlu0 %v5115, 73
        %v5134 = vpop.permute.xlu0 %5133
        %5135 = vrot.lane.b32.xlu0 %v5116, 73
        %v5136 = vpop.permute.xlu0 %5135
        %5137 = vrot.lane.b32.xlu0 %v5117, 73
        %v5138 = vpop.permute.xlu0 %5137
        %v5139 = vsel %vm1125, %v5126, 0
        %v5141 = vsel %vm1125, %v5128, 0
        %v5143 = vsel %vm1125, %v5130, 0
        %v5145 = vsel %vm1125, %v5132, 0
        %v5147 = vsel %vm1125, %v5134, 0
        %v5149 = vsel %vm1125, %v5136, 0
        %v5151 = vsel %vm1125, %v5138, 0
        %5153 = vmatpush.msra.mxu0 0.0
        %5154 = vmatpush.msra.mxu0 0.0
        %5155 = vmatpush.msra.mxu0 0.0
        %5156 = vmatpush.msra.mxu0 0.0
        %5157 = vmatpush.msra.mxu0 0.0
        %5158 = vmatpush.msra.mxu0 0.0
        %5159 = vmatpush.msra.mxu0 0.0
        %5160 = vmatpush.msra.mxu0 0.0
        %5161 = vmatpush.msra.mxu0 0.0
        %5162 = vmatpush.msra.mxu0 %v201
        %5163 = vmatpush.msra.mxu0 %v200
        %5164 = vmatpush.msra.mxu0 %v199
        %5165 = vmatpush.msra.mxu0 %v198
        %5166 = vmatpush.msra.mxu0 %v197
        %5167 = vmatpush.msra.mxu0 %v196
        %5168 = vmatpush.msra.mxu0 %v195
        %5169 = vmatmul.f32.gmra.mxu0 %v5139
        %v5170 = vpop.f32.mrf.mxu0
        %v5171 = vadd.f32 0.0, %v5170
        %5172 = vmatmul.f32.gmra.mxu0 %v5141
        %v5173 = vpop.f32.mrf.mxu0
        %v5174 = vadd.f32 0.0, %v5173
        %5175 = vmatmul.f32.gmra.mxu0 %v5143
        %v5176 = vpop.f32.mrf.mxu0
        %v5177 = vadd.f32 0.0, %v5176
        %5178 = vmatmul.f32.gmra.mxu0 %v5145
        %v5179 = vpop.f32.mrf.mxu0
        %v5180 = vadd.f32 0.0, %v5179
        %5181 = vmatmul.f32.gmra.mxu0 %v5147
        %v5182 = vpop.f32.mrf.mxu0
        %v5183 = vadd.f32 0.0, %v5182
        %5184 = vmatmul.f32.gmra.mxu0 %v5149
        %v5185 = vpop.f32.mrf.mxu0
        %v5186 = vadd.f32 0.0, %v5185
        %5187 = vmatmul.f32.gmra.mxu0 %v5151
        %v5188 = vpop.f32.mrf.mxu0
        %v5189 = vadd.f32 0.0, %v5188
        %5190 = vdwg.mxu0
        %5191 = vmatpush.msra.mxu0 0.0
        %5192 = vmatpush.msra.mxu0 0.0
        %5193 = vmatpush.msra.mxu0 0.0
        %5194 = vmatpush.msra.mxu0 0.0
        %5195 = vmatpush.msra.mxu0 0.0
        %5196 = vmatpush.msra.mxu0 0.0
        %5197 = vmatpush.msra.mxu0 0.0
        %5198 = vmatpush.msra.mxu0 0.0
        %5199 = vmatpush.msra.mxu0 0.0
        %5200 = vmatpush.msra.mxu0 %v5189
        %5201 = vmatpush.msra.mxu0 %v5186
        %5202 = vmatpush.msra.mxu0 %v5183
        %5203 = vmatpush.msra.mxu0 %v5180
        %5204 = vmatpush.msra.mxu0 %v5177
        %5205 = vmatpush.msra.mxu0 %v5174
        %5206 = vmatpush.msra.mxu0 %v5171
        %5207 = vmatmul.f32.gmra.mxu0 %v1179
        %v5208 = vpop.f32.mrf.mxu0
        %v5209 = vadd.f32 0.0, %v5208
        %5210 = vdwg.mxu0
        %v5211 = vmul.f32 %v5209, %v5209
        %vm5212 = vmxor %vm4992, 1
        %vm5213 = vmxor %vm4993, 1
        %vm5214 = vmxor %vm4994, 1
        %vm5215 = vmxor %vm4995, 1
        %vm5216 = vmxor %vm4996, 1
        %vm5217 = vmxor %vm4997, 1
        %vm5218 = vmxor %vm4998, 1
        %vm5219 = vmand %vm4985, %vm5212
        %vm5220 = vmand %vm4986, %vm5213
        %vm5221 = vmand %vm4987, %vm5214
        %vm5222 = vmand %vm4988, %vm5215
        %vm5223 = vmand %vm4989, %vm5216
        %vm5224 = vmand %vm4990, %vm5217
        %vm5225 = vmand %vm4991, %vm5218
        %v5226 = vsel %vm4978, 1, 0
        %v5227 = vsel %vm4979, 1, 0
        %v5228 = vsel %vm4980, 1, 0
        %v5229 = vsel %vm4981, 1, 0
        %v5230 = vsel %vm4982, 1, 0
        %v5231 = vsel %vm4983, 1, 0
        %v5232 = vsel %vm4984, 1, 0
        %5233 = vrot.lane.b32.xlu0 %v5226, 55
        %v5234 = vpop.permute.xlu0 %5233
        %5235 = vrot.lane.b32.xlu0 %v5227, 55
        %v5236 = vpop.permute.xlu0 %5235
        %5237 = vrot.lane.b32.xlu0 %v5228, 55
        %v5238 = vpop.permute.xlu0 %5237
        %5239 = vrot.lane.b32.xlu0 %v5229, 55
        %v5240 = vpop.permute.xlu0 %5239
        %5241 = vrot.lane.b32.xlu0 %v5230, 55
        %v5242 = vpop.permute.xlu0 %5241
        %5243 = vrot.lane.b32.xlu0 %v5231, 55
        %v5244 = vpop.permute.xlu0 %5243
        %5245 = vrot.lane.b32.xlu0 %v5232, 55
        %v5246 = vpop.permute.xlu0 %5245
        %vm5247 = vcmp.ne.s32.totalorder %v5234, 0
        %vm5248 = vcmp.ne.s32.totalorder %v5236, 0
        %vm5249 = vcmp.ne.s32.totalorder %v5238, 0
        %vm5250 = vcmp.ne.s32.totalorder %v5240, 0
        %vm5251 = vcmp.ne.s32.totalorder %v5242, 0
        %vm5252 = vcmp.ne.s32.totalorder %v5244, 0
        %vm5253 = vcmp.ne.s32.totalorder %v5246, 0
        %vm5254 = vmand %vm5219, %vm5247
        %vm5255 = vmand %vm5220, %vm5248
        %vm5256 = vmand %vm5221, %vm5249
        %vm5257 = vmand %vm5222, %vm5250
        %vm5258 = vmand %vm5223, %vm5251
        %vm5259 = vmand %vm5224, %vm5252
        %vm5260 = vmand %vm5225, %vm5253
        %v5261 = vsel %vm5254, %v5091, 0.0
        %v5262 = vsel %vm5255, %v5093, 0.0
        %v5263 = vsel %vm5256, %v5095, 0.0
        %v5264 = vsel %vm5257, %v5097, 0.0
        %v5265 = vsel %vm5258, %v5099, 0.0
        %v5266 = vsel %vm5259, %v5101, 0.0
        %v5267 = vsel %vm5260, %v5103, 0.0
        %5275 = vrot.lane.b32.xlu0 %v5261, 73
        %v5276 = vpop.permute.xlu0 %5275
        %5277 = vrot.lane.b32.xlu0 %v5262, 73
        %v5278 = vpop.permute.xlu0 %5277
        %5279 = vrot.lane.b32.xlu0 %v5263, 73
        %v5280 = vpop.permute.xlu0 %5279
        %5281 = vrot.lane.b32.xlu0 %v5264, 73
        %v5282 = vpop.permute.xlu0 %5281
        %5283 = vrot.lane.b32.xlu0 %v5265, 73
        %v5284 = vpop.permute.xlu0 %5283
        %5285 = vrot.lane.b32.xlu0 %v5266, 73
        %v5286 = vpop.permute.xlu0 %5285
        %5287 = vrot.lane.b32.xlu0 %v5267, 73
        %v5288 = vpop.permute.xlu0 %5287
        %v5289 = vsel %vm1125, %v5276, 0
        %v5291 = vsel %vm1125, %v5278, 0
        %v5293 = vsel %vm1125, %v5280, 0
        %v5295 = vsel %vm1125, %v5282, 0
        %v5297 = vsel %vm1125, %v5284, 0
        %v5299 = vsel %vm1125, %v5286, 0
        %v5301 = vsel %vm1125, %v5288, 0
        %5303 = vmatpush.msra.mxu0 0.0
        %5304 = vmatpush.msra.mxu0 0.0
        %5305 = vmatpush.msra.mxu0 0.0
        %5306 = vmatpush.msra.mxu0 0.0
        %5307 = vmatpush.msra.mxu0 0.0
        %5308 = vmatpush.msra.mxu0 0.0
        %5309 = vmatpush.msra.mxu0 0.0
        %5310 = vmatpush.msra.mxu0 0.0
        %5311 = vmatpush.msra.mxu0 0.0
        %5312 = vmatpush.msra.mxu0 %v201
        %5313 = vmatpush.msra.mxu0 %v200
        %5314 = vmatpush.msra.mxu0 %v199
        %5315 = vmatpush.msra.mxu0 %v198
        %5316 = vmatpush.msra.mxu0 %v197
        %5317 = vmatpush.msra.mxu0 %v196
        %5318 = vmatpush.msra.mxu0 %v195
        %5319 = vmatmul.f32.gmra.mxu0 %v5289
        %v5320 = vpop.f32.mrf.mxu0
        %v5321 = vadd.f32 0.0, %v5320
        %5322 = vmatmul.f32.gmra.mxu0 %v5291
        %v5323 = vpop.f32.mrf.mxu0
        %v5324 = vadd.f32 0.0, %v5323
        %5325 = vmatmul.f32.gmra.mxu0 %v5293
        %v5326 = vpop.f32.mrf.mxu0
        %v5327 = vadd.f32 0.0, %v5326
        %5328 = vmatmul.f32.gmra.mxu0 %v5295
        %v5329 = vpop.f32.mrf.mxu0
        %v5330 = vadd.f32 0.0, %v5329
        %5331 = vmatmul.f32.gmra.mxu0 %v5297
        %v5332 = vpop.f32.mrf.mxu0
        %v5333 = vadd.f32 0.0, %v5332
        %5334 = vmatmul.f32.gmra.mxu0 %v5299
        %v5335 = vpop.f32.mrf.mxu0
        %v5336 = vadd.f32 0.0, %v5335
        %5337 = vmatmul.f32.gmra.mxu0 %v5301
        %v5338 = vpop.f32.mrf.mxu0
        %v5339 = vadd.f32 0.0, %v5338
        %5340 = vdwg.mxu0
        %5341 = vmatpush.msra.mxu0 0.0
        %5342 = vmatpush.msra.mxu0 0.0
        %5343 = vmatpush.msra.mxu0 0.0
        %5344 = vmatpush.msra.mxu0 0.0
        %5345 = vmatpush.msra.mxu0 0.0
        %5346 = vmatpush.msra.mxu0 0.0
        %5347 = vmatpush.msra.mxu0 0.0
        %5348 = vmatpush.msra.mxu0 0.0
        %5349 = vmatpush.msra.mxu0 0.0
        %5350 = vmatpush.msra.mxu0 %v5339
        %5351 = vmatpush.msra.mxu0 %v5336
        %5352 = vmatpush.msra.mxu0 %v5333
        %5353 = vmatpush.msra.mxu0 %v5330
        %5354 = vmatpush.msra.mxu0 %v5327
        %5355 = vmatpush.msra.mxu0 %v5324
        %5356 = vmatpush.msra.mxu0 %v5321
        %5357 = vmatmul.f32.gmra.mxu0 %v1179
        %v5358 = vpop.f32.mrf.mxu0
        %v5359 = vadd.f32 0.0, %v5358
        %5360 = vdwg.mxu0
        %v5361 = vmul.f32 %v5359, %v5359
        %v5362 = vadd.f32 %v5211, %v5361
        %vm5363 = vmxor %vm4999, 1
        %vm5364 = vmxor %vm5000, 1
        %vm5365 = vmxor %vm5001, 1
        %vm5366 = vmxor %vm5002, 1
        %vm5367 = vmxor %vm5003, 1
        %vm5368 = vmxor %vm5004, 1
        %vm5369 = vmxor %vm5005, 1
        %vm5370 = vmand %vm4992, %vm5363
        %vm5371 = vmand %vm4993, %vm5364
        %vm5372 = vmand %vm4994, %vm5365
        %vm5373 = vmand %vm4995, %vm5366
        %vm5374 = vmand %vm4996, %vm5367
        %vm5375 = vmand %vm4997, %vm5368
        %vm5376 = vmand %vm4998, %vm5369
        %vm5377 = vmand %vm5370, %vm5247
        %vm5378 = vmand %vm5371, %vm5248
        %vm5379 = vmand %vm5372, %vm5249
        %vm5380 = vmand %vm5373, %vm5250
        %vm5381 = vmand %vm5374, %vm5251
        %vm5382 = vmand %vm5375, %vm5252
        %vm5383 = vmand %vm5376, %vm5253
        %v5384 = vsel %vm5377, %v5091, 0.0
        %v5385 = vsel %vm5378, %v5093, 0.0
        %v5386 = vsel %vm5379, %v5095, 0.0
        %v5387 = vsel %vm5380, %v5097, 0.0
        %v5388 = vsel %vm5381, %v5099, 0.0
        %v5389 = vsel %vm5382, %v5101, 0.0
        %v5390 = vsel %vm5383, %v5103, 0.0
        %5398 = vrot.lane.b32.xlu0 %v5384, 73
        %v5399 = vpop.permute.xlu0 %5398
        %5400 = vrot.lane.b32.xlu0 %v5385, 73
        %v5401 = vpop.permute.xlu0 %5400
        %5402 = vrot.lane.b32.xlu0 %v5386, 73
        %v5403 = vpop.permute.xlu0 %5402
        %5404 = vrot.lane.b32.xlu0 %v5387, 73
        %v5405 = vpop.permute.xlu0 %5404
        %5406 = vrot.lane.b32.xlu0 %v5388, 73
        %v5407 = vpop.permute.xlu0 %5406
        %5408 = vrot.lane.b32.xlu0 %v5389, 73
        %v5409 = vpop.permute.xlu0 %5408
        %5410 = vrot.lane.b32.xlu0 %v5390, 73
        %v5411 = vpop.permute.xlu0 %5410
        %v5412 = vsel %vm1125, %v5399, 0
        %v5414 = vsel %vm1125, %v5401, 0
        %v5416 = vsel %vm1125, %v5403, 0
        %v5418 = vsel %vm1125, %v5405, 0
        %v5420 = vsel %vm1125, %v5407, 0
        %v5422 = vsel %vm1125, %v5409, 0
        %v5424 = vsel %vm1125, %v5411, 0
        %5426 = vmatpush.msra.mxu0 0.0
        %5427 = vmatpush.msra.mxu0 0.0
        %5428 = vmatpush.msra.mxu0 0.0
        %5429 = vmatpush.msra.mxu0 0.0
        %5430 = vmatpush.msra.mxu0 0.0
        %5431 = vmatpush.msra.mxu0 0.0
        %5432 = vmatpush.msra.mxu0 0.0
        %5433 = vmatpush.msra.mxu0 0.0
        %5434 = vmatpush.msra.mxu0 0.0
        %5435 = vmatpush.msra.mxu0 %v201
        %5436 = vmatpush.msra.mxu0 %v200
        %5437 = vmatpush.msra.mxu0 %v199
        %5438 = vmatpush.msra.mxu0 %v198
        %5439 = vmatpush.msra.mxu0 %v197
        %5440 = vmatpush.msra.mxu0 %v196
        %5441 = vmatpush.msra.mxu0 %v195
        %5442 = vmatmul.f32.gmra.mxu0 %v5412
        %v5443 = vpop.f32.mrf.mxu0
        %v5444 = vadd.f32 0.0, %v5443
        %5445 = vmatmul.f32.gmra.mxu0 %v5414
        %v5446 = vpop.f32.mrf.mxu0
        %v5447 = vadd.f32 0.0, %v5446
        %5448 = vmatmul.f32.gmra.mxu0 %v5416
        %v5449 = vpop.f32.mrf.mxu0
        %v5450 = vadd.f32 0.0, %v5449
        %5451 = vmatmul.f32.gmra.mxu0 %v5418
        %v5452 = vpop.f32.mrf.mxu0
        %v5453 = vadd.f32 0.0, %v5452
        %5454 = vmatmul.f32.gmra.mxu0 %v5420
        %v5455 = vpop.f32.mrf.mxu0
        %v5456 = vadd.f32 0.0, %v5455
        %5457 = vmatmul.f32.gmra.mxu0 %v5422
        %v5458 = vpop.f32.mrf.mxu0
        %v5459 = vadd.f32 0.0, %v5458
        %5460 = vmatmul.f32.gmra.mxu0 %v5424
        %v5461 = vpop.f32.mrf.mxu0
        %v5462 = vadd.f32 0.0, %v5461
        %5463 = vdwg.mxu0
        %5464 = vmatpush.msra.mxu0 0.0
        %5465 = vmatpush.msra.mxu0 0.0
        %5466 = vmatpush.msra.mxu0 0.0
        %5467 = vmatpush.msra.mxu0 0.0
        %5468 = vmatpush.msra.mxu0 0.0
        %5469 = vmatpush.msra.mxu0 0.0
        %5470 = vmatpush.msra.mxu0 0.0
        %5471 = vmatpush.msra.mxu0 0.0
        %5472 = vmatpush.msra.mxu0 0.0
        %5473 = vmatpush.msra.mxu0 %v5462
        %5474 = vmatpush.msra.mxu0 %v5459
        %5475 = vmatpush.msra.mxu0 %v5456
        %5476 = vmatpush.msra.mxu0 %v5453
        %5477 = vmatpush.msra.mxu0 %v5450
        %5478 = vmatpush.msra.mxu0 %v5447
        %5479 = vmatpush.msra.mxu0 %v5444
        %5480 = vmatmul.f32.gmra.mxu0 %v1179
        %v5481 = vpop.f32.mrf.mxu0
        %v5482 = vadd.f32 0.0, %v5481
        %5483 = vdwg.mxu0
        %v5484 = vmul.f32 %v5482, %v5482
        %v5485 = vadd.f32 %v5362, %v5484
        %vm5486 = vmxor %vm5006, 1
        %vm5487 = vmxor %vm5007, 1
        %vm5488 = vmxor %vm5008, 1
        %vm5489 = vmxor %vm5009, 1
        %vm5490 = vmxor %vm5010, 1
        %vm5491 = vmxor %vm5011, 1
        %vm5492 = vmxor %vm5012, 1
        %vm5493 = vmand %vm4999, %vm5486
        %vm5494 = vmand %vm5000, %vm5487
        %vm5495 = vmand %vm5001, %vm5488
        %vm5496 = vmand %vm5002, %vm5489
        %vm5497 = vmand %vm5003, %vm5490
        %vm5498 = vmand %vm5004, %vm5491
        %vm5499 = vmand %vm5005, %vm5492
        %vm5500 = vmand %vm5493, %vm5247
        %vm5501 = vmand %vm5494, %vm5248
        %vm5502 = vmand %vm5495, %vm5249
        %vm5503 = vmand %vm5496, %vm5250
        %vm5504 = vmand %vm5497, %vm5251
        %vm5505 = vmand %vm5498, %vm5252
        %vm5506 = vmand %vm5499, %vm5253
        %v5507 = vsel %vm5500, %v5091, 0.0
        %v5508 = vsel %vm5501, %v5093, 0.0
        %v5509 = vsel %vm5502, %v5095, 0.0
        %v5510 = vsel %vm5503, %v5097, 0.0
        %v5511 = vsel %vm5504, %v5099, 0.0
        %v5512 = vsel %vm5505, %v5101, 0.0
        %v5513 = vsel %vm5506, %v5103, 0.0
        %5521 = vrot.lane.b32.xlu0 %v5507, 73
        %v5522 = vpop.permute.xlu0 %5521
        %5523 = vrot.lane.b32.xlu0 %v5508, 73
        %v5524 = vpop.permute.xlu0 %5523
        %5525 = vrot.lane.b32.xlu0 %v5509, 73
        %v5526 = vpop.permute.xlu0 %5525
        %5527 = vrot.lane.b32.xlu0 %v5510, 73
        %v5528 = vpop.permute.xlu0 %5527
        %5529 = vrot.lane.b32.xlu0 %v5511, 73
        %v5530 = vpop.permute.xlu0 %5529
        %5531 = vrot.lane.b32.xlu0 %v5512, 73
        %v5532 = vpop.permute.xlu0 %5531
        %5533 = vrot.lane.b32.xlu0 %v5513, 73
        %v5534 = vpop.permute.xlu0 %5533
        %v5535 = vsel %vm1125, %v5522, 0
        %v5537 = vsel %vm1125, %v5524, 0
        %v5539 = vsel %vm1125, %v5526, 0
        %v5541 = vsel %vm1125, %v5528, 0
        %v5543 = vsel %vm1125, %v5530, 0
        %v5545 = vsel %vm1125, %v5532, 0
        %v5547 = vsel %vm1125, %v5534, 0
        %5549 = vmatpush.msra.mxu0 0.0
        %5550 = vmatpush.msra.mxu0 0.0
        %5551 = vmatpush.msra.mxu0 0.0
        %5552 = vmatpush.msra.mxu0 0.0
        %5553 = vmatpush.msra.mxu0 0.0
        %5554 = vmatpush.msra.mxu0 0.0
        %5555 = vmatpush.msra.mxu0 0.0
        %5556 = vmatpush.msra.mxu0 0.0
        %5557 = vmatpush.msra.mxu0 0.0
        %5558 = vmatpush.msra.mxu0 %v201
        %5559 = vmatpush.msra.mxu0 %v200
        %5560 = vmatpush.msra.mxu0 %v199
        %5561 = vmatpush.msra.mxu0 %v198
        %5562 = vmatpush.msra.mxu0 %v197
        %5563 = vmatpush.msra.mxu0 %v196
        %5564 = vmatpush.msra.mxu0 %v195
        %5565 = vmatmul.f32.gmra.mxu0 %v5535
        %v5566 = vpop.f32.mrf.mxu0
        %v5567 = vadd.f32 0.0, %v5566
        %5568 = vmatmul.f32.gmra.mxu0 %v5537
        %v5569 = vpop.f32.mrf.mxu0
        %v5570 = vadd.f32 0.0, %v5569
        %5571 = vmatmul.f32.gmra.mxu0 %v5539
        %v5572 = vpop.f32.mrf.mxu0
        %v5573 = vadd.f32 0.0, %v5572
        %5574 = vmatmul.f32.gmra.mxu0 %v5541
        %v5575 = vpop.f32.mrf.mxu0
        %v5576 = vadd.f32 0.0, %v5575
        %5577 = vmatmul.f32.gmra.mxu0 %v5543
        %v5578 = vpop.f32.mrf.mxu0
        %v5579 = vadd.f32 0.0, %v5578
        %5580 = vmatmul.f32.gmra.mxu0 %v5545
        %v5581 = vpop.f32.mrf.mxu0
        %v5582 = vadd.f32 0.0, %v5581
        %5583 = vmatmul.f32.gmra.mxu0 %v5547
        %v5584 = vpop.f32.mrf.mxu0
        %v5585 = vadd.f32 0.0, %v5584
        %5586 = vdwg.mxu0
        %5587 = vmatpush.msra.mxu0 0.0
        %5588 = vmatpush.msra.mxu0 0.0
        %5589 = vmatpush.msra.mxu0 0.0
        %5590 = vmatpush.msra.mxu0 0.0
        %5591 = vmatpush.msra.mxu0 0.0
        %5592 = vmatpush.msra.mxu0 0.0
        %5593 = vmatpush.msra.mxu0 0.0
        %5594 = vmatpush.msra.mxu0 0.0
        %5595 = vmatpush.msra.mxu0 0.0
        %5596 = vmatpush.msra.mxu0 %v5585
        %5597 = vmatpush.msra.mxu0 %v5582
        %5598 = vmatpush.msra.mxu0 %v5579
        %5599 = vmatpush.msra.mxu0 %v5576
        %5600 = vmatpush.msra.mxu0 %v5573
        %5601 = vmatpush.msra.mxu0 %v5570
        %5602 = vmatpush.msra.mxu0 %v5567
        %5603 = vmatmul.f32.gmra.mxu0 %v1179
        %v5604 = vpop.f32.mrf.mxu0
        %v5605 = vadd.f32 0.0, %v5604
        %5606 = vdwg.mxu0
        %v5607 = vmul.f32 %v5605, %v5605
        %v5608 = vadd.f32 %v5485, %v5607
        %vm5609 = vmxor %vm5013, 1
        %vm5610 = vmxor %vm5014, 1
        %vm5611 = vmxor %vm5015, 1
        %vm5612 = vmxor %vm5016, 1
        %vm5613 = vmxor %vm5017, 1
        %vm5614 = vmxor %vm5018, 1
        %vm5615 = vmxor %vm5019, 1
        %vm5616 = vmand %vm5006, %vm5609
        %vm5617 = vmand %vm5007, %vm5610
        %vm5618 = vmand %vm5008, %vm5611
        %vm5619 = vmand %vm5009, %vm5612
        %vm5620 = vmand %vm5010, %vm5613
        %vm5621 = vmand %vm5011, %vm5614
        %vm5622 = vmand %vm5012, %vm5615
        %vm5623 = vmand %vm5616, %vm5247
        %vm5624 = vmand %vm5617, %vm5248
        %vm5625 = vmand %vm5618, %vm5249
        %vm5626 = vmand %vm5619, %vm5250
        %vm5627 = vmand %vm5620, %vm5251
        %vm5628 = vmand %vm5621, %vm5252
        %vm5629 = vmand %vm5622, %vm5253
        %v5630 = vsel %vm5623, %v5091, 0.0
        %v5631 = vsel %vm5624, %v5093, 0.0
        %v5632 = vsel %vm5625, %v5095, 0.0
        %v5633 = vsel %vm5626, %v5097, 0.0
        %v5634 = vsel %vm5627, %v5099, 0.0
        %v5635 = vsel %vm5628, %v5101, 0.0
        %v5636 = vsel %vm5629, %v5103, 0.0
        %5644 = vrot.lane.b32.xlu0 %v5630, 73
        %v5645 = vpop.permute.xlu0 %5644
        %5646 = vrot.lane.b32.xlu0 %v5631, 73
        %v5647 = vpop.permute.xlu0 %5646
        %5648 = vrot.lane.b32.xlu0 %v5632, 73
        %v5649 = vpop.permute.xlu0 %5648
        %5650 = vrot.lane.b32.xlu0 %v5633, 73
        %v5651 = vpop.permute.xlu0 %5650
        %5652 = vrot.lane.b32.xlu0 %v5634, 73
        %v5653 = vpop.permute.xlu0 %5652
        %5654 = vrot.lane.b32.xlu0 %v5635, 73
        %v5655 = vpop.permute.xlu0 %5654
        %5656 = vrot.lane.b32.xlu0 %v5636, 73
        %v5657 = vpop.permute.xlu0 %5656
        %v5658 = vsel %vm1125, %v5645, 0
        %v5660 = vsel %vm1125, %v5647, 0
        %v5662 = vsel %vm1125, %v5649, 0
        %v5664 = vsel %vm1125, %v5651, 0
        %v5666 = vsel %vm1125, %v5653, 0
        %v5668 = vsel %vm1125, %v5655, 0
        %v5670 = vsel %vm1125, %v5657, 0
        %5672 = vmatpush.msra.mxu0 0.0
        %5673 = vmatpush.msra.mxu0 0.0
        %5674 = vmatpush.msra.mxu0 0.0
        %5675 = vmatpush.msra.mxu0 0.0
        %5676 = vmatpush.msra.mxu0 0.0
        %5677 = vmatpush.msra.mxu0 0.0
        %5678 = vmatpush.msra.mxu0 0.0
        %5679 = vmatpush.msra.mxu0 0.0
        %5680 = vmatpush.msra.mxu0 0.0
        %5681 = vmatpush.msra.mxu0 %v201
        %5682 = vmatpush.msra.mxu0 %v200
        %5683 = vmatpush.msra.mxu0 %v199
        %5684 = vmatpush.msra.mxu0 %v198
        %5685 = vmatpush.msra.mxu0 %v197
        %5686 = vmatpush.msra.mxu0 %v196
        %5687 = vmatpush.msra.mxu0 %v195
        %5688 = vmatmul.f32.gmra.mxu0 %v5658
        %v5689 = vpop.f32.mrf.mxu0
        %v5690 = vadd.f32 0.0, %v5689
        %5691 = vmatmul.f32.gmra.mxu0 %v5660
        %v5692 = vpop.f32.mrf.mxu0
        %v5693 = vadd.f32 0.0, %v5692
        %5694 = vmatmul.f32.gmra.mxu0 %v5662
        %v5695 = vpop.f32.mrf.mxu0
        %v5696 = vadd.f32 0.0, %v5695
        %5697 = vmatmul.f32.gmra.mxu0 %v5664
        %v5698 = vpop.f32.mrf.mxu0
        %v5699 = vadd.f32 0.0, %v5698
        %5700 = vmatmul.f32.gmra.mxu0 %v5666
        %v5701 = vpop.f32.mrf.mxu0
        %v5702 = vadd.f32 0.0, %v5701
        %5703 = vmatmul.f32.gmra.mxu0 %v5668
        %v5704 = vpop.f32.mrf.mxu0
        %v5705 = vadd.f32 0.0, %v5704
        %5706 = vmatmul.f32.gmra.mxu0 %v5670
        %v5707 = vpop.f32.mrf.mxu0
        %v5708 = vadd.f32 0.0, %v5707
        %5709 = vdwg.mxu0
        %5710 = vmatpush.msra.mxu0 0.0
        %5711 = vmatpush.msra.mxu0 0.0
        %5712 = vmatpush.msra.mxu0 0.0
        %5713 = vmatpush.msra.mxu0 0.0
        %5714 = vmatpush.msra.mxu0 0.0
        %5715 = vmatpush.msra.mxu0 0.0
        %5716 = vmatpush.msra.mxu0 0.0
        %5717 = vmatpush.msra.mxu0 0.0
        %5718 = vmatpush.msra.mxu0 0.0
        %5719 = vmatpush.msra.mxu0 %v5708
        %5720 = vmatpush.msra.mxu0 %v5705
        %5721 = vmatpush.msra.mxu0 %v5702
        %5722 = vmatpush.msra.mxu0 %v5699
        %5723 = vmatpush.msra.mxu0 %v5696
        %5724 = vmatpush.msra.mxu0 %v5693
        %5725 = vmatpush.msra.mxu0 %v5690
        %5726 = vmatmul.f32.gmra.mxu0 %v1179
        %v5727 = vpop.f32.mrf.mxu0
        %v5728 = vadd.f32 0.0, %v5727
        %5729 = vdwg.mxu0
        %v5730 = vmul.f32 %v5728, %v5728
        %v5731 = vadd.f32 %v5608, %v5730
        %vm5732 = vmxor %vm5020, 1
        %vm5733 = vmxor %vm5021, 1
        %vm5734 = vmxor %vm5022, 1
        %vm5735 = vmxor %vm5023, 1
        %vm5736 = vmxor %vm5024, 1
        %vm5737 = vmxor %vm5025, 1
        %vm5738 = vmxor %vm5026, 1
        %vm5739 = vmand %vm5013, %vm5732
        %vm5740 = vmand %vm5014, %vm5733
        %vm5741 = vmand %vm5015, %vm5734
        %vm5742 = vmand %vm5016, %vm5735
        %vm5743 = vmand %vm5017, %vm5736
        %vm5744 = vmand %vm5018, %vm5737
        %vm5745 = vmand %vm5019, %vm5738
        %vm5746 = vmand %vm5739, %vm5247
        %vm5747 = vmand %vm5740, %vm5248
        %vm5748 = vmand %vm5741, %vm5249
        %vm5749 = vmand %vm5742, %vm5250
        %vm5750 = vmand %vm5743, %vm5251
        %vm5751 = vmand %vm5744, %vm5252
        %vm5752 = vmand %vm5745, %vm5253
        %v5753 = vsel %vm5746, %v5091, 0.0
        %v5754 = vsel %vm5747, %v5093, 0.0
        %v5755 = vsel %vm5748, %v5095, 0.0
        %v5756 = vsel %vm5749, %v5097, 0.0
        %v5757 = vsel %vm5750, %v5099, 0.0
        %v5758 = vsel %vm5751, %v5101, 0.0
        %v5759 = vsel %vm5752, %v5103, 0.0
        %5767 = vrot.lane.b32.xlu0 %v5753, 73
        %v5768 = vpop.permute.xlu0 %5767
        %5769 = vrot.lane.b32.xlu0 %v5754, 73
        %v5770 = vpop.permute.xlu0 %5769
        %5771 = vrot.lane.b32.xlu0 %v5755, 73
        %v5772 = vpop.permute.xlu0 %5771
        %5773 = vrot.lane.b32.xlu0 %v5756, 73
        %v5774 = vpop.permute.xlu0 %5773
        %5775 = vrot.lane.b32.xlu0 %v5757, 73
        %v5776 = vpop.permute.xlu0 %5775
        %5777 = vrot.lane.b32.xlu0 %v5758, 73
        %v5778 = vpop.permute.xlu0 %5777
        %5779 = vrot.lane.b32.xlu0 %v5759, 73
        %v5780 = vpop.permute.xlu0 %5779
        %v5781 = vsel %vm1125, %v5768, 0
        %v5783 = vsel %vm1125, %v5770, 0
        %v5785 = vsel %vm1125, %v5772, 0
        %v5787 = vsel %vm1125, %v5774, 0
        %v5789 = vsel %vm1125, %v5776, 0
        %v5791 = vsel %vm1125, %v5778, 0
        %v5793 = vsel %vm1125, %v5780, 0
        %5795 = vmatpush.msra.mxu0 0.0
        %5796 = vmatpush.msra.mxu0 0.0
        %5797 = vmatpush.msra.mxu0 0.0
        %5798 = vmatpush.msra.mxu0 0.0
        %5799 = vmatpush.msra.mxu0 0.0
        %5800 = vmatpush.msra.mxu0 0.0
        %5801 = vmatpush.msra.mxu0 0.0
        %5802 = vmatpush.msra.mxu0 0.0
        %5803 = vmatpush.msra.mxu0 0.0
        %5804 = vmatpush.msra.mxu0 %v201
        %5805 = vmatpush.msra.mxu0 %v200
        %5806 = vmatpush.msra.mxu0 %v199
        %5807 = vmatpush.msra.mxu0 %v198
        %5808 = vmatpush.msra.mxu0 %v197
        %5809 = vmatpush.msra.mxu0 %v196
        %5810 = vmatpush.msra.mxu0 %v195
        %5811 = vmatmul.f32.gmra.mxu0 %v5781
        %v5812 = vpop.f32.mrf.mxu0
        %v5813 = vadd.f32 0.0, %v5812
        %5814 = vmatmul.f32.gmra.mxu0 %v5783
        %v5815 = vpop.f32.mrf.mxu0
        %v5816 = vadd.f32 0.0, %v5815
        %5817 = vmatmul.f32.gmra.mxu0 %v5785
        %v5818 = vpop.f32.mrf.mxu0
        %v5819 = vadd.f32 0.0, %v5818
        %5820 = vmatmul.f32.gmra.mxu0 %v5787
        %v5821 = vpop.f32.mrf.mxu0
        %v5822 = vadd.f32 0.0, %v5821
        %5823 = vmatmul.f32.gmra.mxu0 %v5789
        %v5824 = vpop.f32.mrf.mxu0
        %v5825 = vadd.f32 0.0, %v5824
        %5826 = vmatmul.f32.gmra.mxu0 %v5791
        %v5827 = vpop.f32.mrf.mxu0
        %v5828 = vadd.f32 0.0, %v5827
        %5829 = vmatmul.f32.gmra.mxu0 %v5793
        %v5830 = vpop.f32.mrf.mxu0
        %v5831 = vadd.f32 0.0, %v5830
        %5832 = vdwg.mxu0
        %5833 = vmatpush.msra.mxu0 0.0
        %5834 = vmatpush.msra.mxu0 0.0
        %5835 = vmatpush.msra.mxu0 0.0
        %5836 = vmatpush.msra.mxu0 0.0
        %5837 = vmatpush.msra.mxu0 0.0
        %5838 = vmatpush.msra.mxu0 0.0
        %5839 = vmatpush.msra.mxu0 0.0
        %5840 = vmatpush.msra.mxu0 0.0
        %5841 = vmatpush.msra.mxu0 0.0
        %5842 = vmatpush.msra.mxu0 %v5831
        %5843 = vmatpush.msra.mxu0 %v5828
        %5844 = vmatpush.msra.mxu0 %v5825
        %5845 = vmatpush.msra.mxu0 %v5822
        %5846 = vmatpush.msra.mxu0 %v5819
        %5847 = vmatpush.msra.mxu0 %v5816
        %5848 = vmatpush.msra.mxu0 %v5813
        %5849 = vmatmul.f32.gmra.mxu0 %v1179
        %v5850 = vpop.f32.mrf.mxu0
        %v5851 = vadd.f32 0.0, %v5850
        %5852 = vdwg.mxu0
        %v5853 = vmul.f32 %v5851, %v5851
        %v5854 = vadd.f32 %v5731, %v5853
        %vm5855 = vmxor %vm5027, 1
        %vm5856 = vmxor %vm5028, 1
        %vm5857 = vmxor %vm5029, 1
        %vm5858 = vmxor %vm5030, 1
        %vm5859 = vmxor %vm5031, 1
        %vm5860 = vmxor %vm5032, 1
        %vm5861 = vmxor %vm5033, 1
        %vm5862 = vmand %vm5020, %vm5855
        %vm5863 = vmand %vm5021, %vm5856
        %vm5864 = vmand %vm5022, %vm5857
        %vm5865 = vmand %vm5023, %vm5858
        %vm5866 = vmand %vm5024, %vm5859
        %vm5867 = vmand %vm5025, %vm5860
        %vm5868 = vmand %vm5026, %vm5861
        %vm5869 = vmand %vm5862, %vm5247
        %vm5870 = vmand %vm5863, %vm5248
        %vm5871 = vmand %vm5864, %vm5249
        %vm5872 = vmand %vm5865, %vm5250
        %vm5873 = vmand %vm5866, %vm5251
        %vm5874 = vmand %vm5867, %vm5252
        %vm5875 = vmand %vm5868, %vm5253
        %v5876 = vsel %vm5869, %v5091, 0.0
        %v5877 = vsel %vm5870, %v5093, 0.0
        %v5878 = vsel %vm5871, %v5095, 0.0
        %v5879 = vsel %vm5872, %v5097, 0.0
        %v5880 = vsel %vm5873, %v5099, 0.0
        %v5881 = vsel %vm5874, %v5101, 0.0
        %v5882 = vsel %vm5875, %v5103, 0.0
        %5890 = vrot.lane.b32.xlu0 %v5876, 73
        %v5891 = vpop.permute.xlu0 %5890
        %5892 = vrot.lane.b32.xlu0 %v5877, 73
        %v5893 = vpop.permute.xlu0 %5892
        %5894 = vrot.lane.b32.xlu0 %v5878, 73
        %v5895 = vpop.permute.xlu0 %5894
        %5896 = vrot.lane.b32.xlu0 %v5879, 73
        %v5897 = vpop.permute.xlu0 %5896
        %5898 = vrot.lane.b32.xlu0 %v5880, 73
        %v5899 = vpop.permute.xlu0 %5898
        %5900 = vrot.lane.b32.xlu0 %v5881, 73
        %v5901 = vpop.permute.xlu0 %5900
        %5902 = vrot.lane.b32.xlu0 %v5882, 73
        %v5903 = vpop.permute.xlu0 %5902
        %v5904 = vsel %vm1125, %v5891, 0
        %v5906 = vsel %vm1125, %v5893, 0
        %v5908 = vsel %vm1125, %v5895, 0
        %v5910 = vsel %vm1125, %v5897, 0
        %v5912 = vsel %vm1125, %v5899, 0
        %v5914 = vsel %vm1125, %v5901, 0
        %v5916 = vsel %vm1125, %v5903, 0
        %5918 = vmatpush.msra.mxu0 0.0
        %5919 = vmatpush.msra.mxu0 0.0
        %5920 = vmatpush.msra.mxu0 0.0
        %5921 = vmatpush.msra.mxu0 0.0
        %5922 = vmatpush.msra.mxu0 0.0
        %5923 = vmatpush.msra.mxu0 0.0
        %5924 = vmatpush.msra.mxu0 0.0
        %5925 = vmatpush.msra.mxu0 0.0
        %5926 = vmatpush.msra.mxu0 0.0
        %5927 = vmatpush.msra.mxu0 %v201
        %5928 = vmatpush.msra.mxu0 %v200
        %5929 = vmatpush.msra.mxu0 %v199
        %5930 = vmatpush.msra.mxu0 %v198
        %5931 = vmatpush.msra.mxu0 %v197
        %5932 = vmatpush.msra.mxu0 %v196
        %5933 = vmatpush.msra.mxu0 %v195
        %5934 = vmatmul.f32.gmra.mxu0 %v5904
        %v5935 = vpop.f32.mrf.mxu0
        %v5936 = vadd.f32 0.0, %v5935
        %5937 = vmatmul.f32.gmra.mxu0 %v5906
        %v5938 = vpop.f32.mrf.mxu0
        %v5939 = vadd.f32 0.0, %v5938
        %5940 = vmatmul.f32.gmra.mxu0 %v5908
        %v5941 = vpop.f32.mrf.mxu0
        %v5942 = vadd.f32 0.0, %v5941
        %5943 = vmatmul.f32.gmra.mxu0 %v5910
        %v5944 = vpop.f32.mrf.mxu0
        %v5945 = vadd.f32 0.0, %v5944
        %5946 = vmatmul.f32.gmra.mxu0 %v5912
        %v5947 = vpop.f32.mrf.mxu0
        %v5948 = vadd.f32 0.0, %v5947
        %5949 = vmatmul.f32.gmra.mxu0 %v5914
        %v5950 = vpop.f32.mrf.mxu0
        %v5951 = vadd.f32 0.0, %v5950
        %5952 = vmatmul.f32.gmra.mxu0 %v5916
        %v5953 = vpop.f32.mrf.mxu0
        %v5954 = vadd.f32 0.0, %v5953
        %5955 = vdwg.mxu0
        %5956 = vmatpush.msra.mxu0 0.0
        %5957 = vmatpush.msra.mxu0 0.0
        %5958 = vmatpush.msra.mxu0 0.0
        %5959 = vmatpush.msra.mxu0 0.0
        %5960 = vmatpush.msra.mxu0 0.0
        %5961 = vmatpush.msra.mxu0 0.0
        %5962 = vmatpush.msra.mxu0 0.0
        %5963 = vmatpush.msra.mxu0 0.0
        %5964 = vmatpush.msra.mxu0 0.0
        %5965 = vmatpush.msra.mxu0 %v5954
        %5966 = vmatpush.msra.mxu0 %v5951
        %5967 = vmatpush.msra.mxu0 %v5948
        %5968 = vmatpush.msra.mxu0 %v5945
        %5969 = vmatpush.msra.mxu0 %v5942
        %5970 = vmatpush.msra.mxu0 %v5939
        %5971 = vmatpush.msra.mxu0 %v5936
        %5972 = vmatmul.f32.gmra.mxu0 %v1179
        %v5973 = vpop.f32.mrf.mxu0
        %v5974 = vadd.f32 0.0, %v5973
        %5975 = vdwg.mxu0
        %v5976 = vmul.f32 %v5974, %v5974
        %v5977 = vadd.f32 %v5854, %v5976
        %vm5978 = vmxor %vm5034, 1
        %vm5979 = vmxor %vm5035, 1
        %vm5980 = vmxor %vm5036, 1
        %vm5981 = vmxor %vm5037, 1
        %vm5982 = vmxor %vm5038, 1
        %vm5983 = vmxor %vm5039, 1
        %vm5984 = vmxor %vm5040, 1
        %vm5985 = vmand %vm5027, %vm5978
        %vm5986 = vmand %vm5028, %vm5979
        %vm5987 = vmand %vm5029, %vm5980
        %vm5988 = vmand %vm5030, %vm5981
        %vm5989 = vmand %vm5031, %vm5982
        %vm5990 = vmand %vm5032, %vm5983
        %vm5991 = vmand %vm5033, %vm5984
        %vm5992 = vmand %vm5985, %vm5247
        %vm5993 = vmand %vm5986, %vm5248
        %vm5994 = vmand %vm5987, %vm5249
        %vm5995 = vmand %vm5988, %vm5250
        %vm5996 = vmand %vm5989, %vm5251
        %vm5997 = vmand %vm5990, %vm5252
        %vm5998 = vmand %vm5991, %vm5253
        %v5999 = vsel %vm5992, %v5091, 0.0
        %v6000 = vsel %vm5993, %v5093, 0.0
        %v6001 = vsel %vm5994, %v5095, 0.0
        %v6002 = vsel %vm5995, %v5097, 0.0
        %v6003 = vsel %vm5996, %v5099, 0.0
        %v6004 = vsel %vm5997, %v5101, 0.0
        %v6005 = vsel %vm5998, %v5103, 0.0
        %6013 = vrot.lane.b32.xlu0 %v5999, 73
        %v6014 = vpop.permute.xlu0 %6013
        %6015 = vrot.lane.b32.xlu0 %v6000, 73
        %v6016 = vpop.permute.xlu0 %6015
        %6017 = vrot.lane.b32.xlu0 %v6001, 73
        %v6018 = vpop.permute.xlu0 %6017
        %6019 = vrot.lane.b32.xlu0 %v6002, 73
        %v6020 = vpop.permute.xlu0 %6019
        %6021 = vrot.lane.b32.xlu0 %v6003, 73
        %v6022 = vpop.permute.xlu0 %6021
        %6023 = vrot.lane.b32.xlu0 %v6004, 73
        %v6024 = vpop.permute.xlu0 %6023
        %6025 = vrot.lane.b32.xlu0 %v6005, 73
        %v6026 = vpop.permute.xlu0 %6025
        %v6027 = vsel %vm1125, %v6014, 0
        %v6029 = vsel %vm1125, %v6016, 0
        %v6031 = vsel %vm1125, %v6018, 0
        %v6033 = vsel %vm1125, %v6020, 0
        %v6035 = vsel %vm1125, %v6022, 0
        %v6037 = vsel %vm1125, %v6024, 0
        %v6039 = vsel %vm1125, %v6026, 0
        %6041 = vmatpush.msra.mxu0 0.0
        %6042 = vmatpush.msra.mxu0 0.0
        %6043 = vmatpush.msra.mxu0 0.0
        %6044 = vmatpush.msra.mxu0 0.0
        %6045 = vmatpush.msra.mxu0 0.0
        %6046 = vmatpush.msra.mxu0 0.0
        %6047 = vmatpush.msra.mxu0 0.0
        %6048 = vmatpush.msra.mxu0 0.0
        %6049 = vmatpush.msra.mxu0 0.0
        %6050 = vmatpush.msra.mxu0 %v201
        %6051 = vmatpush.msra.mxu0 %v200
        %6052 = vmatpush.msra.mxu0 %v199
        %6053 = vmatpush.msra.mxu0 %v198
        %6054 = vmatpush.msra.mxu0 %v197
        %6055 = vmatpush.msra.mxu0 %v196
        %6056 = vmatpush.msra.mxu0 %v195
        %6057 = vmatmul.f32.gmra.mxu0 %v6027
        %v6058 = vpop.f32.mrf.mxu0
        %v6059 = vadd.f32 0.0, %v6058
        %6060 = vmatmul.f32.gmra.mxu0 %v6029
        %v6061 = vpop.f32.mrf.mxu0
        %v6062 = vadd.f32 0.0, %v6061
        %6063 = vmatmul.f32.gmra.mxu0 %v6031
        %v6064 = vpop.f32.mrf.mxu0
        %v6065 = vadd.f32 0.0, %v6064
        %6066 = vmatmul.f32.gmra.mxu0 %v6033
        %v6067 = vpop.f32.mrf.mxu0
        %v6068 = vadd.f32 0.0, %v6067
        %6069 = vmatmul.f32.gmra.mxu0 %v6035
        %v6070 = vpop.f32.mrf.mxu0
        %v6071 = vadd.f32 0.0, %v6070
        %6072 = vmatmul.f32.gmra.mxu0 %v6037
        %v6073 = vpop.f32.mrf.mxu0
        %v6074 = vadd.f32 0.0, %v6073
        %6075 = vmatmul.f32.gmra.mxu0 %v6039
        %v6076 = vpop.f32.mrf.mxu0
        %v6077 = vadd.f32 0.0, %v6076
        %6078 = vdwg.mxu0
        %6079 = vmatpush.msra.mxu0 0.0
        %6080 = vmatpush.msra.mxu0 0.0
        %6081 = vmatpush.msra.mxu0 0.0
        %6082 = vmatpush.msra.mxu0 0.0
        %6083 = vmatpush.msra.mxu0 0.0
        %6084 = vmatpush.msra.mxu0 0.0
        %6085 = vmatpush.msra.mxu0 0.0
        %6086 = vmatpush.msra.mxu0 0.0
        %6087 = vmatpush.msra.mxu0 0.0
        %6088 = vmatpush.msra.mxu0 %v6077
        %6089 = vmatpush.msra.mxu0 %v6074
        %6090 = vmatpush.msra.mxu0 %v6071
        %6091 = vmatpush.msra.mxu0 %v6068
        %6092 = vmatpush.msra.mxu0 %v6065
        %6093 = vmatpush.msra.mxu0 %v6062
        %6094 = vmatpush.msra.mxu0 %v6059
        %6095 = vmatmul.f32.gmra.mxu0 %v1179
        %v6096 = vpop.f32.mrf.mxu0
        %v6097 = vadd.f32 0.0, %v6096
        %6098 = vdwg.mxu0
        %v6099 = vmul.f32 %v6097, %v6097
        %v6100 = vadd.f32 %v5977, %v6099
        %vm6101 = vmand %vm5034, %vm5247
        %vm6102 = vmand %vm5035, %vm5248
        %vm6103 = vmand %vm5036, %vm5249
        %vm6104 = vmand %vm5037, %vm5250
        %vm6105 = vmand %vm5038, %vm5251
        %vm6106 = vmand %vm5039, %vm5252
        %vm6107 = vmand %vm5040, %vm5253
        %v6108 = vsel %vm6101, %v5091, 0.0
        %v6109 = vsel %vm6102, %v5093, 0.0
        %v6110 = vsel %vm6103, %v5095, 0.0
        %v6111 = vsel %vm6104, %v5097, 0.0
        %v6112 = vsel %vm6105, %v5099, 0.0
        %v6113 = vsel %vm6106, %v5101, 0.0
        %v6114 = vsel %vm6107, %v5103, 0.0
        %6122 = vrot.lane.b32.xlu0 %v6108, 73
        %v6123 = vpop.permute.xlu0 %6122
        %6124 = vrot.lane.b32.xlu0 %v6109, 73
        %v6125 = vpop.permute.xlu0 %6124
        %6126 = vrot.lane.b32.xlu0 %v6110, 73
        %v6127 = vpop.permute.xlu0 %6126
        %6128 = vrot.lane.b32.xlu0 %v6111, 73
        %v6129 = vpop.permute.xlu0 %6128
        %6130 = vrot.lane.b32.xlu0 %v6112, 73
        %v6131 = vpop.permute.xlu0 %6130
        %6132 = vrot.lane.b32.xlu0 %v6113, 73
        %v6133 = vpop.permute.xlu0 %6132
        %6134 = vrot.lane.b32.xlu0 %v6114, 73
        %v6135 = vpop.permute.xlu0 %6134
        %v6136 = vsel %vm1125, %v6123, 0
        %v6138 = vsel %vm1125, %v6125, 0
        %v6140 = vsel %vm1125, %v6127, 0
        %v6142 = vsel %vm1125, %v6129, 0
        %v6144 = vsel %vm1125, %v6131, 0
        %v6146 = vsel %vm1125, %v6133, 0
        %v6148 = vsel %vm1125, %v6135, 0
        %6150 = vmatpush.msra.mxu0 0.0
        %6151 = vmatpush.msra.mxu0 0.0
        %6152 = vmatpush.msra.mxu0 0.0
        %6153 = vmatpush.msra.mxu0 0.0
        %6154 = vmatpush.msra.mxu0 0.0
        %6155 = vmatpush.msra.mxu0 0.0
        %6156 = vmatpush.msra.mxu0 0.0
        %6157 = vmatpush.msra.mxu0 0.0
        %6158 = vmatpush.msra.mxu0 0.0
        %6159 = vmatpush.msra.mxu0 %v201
        %6160 = vmatpush.msra.mxu0 %v200
        %6161 = vmatpush.msra.mxu0 %v199
        %6162 = vmatpush.msra.mxu0 %v198
        %6163 = vmatpush.msra.mxu0 %v197
        %6164 = vmatpush.msra.mxu0 %v196
        %6165 = vmatpush.msra.mxu0 %v195
        %6166 = vmatmul.f32.gmra.mxu0 %v6136
        %v6167 = vpop.f32.mrf.mxu0
        %v6168 = vadd.f32 0.0, %v6167
        %6169 = vmatmul.f32.gmra.mxu0 %v6138
        %v6170 = vpop.f32.mrf.mxu0
        %v6171 = vadd.f32 0.0, %v6170
        %6172 = vmatmul.f32.gmra.mxu0 %v6140
        %v6173 = vpop.f32.mrf.mxu0
        %v6174 = vadd.f32 0.0, %v6173
        %6175 = vmatmul.f32.gmra.mxu0 %v6142
        %v6176 = vpop.f32.mrf.mxu0
        %v6177 = vadd.f32 0.0, %v6176
        %6178 = vmatmul.f32.gmra.mxu0 %v6144
        %v6179 = vpop.f32.mrf.mxu0
        %v6180 = vadd.f32 0.0, %v6179
        %6181 = vmatmul.f32.gmra.mxu0 %v6146
        %v6182 = vpop.f32.mrf.mxu0
        %v6183 = vadd.f32 0.0, %v6182
        %6184 = vmatmul.f32.gmra.mxu0 %v6148
        %v6185 = vpop.f32.mrf.mxu0
        %v6186 = vadd.f32 0.0, %v6185
        %6187 = vdwg.mxu0
        %6188 = vmatpush.msra.mxu0 0.0
        %6189 = vmatpush.msra.mxu0 0.0
        %6190 = vmatpush.msra.mxu0 0.0
        %6191 = vmatpush.msra.mxu0 0.0
        %6192 = vmatpush.msra.mxu0 0.0
        %6193 = vmatpush.msra.mxu0 0.0
        %6194 = vmatpush.msra.mxu0 0.0
        %6195 = vmatpush.msra.mxu0 0.0
        %6196 = vmatpush.msra.mxu0 0.0
        %6197 = vmatpush.msra.mxu0 %v6186
        %6198 = vmatpush.msra.mxu0 %v6183
        %6199 = vmatpush.msra.mxu0 %v6180
        %6200 = vmatpush.msra.mxu0 %v6177
        %6201 = vmatpush.msra.mxu0 %v6174
        %6202 = vmatpush.msra.mxu0 %v6171
        %6203 = vmatpush.msra.mxu0 %v6168
        %6204 = vmatmul.f32.gmra.mxu0 %v1179
        %v6205 = vpop.f32.mrf.mxu0
        %v6206 = vadd.f32 0.0, %v6205
        %6207 = vdwg.mxu0
        %v6208 = vmul.f32 %v6206, %v6206
        %v6209 = vadd.f32 %v6100, %v6208
        %v6210 = vrsqrt.pop %v6209
        %v6211 = vmul.f32 %v6210, %v6209
        %v6212 = vmul.f32 %v6211, %v6210
        %v6213 = vmul.f32 0.5, %v6212
        %v6214 = vsub.f32 1.5, %v6213
        %v6215 = vmul.f32 %v6210, %v6214
        %vm6216 = vweird.f32 %v6209
        %vm6217 = vweird.f32 %v6210
        %vm6218 = vmor %vm6216, %vm6217
        %v6219 = vsel %vm6218, %v6210, %v6215
        %v6220 = vmin.f32 %v6219, 1e+12
        %v6221 = vmul.f32 %v5209, %v6220
        %v6222 = vmul.f32 %v5359, %v6220
        %v6223 = vmul.f32 %v5482, %v6220
        %v6224 = vmul.f32 %v5605, %v6220
        %v6225 = vmul.f32 %v5728, %v6220
        %v6226 = vmul.f32 %v5851, %v6220
        %v6227 = vmul.f32 %v5974, %v6220
        %v6228 = vmul.f32 %v6097, %v6220
        %v6229 = vmul.f32 %v6206, %v6220
        %6239 = vrot.lane.b32.xlu0 %v6221, 16
        %v6240 = vpop.permute.xlu0 %6239
        %6241 = vrot.lane.b32.xlu0 %v6222, 16
        %v6242 = vpop.permute.xlu0 %6241
        %6243 = vrot.lane.b32.xlu0 %v6223, 16
        %v6244 = vpop.permute.xlu0 %6243
        %6245 = vrot.lane.b32.xlu0 %v6224, 16
        %v6246 = vpop.permute.xlu0 %6245
        %6247 = vrot.lane.b32.xlu0 %v6225, 16
        %v6248 = vpop.permute.xlu0 %6247
        %6249 = vrot.lane.b32.xlu0 %v6226, 16
        %v6250 = vpop.permute.xlu0 %6249
        %6251 = vrot.lane.b32.xlu0 %v6227, 16
        %v6252 = vpop.permute.xlu0 %6251
        %6253 = vrot.lane.b32.xlu0 %v6228, 16
        %v6254 = vpop.permute.xlu0 %6253
        %6255 = vrot.lane.b32.xlu0 %v6229, 16
        %v6256 = vpop.permute.xlu0 %6255
        %vm6266 = vcmask 195712
        %6267 = vst.msk [vmem:[%s194] sm:$0xff] %vm6266, %v6240
        %6268 = vst.msk [vmem:[%s194 + $0x8] sm:$0xff] %vm6266, %v6242
        %6269 = vst.msk [vmem:[%s194 + $0x10] sm:$0xff] %vm6266, %v6244
        %6270 = vst.msk [vmem:[%s194 + $0x18] sm:$0xff] %vm6266, %v6246
        %6271 = vst.msk [vmem:[%s194 + $0x20] sm:$0xff] %vm6266, %v6248
        %6272 = vst.msk [vmem:[%s194 + $0x28] sm:$0xff] %vm6266, %v6250
        %6273 = vst.msk [vmem:[%s194 + $0x30] sm:$0xff] %vm6266, %v6252
        %6274 = vst.msk [vmem:[%s194 + $0x38] sm:$0xff] %vm6266, %v6254
        %6275 = vst.msk [vmem:[%s194 + $0x40] sm:$0xff] %vm6266, %v6256
        %p6276 = scmp.lt.s32.totalorder %s17, 1
        %s6277 = scalar_select %p6276, %s17, 1
        %s6278 = smul.addr %s6277, 9
        %s6279 = smul.addr %s6278, 8
        %s6280 = scalar_lea.vmem %s3, %s6279
        // Predicated region
        $region37: #{tpu_custom_call.1} parent=31 // pred_check
          %p6281 = pneg %p103
        $region38: #{tpu_custom_call.1} parent=31 // pred_check_branch
          %6283 = sbr.rel (%p6281) target = $region40
        $region39: #{tpu_custom_call.1} parent=31 // pred_region
          _
        $region40: #{tpu_custom_call.1} parent=31 // pred_fallthru
          _
      $region32: #{tpu_custom_call.1} parent=5 // pred_fallthru
        _
      %p6284 = scmp.le.s32.totalorder 2, %s12
      // Predicated region
      $region41: #{tpu_custom_call.1} parent=5 // pred_check
        %p6285 = pneg %p6284
      $region42: #{tpu_custom_call.1} parent=5 // pred_check_branch
        %6287 = sbr.rel (%p6285) target = $region44
      $region43: #{tpu_custom_call.1} parent=5 // pred_region
        %s6288 = ssub.s32 %s12, 2
        // Predicated region
        $region45: #{tpu_custom_call.1} parent=43 // pred_check
          %p6289 = pneg %p109
        $region46: #{tpu_custom_call.1} parent=43 // pred_check_branch
          %6291 = sbr.rel (%p6289) target = $region48
        $region47: #{tpu_custom_call.1} parent=43 // pred_region
          %p6292 = scmp.lt.s32.totalorder %s18, 1
          %s6293 = scalar_select %p6292, %s18, 1
          %s6294 = smul.addr %s6293, 9
          %s6295 = smul.addr %s6294, 8
          %s6296 = scalar_lea.vmem %s3, %s6295
        $region48: #{tpu_custom_call.1} parent=43 // pred_fallthru
          _
      $region44: #{tpu_custom_call.1} parent=5 // pred_fallthru
        _
    $region6: #{tpu_custom_call.1} parent=1 // loop_footer
      %s16 = sadd.s32 1, %s12
    $region7: #{tpu_custom_call.1} parent=1 // loop_footer_branch
      %11 = sbr.rel target = $region3
    $region8: #{tpu_custom_call.1} parent=1 // loop_exit
      _
    %6297 = vsyncpa [#allocation3], 1
    %s6298 = scalar_lea.sflag [#allocation3], 1
    %6299 = vsyncpa %s6298, 1

</llo_original>
